<compile_context>
chip_gen: v7x
topology: tpu7x:2x2x1
jax: 0.10.0
libtpu: 0.0.40
codegen_flags: <defaults>
</compile_context>

<pallas_src>
import functools

import jax
import jax.numpy as jnp
import numpy as np
from jax.experimental import pallas as pl
from jax.experimental.pallas import tpu as pltpu

EPS_NORM = 1e-8   # gvp._norm_no_nan clamp
EPS_LN = 1e-5     # torch.nn.LayerNorm default eps

VMEM_LIMIT = 32 * 1024 * 1024


# ----------------------------------------------------------------------------
# small helpers
# ----------------------------------------------------------------------------
def _round_up(n, m):
    return ((n + m - 1) // m) * m


def _pad_rows(x, axis, target):
    pad = [(0, 0)] * x.ndim
    pad[axis] = (0, target - x.shape[axis])
    return jnp.pad(x, pad)


# ----------------------------------------------------------------------------
# in-kernel math — LANE-PACKED vector features (T, 3*nv) = [vx | vy | vz]
# ----------------------------------------------------------------------------
def _gvp_lane(s, v, h, so, vo, wh_bd, ws, bs, wv_bd, act):
    """One GVP on lane-packed features.

    s: (T, si); v: (T, 3*vi).  wh_bd/wv_bd are block-diagonal (3*vi,3*h)/(3*h,3*vo);
    ws is the original fused (si+h, so) scalar weight; bs is (1, so).
    act=True -> activations=(relu, sigmoid), vector_gate=False; act=False -> (None, None).
    """
    vh = jnp.dot(v, wh_bd, preferred_element_type=jnp.float32)        # (T, 3h)  one matmul
    vh2 = vh * vh
    vn = jnp.sqrt(jnp.maximum(vh2[:, :h] + vh2[:, h:2 * h] + vh2[:, 2 * h:3 * h], EPS_NORM))
    sv = jnp.concatenate([s, vn], axis=-1)                            # lane concat (cheap)
    s_out = jnp.dot(sv, ws, preferred_element_type=jnp.float32) + bs  # (T, so)   one matmul
    v_out = jnp.dot(vh, wv_bd, preferred_element_type=jnp.float32)    # (T, 3vo)  one matmul
    if act:
        vo2 = v_out * v_out
        gate = jax.nn.sigmoid(jnp.sqrt(jnp.maximum(
            vo2[:, :vo] + vo2[:, vo:2 * vo] + vo2[:, 2 * vo:3 * vo], EPS_NORM)))   # (T, vo)
        v_out = v_out * jnp.concatenate([gate, gate, gate], axis=-1)  # lane concat, tiny
        s_out = jax.nn.relu(s_out)
    return s_out, v_out


def _layernorm_lane(s, v, nv):
    """gvp.LayerNorm (scalar LN, gamma=1/beta=0; no vector weight).  rsqrt -> EUP."""
    mean = jnp.mean(s, axis=-1, keepdims=True)
    cent = s - mean
    var = jnp.mean(cent * cent, axis=-1, keepdims=True)
    s_out = cent * jax.lax.rsqrt(var + EPS_LN)
    v2 = v * v
    sq = jnp.maximum(v2[:, :nv] + v2[:, nv:2 * nv] + v2[:, 2 * nv:3 * nv], EPS_NORM)  # (T, nv)
    inv_vn = jax.lax.rsqrt(jnp.mean(sq, axis=-1, keepdims=True))      # (T, 1) — broadcasts, no concat
    return s_out, v * inv_vn


def _gvp_chain_from_slab(s, v, w_ref, meta, acts):
    """Run a GVP chain, unpacking weights from a single packed VMEM slab ref."""
    for (si, vi, h, so, vo, r_wh, r_ws, r_bs, r_wv), act in zip(meta, acts):
        wh_bd = w_ref[r_wh:r_wh + 3 * vi, 0:3 * h]
        ws = w_ref[r_ws:r_ws + si + h, 0:so]
        bs = w_ref[r_bs:r_bs + 1, 0:so]
        wv_bd = w_ref[r_wv:r_wv + 3 * h, 0:3 * vo]
        s, v = _gvp_lane(s, v, h, so, vo, wh_bd, ws, bs, wv_bd, act)
    return s, v


# ----------------------------------------------------------------------------
# Pallas kernels
# ----------------------------------------------------------------------------
def _msg_agg_kernel(meta, acts, dst_ref, x_ref, w_ref, out_ref):
    """Fused: GVP message chain over one edge tile + scatter-sum aggregation
    (one-hot matmul) into a VMEM-resident (1, n_rows, d_out) accumulator block.

    Padded edge rows produce nonzero messages (relu(bs) etc.) but carry dst=-1,
    which never matches a row id, so they never enter the 'sum' aggregation.
    """
    @pl.when(pl.program_id(1) == 0)
    def _():
        out_ref[...] = jnp.zeros_like(out_ref)

    si0, vi0 = meta[0][0], meta[0][1]
    x = x_ref[...]                                                    # (T, si0 + 3*vi0)
    s = x[:, :si0]
    v = x[:, si0:si0 + 3 * vi0]
    s, v = _gvp_chain_from_slab(s, v, w_ref, meta, acts)

    msg = jnp.concatenate([s, v], axis=-1)                            # (T, so + 3*vo)
    n_rows = out_ref.shape[1]
    tile_e = dst_ref.shape[1]
    row_ids = jax.lax.broadcasted_iota(jnp.int32, (n_rows, tile_e), 0)
    onehot = (dst_ref[...] == row_ids).astype(jnp.float32)            # (n_rows, T)
    out_ref[0] = out_ref[0] + jnp.dot(onehot, msg, preferred_element_type=jnp.float32)


def _node_update_kernel(meta, ff_acts, ns, nv, x_ref, dh_ref, w_ref, out_ref):
    """Fused: LayerNorm(x + dh) -> feed-forward GVPs -> LayerNorm(. + ff(.)),
    on lane-packed (T, ns + 3*nv) node slabs.  (Dropout = identity, eval mode.)"""
    x = x_ref[...] + dh_ref[...]
    s = x[:, :ns]
    v = x[:, ns:ns + 3 * nv]

    s, v = _layernorm_lane(s, v, nv)                                  # norm0
    fs, fv = _gvp_chain_from_slab(s, v, w_ref, meta, ff_acts)
    s, v = _layernorm_lane(s + fs, v + fv, nv)                        # norm1

    out_ref[...] = jnp.concatenate([s, v], axis=-1)


# ----------------------------------------------------------------------------
# weight slab packing (1 DMA instead of 5 per GVP)
# ----------------------------------------------------------------------------
def pack_weight_slab(params):
    """Pack a GVP chain's weights into one 2-D f32 slab.

    Per GVP, rows hold (in order): block-diag wh (3*vi, 3*h), fused ws (si+h, so),
    bs (1, so), block-diag wv (3*h, 3*vo).  Returns (slab, meta) where meta is a
    tuple of (si, vi, h, so, vo, r_wh, r_ws, r_bs, r_wv) static row offsets.
    """
    meta = []
    r = 0
    width = 1
    for p in params:
        vi, h = p["wh"].shape
        sih, so = p["ws"].shape
        si = sih - h
        vo = p["wv"].shape[1]
        r_wh = r
        r_ws = r_wh + 3 * vi
        r_bs = r_ws + si + h
        r_wv = r_bs + 1
        r = r_wv + 3 * h
        meta.append((si, vi, h, so, vo, r_wh, r_ws, r_bs, r_wv))
        width = max(width, 3 * h, so, 3 * vo)

    rows_p = _round_up(r, 8)
    width_p = _round_up(width, 128)
    slab = jnp.zeros((rows_p, width_p), jnp.float32)
    for p, (si, vi, h, so, vo, r_wh, r_ws, r_bs, r_wv) in zip(params, meta):
        wh_bd = jax.scipy.linalg.block_diag(p["wh"], p["wh"], p["wh"])
        wv_bd = jax.scipy.linalg.block_diag(p["wv"], p["wv"], p["wv"])
        slab = slab.at[r_wh:r_wh + 3 * vi, :3 * h].set(wh_bd)
        slab = slab.at[r_ws:r_ws + si + h, :so].set(p["ws"])
        slab = slab.at[r_bs:r_bs + 1, :so].set(p["bs"])
        slab = slab.at[r_wv:r_wv + 3 * h, :3 * vo].set(wv_bd)
    return slab, tuple(meta)


# ----------------------------------------------------------------------------
# Pallas wrappers
# ----------------------------------------------------------------------------
def message_aggregate_pallas(x_slab, dst_idx, n_dst, w_slab, meta, acts,
                             tile_e=512, n_split=None):
    """Fused GVP message chain + scatter-sum over destination nodes.

    x_slab: (E, si_tot + 3*vi_tot) lane-packed message inputs [s | vx | vy | vz].
    Returns lane-packed (n_dst, so + 3*vo) aggregated messages.
    """
    e = x_slab.shape[0]
    tile_e = max(128, min(tile_e, _round_up(max(e, 1), 128)))         # cap for tiny graphs
    num_tiles = -(-max(e, 1) // tile_e)
    if n_split is None:
        n_split = 2 if num_tiles >= 2 else 1                          # v7x megacore split
    tiles_per_split = -(-num_tiles // n_split)
    e_pad = n_split * tiles_per_split * tile_e

    x_p = _pad_rows(x_slab, 0, e_pad)
    dst = jnp.full((1, e_pad), -1, jnp.int32).at[0, :e].set(dst_idx.astype(jnp.int32))

    so, vo = meta[-1][3], meta[-1][4]
    d_out = so + 3 * vo
    n_rows = _round_up(max(n_dst, 1), 8)

    kernel = functools.partial(_msg_agg_kernel, meta, tuple(acts))
    out = pl.pallas_call(
        kernel,
        grid=(n_split, tiles_per_split),
        in_specs=[
            pl.BlockSpec((1, tile_e), lambda p, i: (0, p * tiles_per_split + i)),
            pl.BlockSpec((tile_e, x_p.shape[1]), lambda p, i: (p * tiles_per_split + i, 0)),
            pl.BlockSpec(w_slab.shape, lambda p, i: (0, 0)),
        ],
        out_specs=pl.BlockSpec((1, n_rows, d_out), lambda p, i: (p, 0, 0)),  # resident accumulator
        out_shape=jax.ShapeDtypeStruct((n_split, n_rows, d_out), jnp.float32),
        compiler_params=pltpu.CompilerParams(
            dimension_semantics=("parallel", "arbitrary"),
            vmem_limit_bytes=VMEM_LIMIT),
    )(dst, x_p, w_slab)

    if n_split > 1:
        return jnp.sum(out, axis=0)[:n_dst]
    return out[0, :n_dst]


def node_update_pallas(x_packed, dh_packed, ns, nv, w_slab, meta, ff_acts, tile_n=512):
    """x_packed / dh_packed: (N, ns + 3*nv) lane-packed node features."""
    n, d = x_packed.shape
    tile_n = max(8, min(tile_n, _round_up(max(n, 1), 8)))             # cap for tiny graphs
    n_pad = _round_up(max(n, 1), tile_n)
    x_p = _pad_rows(x_packed, 0, n_pad)
    dh_p = _pad_rows(dh_packed, 0, n_pad)

    kernel = functools.partial(_node_update_kernel, meta, tuple(ff_acts), ns, nv)
    spec = pl.BlockSpec((tile_n, d), lambda i: (i, 0))
    out = pl.pallas_call(
        kernel,
        grid=(n_pad // tile_n,),
        in_specs=[spec, spec, pl.BlockSpec(w_slab.shape, lambda i: (0, 0))],
        out_specs=spec,
        out_shape=jax.ShapeDtypeStruct((n_pad, d), jnp.float32),
        compiler_params=pltpu.CompilerParams(
            dimension_semantics=("parallel",),
            vmem_limit_bytes=VMEM_LIMIT),
    )(x_p, dh_p, w_slab)
    return out[:n]


# ----------------------------------------------------------------------------
# pure-JAX reference (independent per-component math) for verification
# ----------------------------------------------------------------------------
def _gvp_apply_ref(s, v3, p, act):
    vh = [jnp.dot(vc, p["wh"]) for vc in v3]
    vn = jnp.sqrt(jnp.maximum(sum(c * c for c in vh), EPS_NORM))
    s_out = jnp.dot(jnp.concatenate([s, vn], axis=-1), p["ws"]) + p["bs"]
    v_out = [jnp.dot(c, p["wv"]) for c in vh]
    if act:
        gate = jax.nn.sigmoid(jnp.sqrt(jnp.maximum(sum(c * c for c in v_out), EPS_NORM)))
        v_out = [c * gate for c in v_out]
        s_out = jax.nn.relu(s_out)
    return s_out, v_out


def _layernorm_ref(s, v3):
    mean = jnp.mean(s, axis=-1, keepdims=True)
    var = jnp.mean((s - mean) ** 2, axis=-1, keepdims=True)
    s_out = (s - mean) / jnp.sqrt(var + EPS_LN)
    vn = jnp.sqrt(jnp.mean(jnp.maximum(sum(c * c for c in v3), EPS_NORM), axis=-1, keepdims=True))
    return s_out, [c / vn for c in v3]


def gvp_chain_ref(s, v3, params, acts):
    for p, a in zip(params, acts):
        s, v3 = _gvp_apply_ref(s, v3, p, a)
    return s, v3


def node_update_ref(xs, xv3, dhs, dhv3, ff_params, ff_acts):
    s, v3 = _layernorm_ref(xs + dhs, [a + b for a, b in zip(xv3, dhv3)])
    fs, fv3 = gvp_chain_ref(s, v3, ff_params, ff_acts)
    s, v3 = _layernorm_ref(s + fs, [a + b for a, b in zip(v3, fv3)])
    return s, v3


# ----------------------------------------------------------------------------
# parameter construction (deterministic, synthetic — matches module __init__ shapes)
# ----------------------------------------------------------------------------
def init_gvp(key, in_dims, out_dims):
    si, vi = in_dims
    so, vo = out_dims
    h = max(vi, vo)                    # GVP h_dim = max(vi, vo)
    k1, k2, k3, k4 = jax.random.split(key, 4)
    return {
        "wh": jax.random.normal(k1, (vi, h), jnp.float32) / np.sqrt(vi),         # Linear(vi, h, bias=False)
        "ws": jax.random.normal(k2, (si + h, so), jnp.float32) / np.sqrt(si + h),  # Linear(si+h, so)
        "bs": jax.random.normal(k3, (1, so), jnp.float32) * 0.01,
        "wv": jax.random.normal(k4, (h, vo), jnp.float32) / np.sqrt(h),           # Linear(h, vo, bias=False)
    }


def init_layer_params(key, conv_dims, n_message=3, n_feedforward=2):
    params = {"message": {}, "ff": {}}
    node_dims = {}
    keys = jax.random.split(key, 64)
    ki = 0
    for et, (in_dims, out_dims, edge_dims) in conv_dims.items():
        si, vi = in_dims
        se, ve = edge_dims
        # GVPHeteroConv: in_dims_other defaults to in_dims
        chain_dims = [(si + si + se, vi + vi + ve)] + [out_dims] * n_message
        gvps = []
        for l in range(n_message):
            gvps.append(init_gvp(keys[ki], chain_dims[l], chain_dims[l + 1])); ki += 1
        params["message"][et] = gvps
        node_dims[et[-1]] = out_dims
    for ntype, dims_ in node_dims.items():
        s, v = dims_
        hid = (4 * s, 2 * v)
        ff = []
        if n_feedforward == 1:
            ff.append(init_gvp(keys[ki], dims_, dims_)); ki += 1
            ff_acts = [False]
        else:
            ff.append(init_gvp(keys[ki], dims_, hid)); ki += 1
            for _ in range(n_feedforward - 2):
                ff.append(init_gvp(keys[ki], hid, hid)); ki += 1
            ff.append(init_gvp(keys[ki], hid, dims_)); ki += 1
            ff_acts = [True] * (n_feedforward - 1) + [False]
        params["ff"][ntype] = (ff, ff_acts)
    return params


# ----------------------------------------------------------------------------
# full GVPHeteroConvLayer forward
# ----------------------------------------------------------------------------
def gvp_hetero_conv_layer_forward(params, x_dict, edge_index_dict, edge_attr_dict,
                                  n_message=3, use_pallas=True):
    # PyTorch (N, nv, 3) vectors -> internal component-major (3, N, nv) for gathers
    xs = {k: v[0].astype(jnp.float32) for k, v in x_dict.items()}
    xv = {k: jnp.transpose(v[1], (2, 0, 1)).astype(jnp.float32) for k, v in x_dict.items()}
    dims = {k: (xs[k].shape[1], xv[k].shape[2]) for k in x_dict}
    msg_acts = [False] if n_message == 1 else [True] * (n_message - 1) + [False]

    # lane-packed aggregation accumulators per node type: (N, ns + 3*nv)
    dh = {k: jnp.zeros((xs[k].shape[0], dims[k][0] + 3 * dims[k][1]), jnp.float32) for k in x_dict}

    # --- GVPHeteroConv message passing (aggr='sum' per edge type, 'sum' hetero group) ---
    for et, edge_index in edge_index_dict.items():
        src, _, dst = et
        es, ev_pt = edge_attr_dict[et]
        ev = jnp.transpose(ev_pt, (2, 0, 1)).astype(jnp.float32)      # (3, E, ve)
        src_idx, dst_idx = edge_index[0], edge_index[1]
        # TODO(synk): gather + concat done in XLA; in-kernel gather would need manual DMA.
        s_msg = jnp.concatenate([xs[src][src_idx], es.astype(jnp.float32), xs[dst][dst_idx]], axis=-1)
        v_comp = [jnp.concatenate([xv[src][c][src_idx], ev[c], xv[dst][c][dst_idx]], axis=-1)
                  for c in range(3)]
        n_dst = xs[dst].shape[0]
        mp = params["message"][et]
        if use_pallas:
            x_slab = jnp.concatenate([s_msg] + v_comp, axis=-1)       # (E, si_tot + 3*vi_tot)
            w_slab, meta = pack_weight_slab(mp)
            agg = message_aggregate_pallas(x_slab, dst_idx, n_dst, w_slab, meta, msg_acts)
        else:
            ms, mv3 = gvp_chain_ref(s_msg, v_comp, mp, msg_acts)
            ags = jnp.zeros((n_dst, ms.shape[1]), jnp.float32).at[dst_idx].add(ms)
            agv = [jnp.zeros((n_dst, mv3[c].shape[1]), jnp.float32).at[dst_idx].add(mv3[c])
                   for c in range(3)]
            agg = jnp.concatenate([ags] + agv, axis=-1)
        dh[dst] = dh[dst] + agg

    # --- residual + LayerNorm + feed-forward + residual + LayerNorm per node type ---
    out = {}
    for k in x_dict:
        ns_, nv_ = dims[k]
        ff_params, ff_acts = params["ff"][k]
        x_packed = jnp.concatenate([xs[k], xv[k][0], xv[k][1], xv[k][2]], axis=-1)
        if use_pallas:
            w_slab, meta = pack_weight_slab(ff_params)
            o = node_update_pallas(x_packed, dh[k], ns_, nv_, w_slab, meta, ff_acts)
        else:
            dhs = dh[k][:, :ns_]
            dhv = [dh[k][:, ns_ + c * nv_: ns_ + (c + 1) * nv_] for c in range(3)]
            s, v3 = node_update_ref(xs[k], [xv[k][c] for c in range(3)], dhs, dhv,
                                    ff_params, ff_acts)
            o = jnp.concatenate([s] + v3, axis=-1)
        s_out = o[:, :ns_]
        v_out = jnp.stack([o[:, ns_ + c * nv_: ns_ + (c + 1) * nv_] for c in range(3)], axis=-1)
        out[k] = (s_out, v_out)   # back to PyTorch (N, ns), (N, nv, 3)
    return out


# ----------------------------------------------------------------------------
if __name__ == "__main__":
    key = jax.random.PRNGKey(0)
    ns, nv = 16, 4   # shared hidden node dims (src/dst dims must match: in_dims_other=in_dims)
    conv_dims = {
        ("a", "aa", "a"): ((ns, nv), (ns, nv), (8, 1)),
        ("a", "ab", "b"): ((ns, nv), (ns, nv), (6, 2)),
        ("b", "ba", "a"): ((ns, nv), (ns, nv), (8, 1)),
    }
    n_nodes = {"a": 10, "b": 7}
    n_edges = {("a", "aa", "a"): 12, ("a", "ab", "b"): 10, ("b", "ba", "a"): 9}

    keys = jax.random.split(key, 32)
    params = init_layer_params(keys[0], conv_dims)

    x_dict = {}
    for i, (k, n) in enumerate(sorted(n_nodes.items())):
        ks, kv = jax.random.split(keys[1 + i])
        x_dict[k] = (jax.random.normal(ks, (n, ns), jnp.float32),
                     jax.random.normal(kv, (n, nv, 3), jnp.float32))

    edge_index_dict, edge_attr_dict = {}, {}
    for i, (et, e) in enumerate(n_edges.items()):
        src, _, dst = et
        se, ve = conv_dims[et][2]
        k1, k2, k3, k4 = jax.random.split(keys[8 + i], 4)
        src_idx = jax.random.randint(k1, (e,), 0, n_nodes[src], dtype=jnp.int32)
        dst_idx = jax.random.randint(k2, (e,), 0, n_nodes[dst], dtype=jnp.int32)
        edge_index_dict[et] = jnp.stack([src_idx, dst_idx])
        edge_attr_dict[et] = (jax.random.normal(k3, (e, se), jnp.float32),
                              jax.random.normal(k4, (e, ve, 3), jnp.float32))

    out = gvp_hetero_conv_layer_forward(params, x_dict, edge_index_dict, edge_attr_dict,
                                        use_pallas=True)
    ref = gvp_hetero_conv_layer_forward(params, x_dict, edge_index_dict, edge_attr_dict,
                                        use_pallas=False)
    for k in out:
        for a, b in zip(out[k], ref[k]):
            a = jax.block_until_ready(a)
            np.testing.assert_allclose(np.asarray(a), np.asarray(b), rtol=1e-3, atol=1e-3)
    print("KERNEL_OK")
</pallas_src>

<mosaic_0001>
module attributes {stable_mosaic.version = 11 : i64} {
  func.func @_msg_agg_kernel(%arg0: i32, %arg1: i32, %arg2: memref<1x128xi32, #tpu.memory_space<vmem>>, %arg3: memref<128x67xf32, #tpu.memory_space<vmem>>, %arg4: memref<200x128xf32, #tpu.memory_space<vmem>>, %arg5: memref<1x16x28xf32, #tpu.memory_space<vmem>>) attributes {dimension_semantics = [#tpu.dimension_semantics<parallel>, #tpu.dimension_semantics<arbitrary>], iteration_bounds = array<i64: 1, 1>, scalar_prefetch = 0 : i64, scratch_operands = 0 : i64, tpu.core_type = #tpu.core_type<tc>, window_params = [{transform_indices = @transform_0, window_bounds = array<i64: 1, 128>}, {transform_indices = @transform_1, window_bounds = array<i64: 128, 67>}, {pipeline_mode = #tpu.pipeline_mode<synchronous>, transform_indices = @transform_2, window_bounds = array<i64: 200, 128>}, {transform_indices = @transform_3, window_bounds = array<i64: 1, 16, 28>}]} {
    %c0_i32 = arith.constant 0 : i32
    %0 = arith.cmpi eq, %arg1, %c0_i32 : i32
    %1 = arith.extui %0 : i1 to i32
    %c0_i32_0 = arith.constant 0 : i32
    %2 = arith.cmpi ne, %1, %c0_i32_0 : i32
    scf.if %2 {
      %cst_41 = arith.constant 0.000000e+00 : f32
      %113 = vector.broadcast %cst_41 : f32 to vector<1x16x28xf32>
      %c0_42 = arith.constant 0 : index
      %c0_43 = arith.constant 0 : index
      %c0_44 = arith.constant 0 : index
      %114 = vector.load %arg5[%c0_42, %c0_43, %c0_44] : memref<1x16x28xf32, #tpu.memory_space<vmem>>, vector<1x16x28xf32>
      tpu.vector_store %arg5[%c0_42, %c0_43, %c0_44], %113 {strides = array<i32>} : memref<1x16x28xf32, #tpu.memory_space<vmem>>, vector<1x16x28xf32>,
    } else {
    }
    %c0 = arith.constant 0 : index
    %c0_1 = arith.constant 0 : index
    %3 = vector.load %arg3[%c0, %c0_1] : memref<128x67xf32, #tpu.memory_space<vmem>>, vector<128x67xf32>
    %4 = vector.extract_strided_slice %3 {offsets = [0, 0], sizes = [128, 40], strides = [1, 1]} : vector<128x67xf32> to vector<128x40xf32>
    %5 = vector.extract_strided_slice %3 {offsets = [0, 40], sizes = [128, 27], strides = [1, 1]} : vector<128x67xf32> to vector<128x27xf32>
    %c0_2 = arith.constant 0 : index
    %c0_3 = arith.constant 0 : index
    %6 = vector.load %arg4[%c0_2, %c0_3] : memref<200x128xf32, #tpu.memory_space<vmem>>, vector<27x27xf32>
    %c27 = arith.constant 27 : index
    %c0_4 = arith.constant 0 : index
    %7 = vector.load %arg4[%c27, %c0_4] : memref<200x128xf32, #tpu.memory_space<vmem>>, vector<49x16xf32>
    %c76 = arith.constant 76 : index
    %c0_5 = arith.constant 0 : index
    %8 = vector.load %arg4[%c76, %c0_5] : memref<200x128xf32, #tpu.memory_space<vmem>>, vector<1x16xf32>
    %c77 = arith.constant 77 : index
    %c0_6 = arith.constant 0 : index
    %9 = vector.load %arg4[%c77, %c0_6] : memref<200x128xf32, #tpu.memory_space<vmem>>, vector<27x12xf32>
    %cst = arith.constant dense<0.000000e+00> : vector<128x27xf32>
    %10 = tpu.matmul %5, %6, %cst {dimension_numbers = #tpu.dot_dimension_numbers<[1], [0], [0], [1], [0, 0, 1, 1], [], []>} : vector<128x27xf32>, vector<27x27xf32>, vector<128x27xf32> -> vector<128x27xf32>
    %11 = arith.mulf %10, %10 : vector<128x27xf32>
    %12 = vector.extract_strided_slice %11 {offsets = [0, 0], sizes = [128, 9], strides = [1, 1]} : vector<128x27xf32> to vector<128x9xf32>
    %13 = vector.extract_strided_slice %11 {offsets = [0, 9], sizes = [128, 9], strides = [1, 1]} : vector<128x27xf32> to vector<128x9xf32>
    %14 = arith.addf %12, %13 : vector<128x9xf32>
    %15 = vector.extract_strided_slice %11 {offsets = [0, 18], sizes = [128, 9], strides = [1, 1]} : vector<128x27xf32> to vector<128x9xf32>
    %16 = arith.addf %14, %15 : vector<128x9xf32>
    %cst_7 = arith.constant 9.99999993E-9 : f32
    %17 = vector.broadcast %cst_7 : f32 to vector<128x9xf32>
    %18 = arith.maximumf %16, %17 : vector<128x9xf32>
    %19 = math.sqrt %18 : vector<128x9xf32>
    %20 = tpu.concatenate %4, %19 in 1 : vector<128x40xf32>, vector<128x9xf32> -> vector<128x49xf32>
    %cst_8 = arith.constant dense<0.000000e+00> : vector<128x16xf32>
    %21 = tpu.matmul %20, %7, %cst_8 {dimension_numbers = #tpu.dot_dimension_numbers<[1], [0], [0], [1], [0, 0, 1, 1], [], []>} : vector<128x49xf32>, vector<49x16xf32>, vector<128x16xf32> -> vector<128x16xf32>
    %22 = vector.broadcast %8 : vector<1x16xf32> to vector<128x16xf32>
    %23 = arith.addf %21, %22 : vector<128x16xf32>
    %cst_9 = arith.constant dense<0.000000e+00> : vector<128x12xf32>
    %24 = tpu.matmul %10, %9, %cst_9 {dimension_numbers = #tpu.dot_dimension_numbers<[1], [0], [0], [1], [0, 0, 1, 1], [], []>} : vector<128x27xf32>, vector<27x12xf32>, vector<128x12xf32> -> vector<128x12xf32>
    %25 = arith.mulf %24, %24 : vector<128x12xf32>
    %26 = vector.extract_strided_slice %25 {offsets = [0, 0], sizes = [128, 4], strides = [1, 1]} : vector<128x12xf32> to vector<128x4xf32>
    %27 = vector.extract_strided_slice %25 {offsets = [0, 4], sizes = [128, 4], strides = [1, 1]} : vector<128x12xf32> to vector<128x4xf32>
    %28 = arith.addf %26, %27 : vector<128x4xf32>
    %29 = vector.extract_strided_slice %25 {offsets = [0, 8], sizes = [128, 4], strides = [1, 1]} : vector<128x12xf32> to vector<128x4xf32>
    %30 = arith.addf %28, %29 : vector<128x4xf32>
    %cst_10 = arith.constant 9.99999993E-9 : f32
    %31 = vector.broadcast %cst_10 : f32 to vector<128x4xf32>
    %32 = arith.maximumf %30, %31 : vector<128x4xf32>
    %33 = math.sqrt %32 : vector<128x4xf32>
    %34 = arith.negf %33 : vector<128x4xf32>
    %35 = math.exp %34 : vector<128x4xf32>
    %cst_11 = arith.constant 1.000000e+00 : f32
    %36 = vector.broadcast %cst_11 : f32 to vector<128x4xf32>
    %37 = arith.addf %36, %35 : vector<128x4xf32>
    %38 = arith.divf %36, %37 : vector<128x4xf32>
    %39 = tpu.concatenate %38, %38, %38 in 1 : vector<128x4xf32>, vector<128x4xf32>, vector<128x4xf32> -> vector<128x12xf32>
    %40 = arith.mulf %24, %39 : vector<128x12xf32>
    %cst_12 = arith.constant 0.000000e+00 : f32
    %41 = vector.broadcast %cst_12 : f32 to vector<128x16xf32>
    %42 = arith.maximumf %23, %41 : vector<128x16xf32>
    %c104 = arith.constant 104 : index
    %c0_13 = arith.constant 0 : index
    %43 = vector.load %arg4[%c104, %c0_13] : memref<200x128xf32, #tpu.memory_space<vmem>>, vector<12x12xf32>
    %c116 = arith.constant 116 : index
    %c0_14 = arith.constant 0 : index
    %44 = vector.load %arg4[%c116, %c0_14] : memref<200x128xf32, #tpu.memory_space<vmem>>, vector<20x16xf32>
    %c136 = arith.constant 136 : index
    %c0_15 = arith.constant 0 : index
    %45 = vector.load %arg4[%c136, %c0_15] : memref<200x128xf32, #tpu.memory_space<vmem>>, vector<1x16xf32>
    %c137 = arith.constant 137 : index
    %c0_16 = arith.constant 0 : index
    %46 = vector.load %arg4[%c137, %c0_16] : memref<200x128xf32, #tpu.memory_space<vmem>>, vector<12x12xf32>
    %cst_17 = arith.constant dense<0.000000e+00> : vector<128x12xf32>
    %47 = tpu.matmul %40, %43, %cst_17 {dimension_numbers = #tpu.dot_dimension_numbers<[1], [0], [0], [1], [0, 0, 1, 1], [], []>} : vector<128x12xf32>, vector<12x12xf32>, vector<128x12xf32> -> vector<128x12xf32>
    %48 = arith.mulf %47, %47 : vector<128x12xf32>
    %49 = vector.extract_strided_slice %48 {offsets = [0, 0], sizes = [128, 4], strides = [1, 1]} : vector<128x12xf32> to vector<128x4xf32>
    %50 = vector.extract_strided_slice %48 {offsets = [0, 4], sizes = [128, 4], strides = [1, 1]} : vector<128x12xf32> to vector<128x4xf32>
    %51 = arith.addf %49, %50 : vector<128x4xf32>
    %52 = vector.extract_strided_slice %48 {offsets = [0, 8], sizes = [128, 4], strides = [1, 1]} : vector<128x12xf32> to vector<128x4xf32>
    %53 = arith.addf %51, %52 : vector<128x4xf32>
    %cst_18 = arith.constant 9.99999993E-9 : f32
    %54 = vector.broadcast %cst_18 : f32 to vector<128x4xf32>
    %55 = arith.maximumf %53, %54 : vector<128x4xf32>
    %56 = math.sqrt %55 : vector<128x4xf32>
    %57 = tpu.concatenate %42, %56 in 1 : vector<128x16xf32>, vector<128x4xf32> -> vector<128x20xf32>
    %cst_19 = arith.constant dense<0.000000e+00> : vector<128x16xf32>
    %58 = tpu.matmul %57, %44, %cst_19 {dimension_numbers = #tpu.dot_dimension_numbers<[1], [0], [0], [1], [0, 0, 1, 1], [], []>} : vector<128x20xf32>, vector<20x16xf32>, vector<128x16xf32> -> vector<128x16xf32>
    %59 = vector.broadcast %45 : vector<1x16xf32> to vector<128x16xf32>
    %60 = arith.addf %58, %59 : vector<128x16xf32>
    %cst_20 = arith.constant dense<0.000000e+00> : vector<128x12xf32>
    %61 = tpu.matmul %47, %46, %cst_20 {dimension_numbers = #tpu.dot_dimension_numbers<[1], [0], [0], [1], [0, 0, 1, 1], [], []>} : vector<128x12xf32>, vector<12x12xf32>, vector<128x12xf32> -> vector<128x12xf32>
    %62 = arith.mulf %61, %61 : vector<128x12xf32>
    %63 = vector.extract_strided_slice %62 {offsets = [0, 0], sizes = [128, 4], strides = [1, 1]} : vector<128x12xf32> to vector<128x4xf32>
    %64 = vector.extract_strided_slice %62 {offsets = [0, 4], sizes = [128, 4], strides = [1, 1]} : vector<128x12xf32> to vector<128x4xf32>
    %65 = arith.addf %63, %64 : vector<128x4xf32>
    %66 = vector.extract_strided_slice %62 {offsets = [0, 8], sizes = [128, 4], strides = [1, 1]} : vector<128x12xf32> to vector<128x4xf32>
    %67 = arith.addf %65, %66 : vector<128x4xf32>
    %cst_21 = arith.constant 9.99999993E-9 : f32
    %68 = vector.broadcast %cst_21 : f32 to vector<128x4xf32>
    %69 = arith.maximumf %67, %68 : vector<128x4xf32>
    %70 = math.sqrt %69 : vector<128x4xf32>
    %71 = arith.negf %70 : vector<128x4xf32>
    %72 = math.exp %71 : vector<128x4xf32>
    %cst_22 = arith.constant 1.000000e+00 : f32
    %73 = vector.broadcast %cst_22 : f32 to vector<128x4xf32>
    %74 = arith.addf %73, %72 : vector<128x4xf32>
    %75 = arith.divf %73, %74 : vector<128x4xf32>
    %76 = tpu.concatenate %75, %75, %75 in 1 : vector<128x4xf32>, vector<128x4xf32>, vector<128x4xf32> -> vector<128x12xf32>
    %77 = arith.mulf %61, %76 : vector<128x12xf32>
    %cst_23 = arith.constant 0.000000e+00 : f32
    %78 = vector.broadcast %cst_23 : f32 to vector<128x16xf32>
    %79 = arith.maximumf %60, %78 : vector<128x16xf32>
    %c149 = arith.constant 149 : index
    %c0_24 = arith.constant 0 : index
    %80 = vector.load %arg4[%c149, %c0_24] : memref<200x128xf32, #tpu.memory_space<vmem>>, vector<12x12xf32>
    %c161 = arith.constant 161 : index
    %c0_25 = arith.constant 0 : index
    %81 = vector.load %arg4[%c161, %c0_25] : memref<200x128xf32, #tpu.memory_space<vmem>>, vector<20x16xf32>
    %c181 = arith.constant 181 : index
    %c0_26 = arith.constant 0 : index
    %82 = vector.load %arg4[%c181, %c0_26] : memref<200x128xf32, #tpu.memory_space<vmem>>, vector<1x16xf32>
    %c182 = arith.constant 182 : index
    %c0_27 = arith.constant 0 : index
    %83 = vector.load %arg4[%c182, %c0_27] : memref<200x128xf32, #tpu.memory_space<vmem>>, vector<12x12xf32>
    %cst_28 = arith.constant dense<0.000000e+00> : vector<128x12xf32>
    %84 = tpu.matmul %77, %80, %cst_28 {dimension_numbers = #tpu.dot_dimension_numbers<[1], [0], [0], [1], [0, 0, 1, 1], [], []>} : vector<128x12xf32>, vector<12x12xf32>, vector<128x12xf32> -> vector<128x12xf32>
    %85 = arith.mulf %84, %84 : vector<128x12xf32>
    %86 = vector.extract_strided_slice %85 {offsets = [0, 0], sizes = [128, 4], strides = [1, 1]} : vector<128x12xf32> to vector<128x4xf32>
    %87 = vector.extract_strided_slice %85 {offsets = [0, 4], sizes = [128, 4], strides = [1, 1]} : vector<128x12xf32> to vector<128x4xf32>
    %88 = arith.addf %86, %87 : vector<128x4xf32>
    %89 = vector.extract_strided_slice %85 {offsets = [0, 8], sizes = [128, 4], strides = [1, 1]} : vector<128x12xf32> to vector<128x4xf32>
    %90 = arith.addf %88, %89 : vector<128x4xf32>
    %cst_29 = arith.constant 9.99999993E-9 : f32
    %91 = vector.broadcast %cst_29 : f32 to vector<128x4xf32>
    %92 = arith.maximumf %90, %91 : vector<128x4xf32>
    %93 = math.sqrt %92 : vector<128x4xf32>
    %94 = tpu.concatenate %79, %93 in 1 : vector<128x16xf32>, vector<128x4xf32> -> vector<128x20xf32>
    %cst_30 = arith.constant dense<0.000000e+00> : vector<128x16xf32>
    %95 = tpu.matmul %94, %81, %cst_30 {dimension_numbers = #tpu.dot_dimension_numbers<[1], [0], [0], [1], [0, 0, 1, 1], [], []>} : vector<128x20xf32>, vector<20x16xf32>, vector<128x16xf32> -> vector<128x16xf32>
    %96 = vector.broadcast %82 : vector<1x16xf32> to vector<128x16xf32>
    %97 = arith.addf %95, %96 : vector<128x16xf32>
    %cst_31 = arith.constant dense<0.000000e+00> : vector<128x12xf32>
    %98 = tpu.matmul %84, %83, %cst_31 {dimension_numbers = #tpu.dot_dimension_numbers<[1], [0], [0], [1], [0, 0, 1, 1], [], []>} : vector<128x12xf32>, vector<12x12xf32>, vector<128x12xf32> -> vector<128x12xf32>
    %99 = tpu.concatenate %97, %98 in 1 : vector<128x16xf32>, vector<128x12xf32> -> vector<128x28xf32>
    %100 = tpu.iota {dimensions = array<i32: 0>} : vector<16x128xi32>
    %c0_32 = arith.constant 0 : index
    %c0_33 = arith.constant 0 : index
    %101 = vector.load %arg2[%c0_32, %c0_33] : memref<1x128xi32, #tpu.memory_space<vmem>>, vector<1x128xi32>
    %102 = vector.broadcast %101 : vector<1x128xi32> to vector<16x128xi32>
    %103 = arith.cmpi eq, %102, %100 : vector<16x128xi32>
    %104 = arith.extui %103 : vector<16x128xi1> to vector<16x128xi32>
    %105 = arith.sitofp %104 : vector<16x128xi32> to vector<16x128xf32>
    %c0_34 = arith.constant 0 : index
    %c0_35 = arith.constant 0 : index
    %c0_36 = arith.constant 0 : index
    %106 = vector.load %arg5[%c0_34, %c0_35, %c0_36] : memref<1x16x28xf32, #tpu.memory_space<vmem>>, vector<1x16x28xf32>
    %107 = vector.shape_cast %106 : vector<1x16x28xf32> to vector<16x28xf32>
    %cst_37 = arith.constant dense<0.000000e+00> : vector<16x28xf32>
    %108 = tpu.matmul %105, %99, %cst_37 {dimension_numbers = #tpu.dot_dimension_numbers<[1], [0], [0], [1], [0, 0, 1, 1], [], []>} : vector<16x128xf32>, vector<128x28xf32>, vector<16x28xf32> -> vector<16x28xf32>
    %109 = arith.addf %107, %108 : vector<16x28xf32>
    %c0_38 = arith.constant 0 : index
    %c0_39 = arith.constant 0 : index
    %c0_40 = arith.constant 0 : index
    %110 = vector.load %arg5[%c0_38, %c0_39, %c0_40] : memref<1x16x28xf32, #tpu.memory_space<vmem>>, vector<1x16x28xf32>
    %111 = vector.shape_cast %110 : vector<1x16x28xf32> to vector<16x28xf32>
    %112 = vector.shape_cast %109 : vector<16x28xf32> to vector<1x16x28xf32>
    tpu.vector_store %arg5[%c0_38, %c0_39, %c0_40], %112 {strides = array<i32>} : memref<1x16x28xf32, #tpu.memory_space<vmem>>, vector<1x16x28xf32>,
    return
  }
  func.func @transform_0(%arg0: i32, %arg1: i32) -> (i32, i32) {
    %c1_i32 = arith.constant 1 : i32
    %0 = arith.muli %arg0, %c1_i32 : i32
    %1 = arith.addi %0, %arg1 : i32
    %c0_i32 = arith.constant 0 : i32
    %c0_i32_0 = arith.constant 0 : i32
    return %c0_i32, %1 : i32, i32
  }
  func.func @transform_1(%arg0: i32, %arg1: i32) -> (i32, i32) {
    %c1_i32 = arith.constant 1 : i32
    %0 = arith.muli %arg0, %c1_i32 : i32
    %1 = arith.addi %0, %arg1 : i32
    %c0_i32 = arith.constant 0 : i32
    %c0_i32_0 = arith.constant 0 : i32
    return %1, %c0_i32 : i32, i32
  }
  func.func @transform_2(%arg0: i32, %arg1: i32) -> (i32, i32) {
    %c0_i32 = arith.constant 0 : i32
    %c0_i32_0 = arith.constant 0 : i32
    %c0_i32_1 = arith.constant 0 : i32
    return %c0_i32, %c0_i32_0 : i32, i32
  }
  func.func @transform_3(%arg0: i32, %arg1: i32) -> (i32, i32, i32) {
    %c0_i32 = arith.constant 0 : i32
    %c0_i32_0 = arith.constant 0 : i32
    %c0_i32_1 = arith.constant 0 : i32
    return %arg0, %c0_i32, %c0_i32_0 : i32, i32, i32
  }
}

</mosaic_0001>

<llo_original>
// kernel: tpu_custom_call.1
$region0: #{tpu_custom_call.1}
  #allocation0 [shape = 'u32[]', space=smem, size = 0x4, offset = 0x4, fixed_abs, tag = 'smem constant byte address 0x4 - core index']
  #allocation1 [shape = 'u32[144,128]{1,0:T(1,128)}', space=vmem, size = 0x12000, scoped, tag = 'internal scratch']
  %s0 = inlined_call_operand.vmem [shape: s32[1,128], index: 0, kind: input, shape index: {}]
  %s1 = inlined_call_operand.vmem [shape: f32[128,67], index: 1, kind: input, shape index: {}]
  %s2 = inlined_call_operand.vmem [shape: f32[200,128], index: 2, kind: input, shape index: {}]
  %s3 = inlined_call_operand.hbm [shape: f32[1,16,28], index: 3, kind: output, shape index: {}]
  %s4 = sld [smem:[#allocation0]]
  $region26: #{tpu_custom_call.1} parent=0
    _
  %s6 = ssub.s32 1, %s4
  %s7 = scalar_select 0, %s6, %s4
  $region1: #{tpu_custom_call.1} parent=0
    #allocation2 [shape = 'u8[8192]{0}', space=vmem, size = 0x2000, scoped, tag = 'output window, operand 0, single buffered']
    #allocation3 [shape = 's32[1]{0}', space=sflag, size = 0x4, scoped, tag = 'scoped memory for tpu_custom_call.1']
    %8 = vsyncpa [#allocation3], 0
    // Predicated region
    $region2: #{tpu_custom_call.1} parent=1 // pred_check
      _
    $region3: #{tpu_custom_call.1} parent=1 // pred_check_branch
      %10 = sbr.rel (0) target = $region5
    $region4: #{tpu_custom_call.1} parent=1 // pred_region
      %s11 = sadd.s32 0, 0
      %p12 = scmp.lt.s32.totalorder %s11, 0
      %s13 = scalar_select %p12, %s11, 0
      %s14 = scalar_lea.vmem %s0, %s13
      %s15 = sadd.s32 0, 0
    $region5: #{tpu_custom_call.1} parent=1 // pred_fallthru
      _
    // Predicated region
    $region6: #{tpu_custom_call.1} parent=1 // pred_check
      _
    $region7: #{tpu_custom_call.1} parent=1 // pred_check_branch
      %17 = sbr.rel (0) target = $region9
    $region8: #{tpu_custom_call.1} parent=1 // pred_region
      %s18 = sadd.s32 0, 0
      %s19 = smul.u32 16, %s18
      %p20 = scmp.lt.s32.totalorder %s19, 15
      %s21 = scalar_select %p20, %s19, 15
      %s22 = smul.addr %s21, 8
      %s23 = scalar_lea.vmem %s1, %s22
      %s24 = sadd.s32 0, 0
      %s25 = smul.u32 16, %s24
    $region9: #{tpu_custom_call.1} parent=1 // pred_fallthru
      _
    // Predicated region
    $region10: #{tpu_custom_call.1} parent=1 // pred_check
      _
    $region11: #{tpu_custom_call.1} parent=1 // pred_check_branch
      %27 = sbr.rel (0) target = $region13
    $region12: #{tpu_custom_call.1} parent=1 // pred_region
      _
    $region13: #{tpu_custom_call.1} parent=1 // pred_fallthru
      _
    %s28 = sadd.s32 0, 0
    %p29 = scmp.lt.s32.totalorder %s28, 0
    %s30 = scalar_select %p29, %s28, 0
    %s31 = scalar_lea.vmem %s0, %s30
    %s32 = sadd.s32 0, 0
    %s33 = smul.u32 16, %s32
    %p34 = scmp.lt.s32.totalorder %s33, 15
    %s35 = scalar_select %p34, %s33, 15
    %s36 = smul.addr %s35, 8
    %s37 = scalar_lea.vmem %s1, %s36
    %s38 = sadd.s32 0, 0
    %p39 = scmp.lt.s32.totalorder %s38, 0
    %s40 = scalar_select %p39, %s38, 0
    %s41 = scalar_lea.vmem %s0, %s40
    %s42 = sadd.s32 0, 0
    %s43 = sadd.s32 0, 0
    %s44 = smul.u32 16, %s43
    %p45 = scmp.lt.s32.totalorder %s44, 15
    %s46 = scalar_select %p45, %s44, 15
    %s47 = smul.addr %s46, 8
    %s48 = scalar_lea.vmem %s1, %s47
    %s49 = sadd.s32 0, 0
    %s50 = smul.u32 16, %s49
    %p51 = scmp.eq.s32.totalorder 0, 0
    // Predicated region
    $region14: #{tpu_custom_call.1} parent=1 // pred_check
      %p52 = pneg %p51
    $region15: #{tpu_custom_call.1} parent=1 // pred_check_branch
      %54 = sbr.rel (%p52) target = $region17
    $region16: #{tpu_custom_call.1} parent=1 // pred_region
      %vm55 = vcmask 228352
      %56 = vst.msk [vmem:[#allocation2] sm:$0xff] %vm55, 0.0
      %57 = vst.msk [vmem:[#allocation2 + $0x8] sm:$0xff] %vm55, 0.0
    $region17: #{tpu_custom_call.1} parent=1 // pred_fallthru
      _
    %v58 = vld [vmem:[%s48] sm:$0xff]
    %v59 = vld [vmem:[%s48 + $0x8] sm:$0xff]
    %v60 = vld [vmem:[%s48 + $0x10] sm:$0xff]
    %v61 = vld [vmem:[%s48 + $0x18] sm:$0xff]
    %v62 = vld [vmem:[%s48 + $0x20] sm:$0xff]
    %v63 = vld [vmem:[%s48 + $0x28] sm:$0xff]
    %v64 = vld [vmem:[%s48 + $0x30] sm:$0xff]
    %v65 = vld [vmem:[%s48 + $0x38] sm:$0xff]
    %v66 = vld [vmem:[%s48 + $0x40] sm:$0xff]
    %v67 = vld [vmem:[%s48 + $0x48] sm:$0xff]
    %v68 = vld [vmem:[%s48 + $0x50] sm:$0xff]
    %v69 = vld [vmem:[%s48 + $0x58] sm:$0xff]
    %v70 = vld [vmem:[%s48 + $0x60] sm:$0xff]
    %v71 = vld [vmem:[%s48 + $0x68] sm:$0xff]
    %v72 = vld [vmem:[%s48 + $0x70] sm:$0xff]
    %v73 = vld [vmem:[%s48 + $0x78] sm:$0xff]
    %v74 = vld [vmem:[%s2] sm:$0xff]
    %v75 = vld [vmem:[%s2 + $0x8] sm:$0xff]
    %v76 = vld [vmem:[%s2 + $0x10] sm:$0xff]
    %v77 = vld [vmem:[%s2 + $0x18] sm:$0x7]
    %v78 = vld [vmem:[%s2 + $0x1b] sm:$0xff]
    %v79 = vld [vmem:[%s2 + $0x23] sm:$0xff]
    %v80 = vld [vmem:[%s2 + $0x2b] sm:$0xff]
    %v81 = vld [vmem:[%s2 + $0x33] sm:$0xff]
    %v82 = vld [vmem:[%s2 + $0x3b] sm:$0xff]
    %v83 = vld [vmem:[%s2 + $0x43] sm:$0xff]
    %v84 = vld [vmem:[%s2 + $0x4b] sm:$0x1]
    %v85 = vld [vmem:[%s2 + $0x4c] sm:$0x1]
    %v86 = vld [vmem:[%s2 + $0x4d] sm:$0xff]
    %v87 = vld [vmem:[%s2 + $0x55] sm:$0xff]
    %v88 = vld [vmem:[%s2 + $0x5d] sm:$0xff]
    %v89 = vld [vmem:[%s2 + $0x65] sm:$0x7]
    %106 = vrot.lane.b32.xlu0 %v58, 88
    %v107 = vpop.permute.xlu0 %106
    %108 = vrot.lane.b32.xlu0 %v59, 88
    %v109 = vpop.permute.xlu0 %108
    %110 = vrot.lane.b32.xlu0 %v60, 88
    %v111 = vpop.permute.xlu0 %110
    %112 = vrot.lane.b32.xlu0 %v61, 88
    %v113 = vpop.permute.xlu0 %112
    %114 = vrot.lane.b32.xlu0 %v62, 88
    %v115 = vpop.permute.xlu0 %114
    %116 = vrot.lane.b32.xlu0 %v63, 88
    %v117 = vpop.permute.xlu0 %116
    %118 = vrot.lane.b32.xlu0 %v64, 88
    %v119 = vpop.permute.xlu0 %118
    %120 = vrot.lane.b32.xlu0 %v65, 88
    %v121 = vpop.permute.xlu0 %120
    %122 = vrot.lane.b32.xlu0 %v66, 88
    %v123 = vpop.permute.xlu0 %122
    %124 = vrot.lane.b32.xlu0 %v67, 88
    %v125 = vpop.permute.xlu0 %124
    %126 = vrot.lane.b32.xlu0 %v68, 88
    %v127 = vpop.permute.xlu0 %126
    %128 = vrot.lane.b32.xlu0 %v69, 88
    %v129 = vpop.permute.xlu0 %128
    %130 = vrot.lane.b32.xlu0 %v70, 88
    %v131 = vpop.permute.xlu0 %130
    %132 = vrot.lane.b32.xlu0 %v71, 88
    %v133 = vpop.permute.xlu0 %132
    %134 = vrot.lane.b32.xlu0 %v72, 88
    %v135 = vpop.permute.xlu0 %134
    %136 = vrot.lane.b32.xlu0 %v73, 88
    %v137 = vpop.permute.xlu0 %136
    %vm138 = vcmask 220160
    %v139 = vsel %vm138, %v107, 0
    %v141 = vsel %vm138, %v109, 0
    %v143 = vsel %vm138, %v111, 0
    %v145 = vsel %vm138, %v113, 0
    %v147 = vsel %vm138, %v115, 0
    %v149 = vsel %vm138, %v117, 0
    %v151 = vsel %vm138, %v119, 0
    %v153 = vsel %vm138, %v121, 0
    %v155 = vsel %vm138, %v123, 0
    %v157 = vsel %vm138, %v125, 0
    %v159 = vsel %vm138, %v127, 0
    %v161 = vsel %vm138, %v129, 0
    %v163 = vsel %vm138, %v131, 0
    %v165 = vsel %vm138, %v133, 0
    %v167 = vsel %vm138, %v135, 0
    %v169 = vsel %vm138, %v137, 0
    %vm171 = vcmask 1042432
    %v173 = vsel %vm171, %v77, 0
    %175 = vmatprep.subr.mxu0 0.0
    %176 = vmatpush1.msra.mxu0 %v74
    %177 = vmatprep.subr.mxu0 0.0
    %178 = vmatpush1.msra.mxu0 %v75
    %179 = vmatprep.subr.mxu0 0.0
    %180 = vmatpush1.msra.mxu0 %v76
    %181 = vmatprep.subr.mxu0 0.0
    %182 = vmatpush1.msra.mxu0 %v173
    %183 = vmatprep.subr.mxu0 0.0
    %184 = vmatpush1.msra.mxu0 0.0
    %185 = vmatprep.subr.mxu0 0.0
    %186 = vmatpush1.msra.mxu0 0.0
    %187 = vmatprep.subr.mxu0 0.0
    %188 = vmatpush1.msra.mxu0 0.0
    %189 = vmatprep.subr.mxu0 0.0
    %190 = vmatpush1.msra.mxu0 0.0
    %191 = vmatprep.subr.mxu0 0.0
    %192 = vmatpush1.msra.mxu0 0.0
    %193 = vmatprep.subr.mxu0 0.0
    %194 = vmatpush1.msra.mxu0 0.0
    %195 = vmatprep.subr.mxu0 0.0
    %196 = vmatpush1.msra.mxu0 0.0
    %197 = vmatprep.subr.mxu0 0.0
    %198 = vmatpush1.msra.mxu0 0.0
    %199 = vmatprep.subr.mxu0 0.0
    %200 = vmatpush1.msra.mxu0 0.0
    %201 = vmatprep.subr.mxu0 0.0
    %202 = vmatpush1.msra.mxu0 0.0
    %203 = vmatprep.subr.mxu0 0.0
    %204 = vmatpush1.msra.mxu0 0.0
    %205 = vmatprep.subr.mxu0 0.0
    %206 = vmatpush1.msra.mxu0 0.0
    %207 = vmatprep.subr.mxu0 0.0
    %208 = vmatpush1.msra.mxu0 0.0
    %209 = vmatprep.subr.mxu0 0.0
    %210 = vmatpush1.msra.mxu0 0.0
    %211 = vmatprep.subr.mxu0 0.0
    %212 = vmatpush1.msra.mxu0 0.0
    %213 = vmatprep.subr.mxu0 0.0
    %214 = vmatpush1.msra.mxu0 0.0
    %215 = vmatprep.subr.mxu0 0.0
    %216 = vmatpush1.msra.mxu0 0.0
    %217 = vmatprep.subr.mxu0 0.0
    %218 = vmatpush1.msra.mxu0 0.0
    %219 = vmatprep.subr.mxu0 0.0
    %220 = vmatpush1.msra.mxu0 0.0
    %221 = vmatprep.subr.mxu0 0.0
    %222 = vmatpush1.msra.mxu0 0.0
    %223 = vmatprep.subr.mxu0 0.0
    %224 = vmatpush1.msra.mxu0 0.0
    %225 = vmatprep.subr.mxu0 0.0
    %226 = vmatpush1.msra.mxu0 0.0
    %227 = vmatprep.subr.mxu0 0.0
    %228 = vmatpush1.msra.mxu0 0.0
    %229 = vmatprep.subr.mxu0 0.0
    %230 = vmatpush1.msra.mxu0 0.0
    %231 = vmatprep.subr.mxu0 0.0
    %232 = vmatpush1.msra.mxu0 0.0
    %233 = vmatprep.subr.mxu0 0.0
    %234 = vmatpush1.msra.mxu0 0.0
    %235 = vmatprep.subr.mxu0 0.0
    %236 = vmatpush1.msra.mxu0 0.0
    %237 = vmatprep.subr.mxu0 0.0
    %238 = vmatpush1.msra.mxu0 0.0
    %239 = vmatprep.mubr.f32.mxu0 0.0
    %240 = vmatmul.mubr.f32.gmra.mrb[0].mxu0 %v139
    %v241 = vpop.f32.mrb[0].mxu0
    %v242 = vadd.f32 0.0, %v241
    %v243 = vpop.f32.mrb[0].mxu0
    %244 = vmatprep.mubr.f32.mxu0 0.0
    %245 = vmatmul.mubr.f32.gmra.mrb[0].mxu0 %v141
    %v246 = vpop.f32.mrb[0].mxu0
    %v247 = vadd.f32 0.0, %v246
    %v248 = vpop.f32.mrb[0].mxu0
    %249 = vmatprep.mubr.f32.mxu0 0.0
    %250 = vmatmul.mubr.f32.gmra.mrb[0].mxu0 %v143
    %v251 = vpop.f32.mrb[0].mxu0
    %v252 = vadd.f32 0.0, %v251
    %v253 = vpop.f32.mrb[0].mxu0
    %254 = vmatprep.mubr.f32.mxu0 0.0
    %255 = vmatmul.mubr.f32.gmra.mrb[0].mxu0 %v145
    %v256 = vpop.f32.mrb[0].mxu0
    %v257 = vadd.f32 0.0, %v256
    %v258 = vpop.f32.mrb[0].mxu0
    %259 = vmatprep.mubr.f32.mxu0 0.0
    %260 = vmatmul.mubr.f32.gmra.mrb[0].mxu0 %v147
    %v261 = vpop.f32.mrb[0].mxu0
    %v262 = vadd.f32 0.0, %v261
    %v263 = vpop.f32.mrb[0].mxu0
    %264 = vmatprep.mubr.f32.mxu0 0.0
    %265 = vmatmul.mubr.f32.gmra.mrb[0].mxu0 %v149
    %v266 = vpop.f32.mrb[0].mxu0
    %v267 = vadd.f32 0.0, %v266
    %v268 = vpop.f32.mrb[0].mxu0
    %269 = vmatprep.mubr.f32.mxu0 0.0
    %270 = vmatmul.mubr.f32.gmra.mrb[0].mxu0 %v151
    %v271 = vpop.f32.mrb[0].mxu0
    %v272 = vadd.f32 0.0, %v271
    %v273 = vpop.f32.mrb[0].mxu0
    %274 = vmatprep.mubr.f32.mxu0 0.0
    %275 = vmatmul.mubr.f32.gmra.mrb[0].mxu0 %v153
    %v276 = vpop.f32.mrb[0].mxu0
    %v277 = vadd.f32 0.0, %v276
    %v278 = vpop.f32.mrb[0].mxu0
    %279 = vmatprep.mubr.f32.mxu0 0.0
    %280 = vmatmul.mubr.f32.gmra.mrb[0].mxu0 %v155
    %v281 = vpop.f32.mrb[0].mxu0
    %v282 = vadd.f32 0.0, %v281
    %v283 = vpop.f32.mrb[0].mxu0
    %284 = vmatprep.mubr.f32.mxu0 0.0
    %285 = vmatmul.mubr.f32.gmra.mrb[0].mxu0 %v157
    %v286 = vpop.f32.mrb[0].mxu0
    %v287 = vadd.f32 0.0, %v286
    %v288 = vpop.f32.mrb[0].mxu0
    %289 = vmatprep.mubr.f32.mxu0 0.0
    %290 = vmatmul.mubr.f32.gmra.mrb[0].mxu0 %v159
    %v291 = vpop.f32.mrb[0].mxu0
    %v292 = vadd.f32 0.0, %v291
    %v293 = vpop.f32.mrb[0].mxu0
    %294 = vmatprep.mubr.f32.mxu0 0.0
    %295 = vmatmul.mubr.f32.gmra.mrb[0].mxu0 %v161
    %v296 = vpop.f32.mrb[0].mxu0
    %v297 = vadd.f32 0.0, %v296
    %v298 = vpop.f32.mrb[0].mxu0
    %299 = vmatprep.mubr.f32.mxu0 0.0
    %300 = vmatmul.mubr.f32.gmra.mrb[0].mxu0 %v163
    %v301 = vpop.f32.mrb[0].mxu0
    %v302 = vadd.f32 0.0, %v301
    %v303 = vpop.f32.mrb[0].mxu0
    %304 = vmatprep.mubr.f32.mxu0 0.0
    %305 = vmatmul.mubr.f32.gmra.mrb[0].mxu0 %v165
    %v306 = vpop.f32.mrb[0].mxu0
    %v307 = vadd.f32 0.0, %v306
    %v308 = vpop.f32.mrb[0].mxu0
    %309 = vmatprep.mubr.f32.mxu0 0.0
    %310 = vmatmul.mubr.f32.gmra.mrb[0].mxu0 %v167
    %v311 = vpop.f32.mrb[0].mxu0
    %v312 = vadd.f32 0.0, %v311
    %v313 = vpop.f32.mrb[0].mxu0
    %314 = vmatprep.mubr.f32.mxu0 0.0
    %315 = vmatmul.mubr.f32.gmra.mrb[0].mxu0 %v169
    %v316 = vpop.f32.mrb[0].mxu0
    %v317 = vadd.f32 0.0, %v316
    %v318 = vpop.f32.mrb[0].mxu0
    %319 = vdwg.mxu0
    %v320 = vmul.f32 %v242, %v242
    %v321 = vmul.f32 %v247, %v247
    %v322 = vmul.f32 %v252, %v252
    %v323 = vmul.f32 %v257, %v257
    %v324 = vmul.f32 %v262, %v262
    %v325 = vmul.f32 %v267, %v267
    %v326 = vmul.f32 %v272, %v272
    %v327 = vmul.f32 %v277, %v277
    %v328 = vmul.f32 %v282, %v282
    %v329 = vmul.f32 %v287, %v287
    %v330 = vmul.f32 %v292, %v292
    %v331 = vmul.f32 %v297, %v297
    %v332 = vmul.f32 %v302, %v302
    %v333 = vmul.f32 %v307, %v307
    %v334 = vmul.f32 %v312, %v312
    %v335 = vmul.f32 %v317, %v317
    %352 = vrot.lane.b32.xlu0 %v320, 119
    %v353 = vpop.permute.xlu0 %352
    %354 = vrot.lane.b32.xlu0 %v321, 119
    %v355 = vpop.permute.xlu0 %354
    %356 = vrot.lane.b32.xlu0 %v322, 119
    %v357 = vpop.permute.xlu0 %356
    %358 = vrot.lane.b32.xlu0 %v323, 119
    %v359 = vpop.permute.xlu0 %358
    %360 = vrot.lane.b32.xlu0 %v324, 119
    %v361 = vpop.permute.xlu0 %360
    %362 = vrot.lane.b32.xlu0 %v325, 119
    %v363 = vpop.permute.xlu0 %362
    %364 = vrot.lane.b32.xlu0 %v326, 119
    %v365 = vpop.permute.xlu0 %364
    %366 = vrot.lane.b32.xlu0 %v327, 119
    %v367 = vpop.permute.xlu0 %366
    %368 = vrot.lane.b32.xlu0 %v328, 119
    %v369 = vpop.permute.xlu0 %368
    %370 = vrot.lane.b32.xlu0 %v329, 119
    %v371 = vpop.permute.xlu0 %370
    %372 = vrot.lane.b32.xlu0 %v330, 119
    %v373 = vpop.permute.xlu0 %372
    %374 = vrot.lane.b32.xlu0 %v331, 119
    %v375 = vpop.permute.xlu0 %374
    %376 = vrot.lane.b32.xlu0 %v332, 119
    %v377 = vpop.permute.xlu0 %376
    %378 = vrot.lane.b32.xlu0 %v333, 119
    %v379 = vpop.permute.xlu0 %378
    %380 = vrot.lane.b32.xlu0 %v334, 119
    %v381 = vpop.permute.xlu0 %380
    %382 = vrot.lane.b32.xlu0 %v335, 119
    %v383 = vpop.permute.xlu0 %382
    %v400 = vadd.f32 %v320, %v353
    %v401 = vadd.f32 %v321, %v355
    %v402 = vadd.f32 %v322, %v357
    %v403 = vadd.f32 %v323, %v359
    %v404 = vadd.f32 %v324, %v361
    %v405 = vadd.f32 %v325, %v363
    %v406 = vadd.f32 %v326, %v365
    %v407 = vadd.f32 %v327, %v367
    %v408 = vadd.f32 %v328, %v369
    %v409 = vadd.f32 %v329, %v371
    %v410 = vadd.f32 %v330, %v373
    %v411 = vadd.f32 %v331, %v375
    %v412 = vadd.f32 %v332, %v377
    %v413 = vadd.f32 %v333, %v379
    %v414 = vadd.f32 %v334, %v381
    %v415 = vadd.f32 %v335, %v383
    %416 = vrot.lane.b32.xlu0 %v320, 110
    %v417 = vpop.permute.xlu0 %416
    %418 = vrot.lane.b32.xlu0 %v321, 110
    %v419 = vpop.permute.xlu0 %418
    %420 = vrot.lane.b32.xlu0 %v322, 110
    %v421 = vpop.permute.xlu0 %420
    %422 = vrot.lane.b32.xlu0 %v323, 110
    %v423 = vpop.permute.xlu0 %422
    %424 = vrot.lane.b32.xlu0 %v324, 110
    %v425 = vpop.permute.xlu0 %424
    %426 = vrot.lane.b32.xlu0 %v325, 110
    %v427 = vpop.permute.xlu0 %426
    %428 = vrot.lane.b32.xlu0 %v326, 110
    %v429 = vpop.permute.xlu0 %428
    %430 = vrot.lane.b32.xlu0 %v327, 110
    %v431 = vpop.permute.xlu0 %430
    %432 = vrot.lane.b32.xlu0 %v328, 110
    %v433 = vpop.permute.xlu0 %432
    %434 = vrot.lane.b32.xlu0 %v329, 110
    %v435 = vpop.permute.xlu0 %434
    %436 = vrot.lane.b32.xlu0 %v330, 110
    %v437 = vpop.permute.xlu0 %436
    %438 = vrot.lane.b32.xlu0 %v331, 110
    %v439 = vpop.permute.xlu0 %438
    %440 = vrot.lane.b32.xlu0 %v332, 110
    %v441 = vpop.permute.xlu0 %440
    %442 = vrot.lane.b32.xlu0 %v333, 110
    %v443 = vpop.permute.xlu0 %442
    %444 = vrot.lane.b32.xlu0 %v334, 110
    %v445 = vpop.permute.xlu0 %444
    %446 = vrot.lane.b32.xlu0 %v335, 110
    %v447 = vpop.permute.xlu0 %446
    %v464 = vadd.f32 %v400, %v417
    %v465 = vadd.f32 %v401, %v419
    %v466 = vadd.f32 %v402, %v421
    %v467 = vadd.f32 %v403, %v423
    %v468 = vadd.f32 %v404, %v425
    %v469 = vadd.f32 %v405, %v427
    %v470 = vadd.f32 %v406, %v429
    %v471 = vadd.f32 %v407, %v431
    %v472 = vadd.f32 %v408, %v433
    %v473 = vadd.f32 %v409, %v435
    %v474 = vadd.f32 %v410, %v437
    %v475 = vadd.f32 %v411, %v439
    %v476 = vadd.f32 %v412, %v441
    %v477 = vadd.f32 %v413, %v443
    %v478 = vadd.f32 %v414, %v445
    %v479 = vadd.f32 %v415, %v447
    %v480 = vmax.f32 %v464, 1e-08
    %v481 = vmax.f32 %v465, 1e-08
    %v482 = vmax.f32 %v466, 1e-08
    %v483 = vmax.f32 %v467, 1e-08
    %v484 = vmax.f32 %v468, 1e-08
    %v485 = vmax.f32 %v469, 1e-08
    %v486 = vmax.f32 %v470, 1e-08
    %v487 = vmax.f32 %v471, 1e-08
    %v488 = vmax.f32 %v472, 1e-08
    %v489 = vmax.f32 %v473, 1e-08
    %v490 = vmax.f32 %v474, 1e-08
    %v491 = vmax.f32 %v475, 1e-08
    %v492 = vmax.f32 %v476, 1e-08
    %v493 = vmax.f32 %v477, 1e-08
    %v494 = vmax.f32 %v478, 1e-08
    %v495 = vmax.f32 %v479, 1e-08
    %v496 = vrsqrt.pop %v480
    %v497 = vmul.f32 %v480, %v496
    %vm498 = vcmp.eq.f32.partialorder %v480, inf
    %v499 = vsel %vm498, %v480, %v497
    %vm500 = vcmp.eq.f32.partialorder %v480, 0.0
    %v501 = vand.u32 %v480, 2147483648
    %v502 = vsel %vm500, %v501, %v499
    %v503 = vrsqrt.pop %v481
    %v504 = vmul.f32 %v481, %v503
    %vm505 = vcmp.eq.f32.partialorder %v481, inf
    %v506 = vsel %vm505, %v481, %v504
    %vm507 = vcmp.eq.f32.partialorder %v481, 0.0
    %v508 = vand.u32 %v481, 2147483648
    %v509 = vsel %vm507, %v508, %v506
    %v510 = vrsqrt.pop %v482
    %v511 = vmul.f32 %v482, %v510
    %vm512 = vcmp.eq.f32.partialorder %v482, inf
    %v513 = vsel %vm512, %v482, %v511
    %vm514 = vcmp.eq.f32.partialorder %v482, 0.0
    %v515 = vand.u32 %v482, 2147483648
    %v516 = vsel %vm514, %v515, %v513
    %v517 = vrsqrt.pop %v483
    %v518 = vmul.f32 %v483, %v517
    %vm519 = vcmp.eq.f32.partialorder %v483, inf
    %v520 = vsel %vm519, %v483, %v518
    %vm521 = vcmp.eq.f32.partialorder %v483, 0.0
    %v522 = vand.u32 %v483, 2147483648
    %v523 = vsel %vm521, %v522, %v520
    %v524 = vrsqrt.pop %v484
    %v525 = vmul.f32 %v484, %v524
    %vm526 = vcmp.eq.f32.partialorder %v484, inf
    %v527 = vsel %vm526, %v484, %v525
    %vm528 = vcmp.eq.f32.partialorder %v484, 0.0
    %v529 = vand.u32 %v484, 2147483648
    %v530 = vsel %vm528, %v529, %v527
    %v531 = vrsqrt.pop %v485
    %v532 = vmul.f32 %v485, %v531
    %vm533 = vcmp.eq.f32.partialorder %v485, inf
    %v534 = vsel %vm533, %v485, %v532
    %vm535 = vcmp.eq.f32.partialorder %v485, 0.0
    %v536 = vand.u32 %v485, 2147483648
    %v537 = vsel %vm535, %v536, %v534
    %v538 = vrsqrt.pop %v486
    %v539 = vmul.f32 %v486, %v538
    %vm540 = vcmp.eq.f32.partialorder %v486, inf
    %v541 = vsel %vm540, %v486, %v539
    %vm542 = vcmp.eq.f32.partialorder %v486, 0.0
    %v543 = vand.u32 %v486, 2147483648
    %v544 = vsel %vm542, %v543, %v541
    %v545 = vrsqrt.pop %v487
    %v546 = vmul.f32 %v487, %v545
    %vm547 = vcmp.eq.f32.partialorder %v487, inf
    %v548 = vsel %vm547, %v487, %v546
    %vm549 = vcmp.eq.f32.partialorder %v487, 0.0
    %v550 = vand.u32 %v487, 2147483648
    %v551 = vsel %vm549, %v550, %v548
    %v552 = vrsqrt.pop %v488
    %v553 = vmul.f32 %v488, %v552
    %vm554 = vcmp.eq.f32.partialorder %v488, inf
    %v555 = vsel %vm554, %v488, %v553
    %vm556 = vcmp.eq.f32.partialorder %v488, 0.0
    %v557 = vand.u32 %v488, 2147483648
    %v558 = vsel %vm556, %v557, %v555
    %v559 = vrsqrt.pop %v489
    %v560 = vmul.f32 %v489, %v559
    %vm561 = vcmp.eq.f32.partialorder %v489, inf
    %v562 = vsel %vm561, %v489, %v560
    %vm563 = vcmp.eq.f32.partialorder %v489, 0.0
    %v564 = vand.u32 %v489, 2147483648
    %v565 = vsel %vm563, %v564, %v562
    %v566 = vrsqrt.pop %v490
    %v567 = vmul.f32 %v490, %v566
    %vm568 = vcmp.eq.f32.partialorder %v490, inf
    %v569 = vsel %vm568, %v490, %v567
    %vm570 = vcmp.eq.f32.partialorder %v490, 0.0
    %v571 = vand.u32 %v490, 2147483648
    %v572 = vsel %vm570, %v571, %v569
    %v573 = vrsqrt.pop %v491
    %v574 = vmul.f32 %v491, %v573
    %vm575 = vcmp.eq.f32.partialorder %v491, inf
    %v576 = vsel %vm575, %v491, %v574
    %vm577 = vcmp.eq.f32.partialorder %v491, 0.0
    %v578 = vand.u32 %v491, 2147483648
    %v579 = vsel %vm577, %v578, %v576
    %v580 = vrsqrt.pop %v492
    %v581 = vmul.f32 %v492, %v580
    %vm582 = vcmp.eq.f32.partialorder %v492, inf
    %v583 = vsel %vm582, %v492, %v581
    %vm584 = vcmp.eq.f32.partialorder %v492, 0.0
    %v585 = vand.u32 %v492, 2147483648
    %v586 = vsel %vm584, %v585, %v583
    %v587 = vrsqrt.pop %v493
    %v588 = vmul.f32 %v493, %v587
    %vm589 = vcmp.eq.f32.partialorder %v493, inf
    %v590 = vsel %vm589, %v493, %v588
    %vm591 = vcmp.eq.f32.partialorder %v493, 0.0
    %v592 = vand.u32 %v493, 2147483648
    %v593 = vsel %vm591, %v592, %v590
    %v594 = vrsqrt.pop %v494
    %v595 = vmul.f32 %v494, %v594
    %vm596 = vcmp.eq.f32.partialorder %v494, inf
    %v597 = vsel %vm596, %v494, %v595
    %vm598 = vcmp.eq.f32.partialorder %v494, 0.0
    %v599 = vand.u32 %v494, 2147483648
    %v600 = vsel %vm598, %v599, %v597
    %v601 = vrsqrt.pop %v495
    %v602 = vmul.f32 %v495, %v601
    %vm603 = vcmp.eq.f32.partialorder %v495, inf
    %v604 = vsel %vm603, %v495, %v602
    %vm605 = vcmp.eq.f32.partialorder %v495, 0.0
    %v606 = vand.u32 %v495, 2147483648
    %v607 = vsel %vm605, %v606, %v604
    %624 = vrot.lane.b32.xlu0 %v502, 40
    %v625 = vpop.permute.xlu0 %624
    %626 = vrot.lane.b32.xlu0 %v509, 40
    %v627 = vpop.permute.xlu0 %626
    %628 = vrot.lane.b32.xlu0 %v516, 40
    %v629 = vpop.permute.xlu0 %628
    %630 = vrot.lane.b32.xlu0 %v523, 40
    %v631 = vpop.permute.xlu0 %630
    %632 = vrot.lane.b32.xlu0 %v530, 40
    %v633 = vpop.permute.xlu0 %632
    %634 = vrot.lane.b32.xlu0 %v537, 40
    %v635 = vpop.permute.xlu0 %634
    %636 = vrot.lane.b32.xlu0 %v544, 40
    %v637 = vpop.permute.xlu0 %636
    %638 = vrot.lane.b32.xlu0 %v551, 40
    %v639 = vpop.permute.xlu0 %638
    %640 = vrot.lane.b32.xlu0 %v558, 40
    %v641 = vpop.permute.xlu0 %640
    %642 = vrot.lane.b32.xlu0 %v565, 40
    %v643 = vpop.permute.xlu0 %642
    %644 = vrot.lane.b32.xlu0 %v572, 40
    %v645 = vpop.permute.xlu0 %644
    %646 = vrot.lane.b32.xlu0 %v579, 40
    %v647 = vpop.permute.xlu0 %646
    %648 = vrot.lane.b32.xlu0 %v586, 40
    %v649 = vpop.permute.xlu0 %648
    %650 = vrot.lane.b32.xlu0 %v593, 40
    %v651 = vpop.permute.xlu0 %650
    %652 = vrot.lane.b32.xlu0 %v600, 40
    %v653 = vpop.permute.xlu0 %652
    %654 = vrot.lane.b32.xlu0 %v607, 40
    %v655 = vpop.permute.xlu0 %654
    %vm672 = vcmask 326656
    %v673 = vsel %vm672, %v58, %v625
    %v674 = vsel %vm672, %v59, %v627
    %v675 = vsel %vm672, %v60, %v629
    %v676 = vsel %vm672, %v61, %v631
    %v677 = vsel %vm672, %v62, %v633
    %v678 = vsel %vm672, %v63, %v635
    %v679 = vsel %vm672, %v64, %v637
    %v680 = vsel %vm672, %v65, %v639
    %v681 = vsel %vm672, %v66, %v641
    %v682 = vsel %vm672, %v67, %v643
    %v683 = vsel %vm672, %v68, %v645
    %v684 = vsel %vm672, %v69, %v647
    %v685 = vsel %vm672, %v70, %v649
    %v686 = vsel %vm672, %v71, %v651
    %v687 = vsel %vm672, %v72, %v653
    %v688 = vsel %vm672, %v73, %v655
    %v689 = vlaneseq
    %v690 = vshrl.u32 %v689, 7
    %v691 = vsub.s32 0, %v690
    %v692 = vrot.slane %v85, %v691
    %vm693 = vcmask 400384
    %v695 = vsel %vm693, %v673, 0
    %v698 = vsel %vm693, %v674, 0
    %v701 = vsel %vm693, %v675, 0
    %v704 = vsel %vm693, %v676, 0
    %v707 = vsel %vm693, %v677, 0
    %v710 = vsel %vm693, %v678, 0
    %v713 = vsel %vm693, %v679, 0
    %v716 = vsel %vm693, %v680, 0
    %v719 = vsel %vm693, %v681, 0
    %v722 = vsel %vm693, %v682, 0
    %v725 = vsel %vm693, %v683, 0
    %v728 = vsel %vm693, %v684, 0
    %v731 = vsel %vm693, %v685, 0
    %v734 = vsel %vm693, %v686, 0
    %v737 = vsel %vm693, %v687, 0
    %v740 = vsel %vm693, %v688, 0
    %vm742 = vcmask 1040384
    %v744 = vsel %vm742, %v84, 0
    %746 = vmatprep.subr.mxu0 0.0
    %747 = vmatpush1.msra.mxu0 %v78
    %748 = vmatprep.subr.mxu0 0.0
    %749 = vmatpush1.msra.mxu0 %v79
    %750 = vmatprep.subr.mxu0 0.0
    %751 = vmatpush1.msra.mxu0 %v80
    %752 = vmatprep.subr.mxu0 0.0
    %753 = vmatpush1.msra.mxu0 %v81
    %754 = vmatprep.subr.mxu0 0.0
    %755 = vmatpush1.msra.mxu0 %v82
    %756 = vmatprep.subr.mxu0 0.0
    %757 = vmatpush1.msra.mxu0 %v83
    %758 = vmatprep.subr.mxu0 0.0
    %759 = vmatpush1.msra.mxu0 %v744
    %760 = vmatprep.subr.mxu0 0.0
    %761 = vmatpush1.msra.mxu0 0.0
    %762 = vmatprep.subr.mxu0 0.0
    %763 = vmatpush1.msra.mxu0 0.0
    %764 = vmatprep.subr.mxu0 0.0
    %765 = vmatpush1.msra.mxu0 0.0
    %766 = vmatprep.subr.mxu0 0.0
    %767 = vmatpush1.msra.mxu0 0.0
    %768 = vmatprep.subr.mxu0 0.0
    %769 = vmatpush1.msra.mxu0 0.0
    %770 = vmatprep.subr.mxu0 0.0
    %771 = vmatpush1.msra.mxu0 0.0
    %772 = vmatprep.subr.mxu0 0.0
    %773 = vmatpush1.msra.mxu0 0.0
    %774 = vmatprep.subr.mxu0 0.0
    %775 = vmatpush1.msra.mxu0 0.0
    %776 = vmatprep.subr.mxu0 0.0
    %777 = vmatpush1.msra.mxu0 0.0
    %778 = vmatprep.subr.mxu0 0.0
    %779 = vmatpush1.msra.mxu0 0.0
    %780 = vmatprep.subr.mxu0 0.0
    %781 = vmatpush1.msra.mxu0 0.0
    %782 = vmatprep.subr.mxu0 0.0
    %783 = vmatpush1.msra.mxu0 0.0
    %784 = vmatprep.subr.mxu0 0.0
    %785 = vmatpush1.msra.mxu0 0.0
    %786 = vmatprep.subr.mxu0 0.0
    %787 = vmatpush1.msra.mxu0 0.0
    %788 = vmatprep.subr.mxu0 0.0
    %789 = vmatpush1.msra.mxu0 0.0
    %790 = vmatprep.subr.mxu0 0.0
    %791 = vmatpush1.msra.mxu0 0.0
    %792 = vmatprep.subr.mxu0 0.0
    %793 = vmatpush1.msra.mxu0 0.0
    %794 = vmatprep.subr.mxu0 0.0
    %795 = vmatpush1.msra.mxu0 0.0
    %796 = vmatprep.subr.mxu0 0.0
    %797 = vmatpush1.msra.mxu0 0.0
    %798 = vmatprep.subr.mxu0 0.0
    %799 = vmatpush1.msra.mxu0 0.0
    %800 = vmatprep.subr.mxu0 0.0
    %801 = vmatpush1.msra.mxu0 0.0
    %802 = vmatprep.subr.mxu0 0.0
    %803 = vmatpush1.msra.mxu0 0.0
    %804 = vmatprep.subr.mxu0 0.0
    %805 = vmatpush1.msra.mxu0 0.0
    %806 = vmatprep.subr.mxu0 0.0
    %807 = vmatpush1.msra.mxu0 0.0
    %808 = vmatprep.subr.mxu0 0.0
    %809 = vmatpush1.msra.mxu0 0.0
    %810 = vmatprep.mubr.f32.mxu0 0.0
    %811 = vmatmul.mubr.f32.gmra.mrb[0].mxu0 %v695
    %v812 = vpop.f32.mrb[0].mxu0
    %v813 = vadd.f32 %v692, %v812
    %v814 = vpop.f32.mrb[0].mxu0
    %815 = vmatprep.mubr.f32.mxu0 0.0
    %816 = vmatmul.mubr.f32.gmra.mrb[0].mxu0 %v698
    %v817 = vpop.f32.mrb[0].mxu0
    %v818 = vadd.f32 %v692, %v817
    %v819 = vpop.f32.mrb[0].mxu0
    %820 = vmatprep.mubr.f32.mxu0 0.0
    %821 = vmatmul.mubr.f32.gmra.mrb[0].mxu0 %v701
    %v822 = vpop.f32.mrb[0].mxu0
    %v823 = vadd.f32 %v692, %v822
    %v824 = vpop.f32.mrb[0].mxu0
    %825 = vmatprep.mubr.f32.mxu0 0.0
    %826 = vmatmul.mubr.f32.gmra.mrb[0].mxu0 %v704
    %v827 = vpop.f32.mrb[0].mxu0
    %v828 = vadd.f32 %v692, %v827
    %v829 = vpop.f32.mrb[0].mxu0
    %830 = vmatprep.mubr.f32.mxu0 0.0
    %831 = vmatmul.mubr.f32.gmra.mrb[0].mxu0 %v707
    %v832 = vpop.f32.mrb[0].mxu0
    %v833 = vadd.f32 %v692, %v832
    %v834 = vpop.f32.mrb[0].mxu0
    %835 = vmatprep.mubr.f32.mxu0 0.0
    %836 = vmatmul.mubr.f32.gmra.mrb[0].mxu0 %v710
    %v837 = vpop.f32.mrb[0].mxu0
    %v838 = vadd.f32 %v692, %v837
    %v839 = vpop.f32.mrb[0].mxu0
    %840 = vmatprep.mubr.f32.mxu0 0.0
    %841 = vmatmul.mubr.f32.gmra.mrb[0].mxu0 %v713
    %v842 = vpop.f32.mrb[0].mxu0
    %v843 = vadd.f32 %v692, %v842
    %v844 = vpop.f32.mrb[0].mxu0
    %845 = vmatprep.mubr.f32.mxu0 0.0
    %846 = vmatmul.mubr.f32.gmra.mrb[0].mxu0 %v716
    %v847 = vpop.f32.mrb[0].mxu0
    %v848 = vadd.f32 %v692, %v847
    %v849 = vpop.f32.mrb[0].mxu0
    %850 = vmatprep.mubr.f32.mxu0 0.0
    %851 = vmatmul.mubr.f32.gmra.mrb[0].mxu0 %v719
    %v852 = vpop.f32.mrb[0].mxu0
    %v853 = vadd.f32 %v692, %v852
    %v854 = vpop.f32.mrb[0].mxu0
    %855 = vmatprep.mubr.f32.mxu0 0.0
    %856 = vmatmul.mubr.f32.gmra.mrb[0].mxu0 %v722
    %v857 = vpop.f32.mrb[0].mxu0
    %v858 = vadd.f32 %v692, %v857
    %v859 = vpop.f32.mrb[0].mxu0
    %860 = vmatprep.mubr.f32.mxu0 0.0
    %861 = vmatmul.mubr.f32.gmra.mrb[0].mxu0 %v725
    %v862 = vpop.f32.mrb[0].mxu0
    %v863 = vadd.f32 %v692, %v862
    %v864 = vpop.f32.mrb[0].mxu0
    %865 = vmatprep.mubr.f32.mxu0 0.0
    %866 = vmatmul.mubr.f32.gmra.mrb[0].mxu0 %v728
    %v867 = vpop.f32.mrb[0].mxu0
    %v868 = vadd.f32 %v692, %v867
    %v869 = vpop.f32.mrb[0].mxu0
    %870 = vmatprep.mubr.f32.mxu0 0.0
    %871 = vmatmul.mubr.f32.gmra.mrb[0].mxu0 %v731
    %v872 = vpop.f32.mrb[0].mxu0
    %v873 = vadd.f32 %v692, %v872
    %v874 = vpop.f32.mrb[0].mxu0
    %875 = vmatprep.mubr.f32.mxu0 0.0
    %876 = vmatmul.mubr.f32.gmra.mrb[0].mxu0 %v734
    %v877 = vpop.f32.mrb[0].mxu0
    %v878 = vadd.f32 %v692, %v877
    %v879 = vpop.f32.mrb[0].mxu0
    %880 = vmatprep.mubr.f32.mxu0 0.0
    %881 = vmatmul.mubr.f32.gmra.mrb[0].mxu0 %v737
    %v882 = vpop.f32.mrb[0].mxu0
    %v883 = vadd.f32 %v692, %v882
    %v884 = vpop.f32.mrb[0].mxu0
    %885 = vmatprep.mubr.f32.mxu0 0.0
    %886 = vmatmul.mubr.f32.gmra.mrb[0].mxu0 %v740
    %v887 = vpop.f32.mrb[0].mxu0
    %v888 = vadd.f32 %v692, %v887
    %v889 = vpop.f32.mrb[0].mxu0
    %890 = vdwg.mxu0
    %v892 = vsel %vm138, %v242, 0
    %v895 = vsel %vm138, %v247, 0
    %v898 = vsel %vm138, %v252, 0
    %v901 = vsel %vm138, %v257, 0
    %v904 = vsel %vm138, %v262, 0
    %v907 = vsel %vm138, %v267, 0
    %v910 = vsel %vm138, %v272, 0
    %v913 = vsel %vm138, %v277, 0
    %v916 = vsel %vm138, %v282, 0
    %v919 = vsel %vm138, %v287, 0
    %v922 = vsel %vm138, %v292, 0
    %v925 = vsel %vm138, %v297, 0
    %v928 = vsel %vm138, %v302, 0
    %v931 = vsel %vm138, %v307, 0
    %v934 = vsel %vm138, %v312, 0
    %v937 = vsel %vm138, %v317, 0
    %v940 = vsel %vm171, %v89, 0
    %942 = vmatprep.subr.mxu0 0.0
    %943 = vmatpush1.msra.mxu0 %v86
    %944 = vmatprep.subr.mxu0 0.0
    %945 = vmatpush1.msra.mxu0 %v87
    %946 = vmatprep.subr.mxu0 0.0
    %947 = vmatpush1.msra.mxu0 %v88
    %948 = vmatprep.subr.mxu0 0.0
    %949 = vmatpush1.msra.mxu0 %v940
    %950 = vmatprep.subr.mxu0 0.0
    %951 = vmatpush1.msra.mxu0 0.0
    %952 = vmatprep.subr.mxu0 0.0
    %953 = vmatpush1.msra.mxu0 0.0
    %954 = vmatprep.subr.mxu0 0.0
    %955 = vmatpush1.msra.mxu0 0.0
    %956 = vmatprep.subr.mxu0 0.0
    %957 = vmatpush1.msra.mxu0 0.0
    %958 = vmatprep.subr.mxu0 0.0
    %959 = vmatpush1.msra.mxu0 0.0
    %960 = vmatprep.subr.mxu0 0.0
    %961 = vmatpush1.msra.mxu0 0.0
    %962 = vmatprep.subr.mxu0 0.0
    %963 = vmatpush1.msra.mxu0 0.0
    %964 = vmatprep.subr.mxu0 0.0
    %965 = vmatpush1.msra.mxu0 0.0
    %966 = vmatprep.subr.mxu0 0.0
    %967 = vmatpush1.msra.mxu0 0.0
    %968 = vmatprep.subr.mxu0 0.0
    %969 = vmatpush1.msra.mxu0 0.0
    %970 = vmatprep.subr.mxu0 0.0
    %971 = vmatpush1.msra.mxu0 0.0
    %972 = vmatprep.subr.mxu0 0.0
    %973 = vmatpush1.msra.mxu0 0.0
    %974 = vmatprep.subr.mxu0 0.0
    %975 = vmatpush1.msra.mxu0 0.0
    %976 = vmatprep.subr.mxu0 0.0
    %977 = vmatpush1.msra.mxu0 0.0
    %978 = vmatprep.subr.mxu0 0.0
    %979 = vmatpush1.msra.mxu0 0.0
    %980 = vmatprep.subr.mxu0 0.0
    %981 = vmatpush1.msra.mxu0 0.0
    %982 = vmatprep.subr.mxu0 0.0
    %983 = vmatpush1.msra.mxu0 0.0
    %984 = vmatprep.subr.mxu0 0.0
    %985 = vmatpush1.msra.mxu0 0.0
    %986 = vmatprep.subr.mxu0 0.0
    %987 = vmatpush1.msra.mxu0 0.0
    %988 = vmatprep.subr.mxu0 0.0
    %989 = vmatpush1.msra.mxu0 0.0
    %990 = vmatprep.subr.mxu0 0.0
    %991 = vmatpush1.msra.mxu0 0.0
    %992 = vmatprep.subr.mxu0 0.0
    %993 = vmatpush1.msra.mxu0 0.0
    %994 = vmatprep.subr.mxu0 0.0
    %995 = vmatpush1.msra.mxu0 0.0
    %996 = vmatprep.subr.mxu0 0.0
    %997 = vmatpush1.msra.mxu0 0.0
    %998 = vmatprep.subr.mxu0 0.0
    %999 = vmatpush1.msra.mxu0 0.0
    %1000 = vmatprep.subr.mxu0 0.0
    %1001 = vmatpush1.msra.mxu0 0.0
    %1002 = vmatprep.subr.mxu0 0.0
    %1003 = vmatpush1.msra.mxu0 0.0
    %1004 = vmatprep.subr.mxu0 0.0
    %1005 = vmatpush1.msra.mxu0 0.0
    %1006 = vmatprep.mubr.f32.mxu0 0.0
    %1007 = vmatmul.mubr.f32.gmra.mrb[0].mxu0 %v892
    %v1008 = vpop.f32.mrb[0].mxu0
    %v1009 = vadd.f32 0.0, %v1008
    %v1010 = vpop.f32.mrb[0].mxu0
    %1011 = vmatprep.mubr.f32.mxu0 0.0
    %1012 = vmatmul.mubr.f32.gmra.mrb[0].mxu0 %v895
    %v1013 = vpop.f32.mrb[0].mxu0
    %v1014 = vadd.f32 0.0, %v1013
    %v1015 = vpop.f32.mrb[0].mxu0
    %1016 = vmatprep.mubr.f32.mxu0 0.0
    %1017 = vmatmul.mubr.f32.gmra.mrb[0].mxu0 %v898
    %v1018 = vpop.f32.mrb[0].mxu0
    %v1019 = vadd.f32 0.0, %v1018
    %v1020 = vpop.f32.mrb[0].mxu0
    %1021 = vmatprep.mubr.f32.mxu0 0.0
    %1022 = vmatmul.mubr.f32.gmra.mrb[0].mxu0 %v901
    %v1023 = vpop.f32.mrb[0].mxu0
    %v1024 = vadd.f32 0.0, %v1023
    %v1025 = vpop.f32.mrb[0].mxu0
    %1026 = vmatprep.mubr.f32.mxu0 0.0
    %1027 = vmatmul.mubr.f32.gmra.mrb[0].mxu0 %v904
    %v1028 = vpop.f32.mrb[0].mxu0
    %v1029 = vadd.f32 0.0, %v1028
    %v1030 = vpop.f32.mrb[0].mxu0
    %1031 = vmatprep.mubr.f32.mxu0 0.0
    %1032 = vmatmul.mubr.f32.gmra.mrb[0].mxu0 %v907
    %v1033 = vpop.f32.mrb[0].mxu0
    %v1034 = vadd.f32 0.0, %v1033
    %v1035 = vpop.f32.mrb[0].mxu0
    %1036 = vmatprep.mubr.f32.mxu0 0.0
    %1037 = vmatmul.mubr.f32.gmra.mrb[0].mxu0 %v910
    %v1038 = vpop.f32.mrb[0].mxu0
    %v1039 = vadd.f32 0.0, %v1038
    %v1040 = vpop.f32.mrb[0].mxu0
    %1041 = vmatprep.mubr.f32.mxu0 0.0
    %1042 = vmatmul.mubr.f32.gmra.mrb[0].mxu0 %v913
    %v1043 = vpop.f32.mrb[0].mxu0
    %v1044 = vadd.f32 0.0, %v1043
    %v1045 = vpop.f32.mrb[0].mxu0
    %1046 = vmatprep.mubr.f32.mxu0 0.0
    %1047 = vmatmul.mubr.f32.gmra.mrb[0].mxu0 %v916
    %v1048 = vpop.f32.mrb[0].mxu0
    %v1049 = vadd.f32 0.0, %v1048
    %v1050 = vpop.f32.mrb[0].mxu0
    %1051 = vmatprep.mubr.f32.mxu0 0.0
    %1052 = vmatmul.mubr.f32.gmra.mrb[0].mxu0 %v919
    %v1053 = vpop.f32.mrb[0].mxu0
    %v1054 = vadd.f32 0.0, %v1053
    %v1055 = vpop.f32.mrb[0].mxu0
    %1056 = vmatprep.mubr.f32.mxu0 0.0
    %1057 = vmatmul.mubr.f32.gmra.mrb[0].mxu0 %v922
    %v1058 = vpop.f32.mrb[0].mxu0
    %v1059 = vadd.f32 0.0, %v1058
    %v1060 = vpop.f32.mrb[0].mxu0
    %1061 = vmatprep.mubr.f32.mxu0 0.0
    %1062 = vmatmul.mubr.f32.gmra.mrb[0].mxu0 %v925
    %v1063 = vpop.f32.mrb[0].mxu0
    %v1064 = vadd.f32 0.0, %v1063
    %v1065 = vpop.f32.mrb[0].mxu0
    %1066 = vmatprep.mubr.f32.mxu0 0.0
    %1067 = vmatmul.mubr.f32.gmra.mrb[0].mxu0 %v928
    %v1068 = vpop.f32.mrb[0].mxu0
    %v1069 = vadd.f32 0.0, %v1068
    %v1070 = vpop.f32.mrb[0].mxu0
    %1071 = vmatprep.mubr.f32.mxu0 0.0
    %1072 = vmatmul.mubr.f32.gmra.mrb[0].mxu0 %v931
    %v1073 = vpop.f32.mrb[0].mxu0
    %v1074 = vadd.f32 0.0, %v1073
    %v1075 = vpop.f32.mrb[0].mxu0
    %1076 = vmatprep.mubr.f32.mxu0 0.0
    %1077 = vmatmul.mubr.f32.gmra.mrb[0].mxu0 %v934
    %v1078 = vpop.f32.mrb[0].mxu0
    %v1079 = vadd.f32 0.0, %v1078
    %v1080 = vpop.f32.mrb[0].mxu0
    %1081 = vmatprep.mubr.f32.mxu0 0.0
    %1082 = vmatmul.mubr.f32.gmra.mrb[0].mxu0 %v937
    %v1083 = vpop.f32.mrb[0].mxu0
    %v1084 = vadd.f32 0.0, %v1083
    %v1085 = vpop.f32.mrb[0].mxu0
    %1086 = vdwg.mxu0
    %v1087 = vmul.f32 %v1009, %v1009
    %v1088 = vmul.f32 %v1014, %v1014
    %v1089 = vmul.f32 %v1019, %v1019
    %v1090 = vmul.f32 %v1024, %v1024
    %v1091 = vmul.f32 %v1029, %v1029
    %v1092 = vmul.f32 %v1034, %v1034
    %v1093 = vmul.f32 %v1039, %v1039
    %v1094 = vmul.f32 %v1044, %v1044
    %v1095 = vmul.f32 %v1049, %v1049
    %v1096 = vmul.f32 %v1054, %v1054
    %v1097 = vmul.f32 %v1059, %v1059
    %v1098 = vmul.f32 %v1064, %v1064
    %v1099 = vmul.f32 %v1069, %v1069
    %v1100 = vmul.f32 %v1074, %v1074
    %v1101 = vmul.f32 %v1079, %v1079
    %v1102 = vmul.f32 %v1084, %v1084
    %1119 = vrot.lane.b32.xlu0 %v1087, 124
    %v1120 = vpop.permute.xlu0 %1119
    %1121 = vrot.lane.b32.xlu0 %v1088, 124
    %v1122 = vpop.permute.xlu0 %1121
    %1123 = vrot.lane.b32.xlu0 %v1089, 124
    %v1124 = vpop.permute.xlu0 %1123
    %1125 = vrot.lane.b32.xlu0 %v1090, 124
    %v1126 = vpop.permute.xlu0 %1125
    %1127 = vrot.lane.b32.xlu0 %v1091, 124
    %v1128 = vpop.permute.xlu0 %1127
    %1129 = vrot.lane.b32.xlu0 %v1092, 124
    %v1130 = vpop.permute.xlu0 %1129
    %1131 = vrot.lane.b32.xlu0 %v1093, 124
    %v1132 = vpop.permute.xlu0 %1131
    %1133 = vrot.lane.b32.xlu0 %v1094, 124
    %v1134 = vpop.permute.xlu0 %1133
    %1135 = vrot.lane.b32.xlu0 %v1095, 124
    %v1136 = vpop.permute.xlu0 %1135
    %1137 = vrot.lane.b32.xlu0 %v1096, 124
    %v1138 = vpop.permute.xlu0 %1137
    %1139 = vrot.lane.b32.xlu0 %v1097, 124
    %v1140 = vpop.permute.xlu0 %1139
    %1141 = vrot.lane.b32.xlu0 %v1098, 124
    %v1142 = vpop.permute.xlu0 %1141
    %1143 = vrot.lane.b32.xlu0 %v1099, 124
    %v1144 = vpop.permute.xlu0 %1143
    %1145 = vrot.lane.b32.xlu0 %v1100, 124
    %v1146 = vpop.permute.xlu0 %1145
    %1147 = vrot.lane.b32.xlu0 %v1101, 124
    %v1148 = vpop.permute.xlu0 %1147
    %1149 = vrot.lane.b32.xlu0 %v1102, 124
    %v1150 = vpop.permute.xlu0 %1149
    %v1167 = vadd.f32 %v1087, %v1120
    %v1168 = vadd.f32 %v1088, %v1122
    %v1169 = vadd.f32 %v1089, %v1124
    %v1170 = vadd.f32 %v1090, %v1126
    %v1171 = vadd.f32 %v1091, %v1128
    %v1172 = vadd.f32 %v1092, %v1130
    %v1173 = vadd.f32 %v1093, %v1132
    %v1174 = vadd.f32 %v1094, %v1134
    %v1175 = vadd.f32 %v1095, %v1136
    %v1176 = vadd.f32 %v1096, %v1138
    %v1177 = vadd.f32 %v1097, %v1140
    %v1178 = vadd.f32 %v1098, %v1142
    %v1179 = vadd.f32 %v1099, %v1144
    %v1180 = vadd.f32 %v1100, %v1146
    %v1181 = vadd.f32 %v1101, %v1148
    %v1182 = vadd.f32 %v1102, %v1150
    %1183 = vrot.lane.b32.xlu0 %v1087, 120
    %v1184 = vpop.permute.xlu0 %1183
    %1185 = vrot.lane.b32.xlu0 %v1088, 120
    %v1186 = vpop.permute.xlu0 %1185
    %1187 = vrot.lane.b32.xlu0 %v1089, 120
    %v1188 = vpop.permute.xlu0 %1187
    %1189 = vrot.lane.b32.xlu0 %v1090, 120
    %v1190 = vpop.permute.xlu0 %1189
    %1191 = vrot.lane.b32.xlu0 %v1091, 120
    %v1192 = vpop.permute.xlu0 %1191
    %1193 = vrot.lane.b32.xlu0 %v1092, 120
    %v1194 = vpop.permute.xlu0 %1193
    %1195 = vrot.lane.b32.xlu0 %v1093, 120
    %v1196 = vpop.permute.xlu0 %1195
    %1197 = vrot.lane.b32.xlu0 %v1094, 120
    %v1198 = vpop.permute.xlu0 %1197
    %1199 = vrot.lane.b32.xlu0 %v1095, 120
    %v1200 = vpop.permute.xlu0 %1199
    %1201 = vrot.lane.b32.xlu0 %v1096, 120
    %v1202 = vpop.permute.xlu0 %1201
    %1203 = vrot.lane.b32.xlu0 %v1097, 120
    %v1204 = vpop.permute.xlu0 %1203
    %1205 = vrot.lane.b32.xlu0 %v1098, 120
    %v1206 = vpop.permute.xlu0 %1205
    %1207 = vrot.lane.b32.xlu0 %v1099, 120
    %v1208 = vpop.permute.xlu0 %1207
    %1209 = vrot.lane.b32.xlu0 %v1100, 120
    %v1210 = vpop.permute.xlu0 %1209
    %1211 = vrot.lane.b32.xlu0 %v1101, 120
    %v1212 = vpop.permute.xlu0 %1211
    %1213 = vrot.lane.b32.xlu0 %v1102, 120
    %v1214 = vpop.permute.xlu0 %1213
    %v1231 = vadd.f32 %v1167, %v1184
    %v1232 = vadd.f32 %v1168, %v1186
    %v1233 = vadd.f32 %v1169, %v1188
    %v1234 = vadd.f32 %v1170, %v1190
    %v1235 = vadd.f32 %v1171, %v1192
    %v1236 = vadd.f32 %v1172, %v1194
    %v1237 = vadd.f32 %v1173, %v1196
    %v1238 = vadd.f32 %v1174, %v1198
    %v1239 = vadd.f32 %v1175, %v1200
    %v1240 = vadd.f32 %v1176, %v1202
    %v1241 = vadd.f32 %v1177, %v1204
    %v1242 = vadd.f32 %v1178, %v1206
    %v1243 = vadd.f32 %v1179, %v1208
    %v1244 = vadd.f32 %v1180, %v1210
    %v1245 = vadd.f32 %v1181, %v1212
    %v1246 = vadd.f32 %v1182, %v1214
    %v1247 = vmax.f32 %v1231, 1e-08
    %v1248 = vmax.f32 %v1232, 1e-08
    %v1249 = vmax.f32 %v1233, 1e-08
    %v1250 = vmax.f32 %v1234, 1e-08
    %v1251 = vmax.f32 %v1235, 1e-08
    %v1252 = vmax.f32 %v1236, 1e-08
    %v1253 = vmax.f32 %v1237, 1e-08
    %v1254 = vmax.f32 %v1238, 1e-08
    %v1255 = vmax.f32 %v1239, 1e-08
    %v1256 = vmax.f32 %v1240, 1e-08
    %v1257 = vmax.f32 %v1241, 1e-08
    %v1258 = vmax.f32 %v1242, 1e-08
    %v1259 = vmax.f32 %v1243, 1e-08
    %v1260 = vmax.f32 %v1244, 1e-08
    %v1261 = vmax.f32 %v1245, 1e-08
    %v1262 = vmax.f32 %v1246, 1e-08
    %v1263 = vrsqrt.pop %v1247
    %v1264 = vmul.f32 %v1247, %v1263
    %vm1265 = vcmp.eq.f32.partialorder %v1247, inf
    %v1266 = vsel %vm1265, %v1247, %v1264
    %vm1267 = vcmp.eq.f32.partialorder %v1247, 0.0
    %v1268 = vand.u32 %v1247, 2147483648
    %v1269 = vsel %vm1267, %v1268, %v1266
    %v1270 = vrsqrt.pop %v1248
    %v1271 = vmul.f32 %v1248, %v1270
    %vm1272 = vcmp.eq.f32.partialorder %v1248, inf
    %v1273 = vsel %vm1272, %v1248, %v1271
    %vm1274 = vcmp.eq.f32.partialorder %v1248, 0.0
    %v1275 = vand.u32 %v1248, 2147483648
    %v1276 = vsel %vm1274, %v1275, %v1273
    %v1277 = vrsqrt.pop %v1249
    %v1278 = vmul.f32 %v1249, %v1277
    %vm1279 = vcmp.eq.f32.partialorder %v1249, inf
    %v1280 = vsel %vm1279, %v1249, %v1278
    %vm1281 = vcmp.eq.f32.partialorder %v1249, 0.0
    %v1282 = vand.u32 %v1249, 2147483648
    %v1283 = vsel %vm1281, %v1282, %v1280
    %v1284 = vrsqrt.pop %v1250
    %v1285 = vmul.f32 %v1250, %v1284
    %vm1286 = vcmp.eq.f32.partialorder %v1250, inf
    %v1287 = vsel %vm1286, %v1250, %v1285
    %vm1288 = vcmp.eq.f32.partialorder %v1250, 0.0
    %v1289 = vand.u32 %v1250, 2147483648
    %v1290 = vsel %vm1288, %v1289, %v1287
    %v1291 = vrsqrt.pop %v1251
    %v1292 = vmul.f32 %v1251, %v1291
    %vm1293 = vcmp.eq.f32.partialorder %v1251, inf
    %v1294 = vsel %vm1293, %v1251, %v1292
    %vm1295 = vcmp.eq.f32.partialorder %v1251, 0.0
    %v1296 = vand.u32 %v1251, 2147483648
    %v1297 = vsel %vm1295, %v1296, %v1294
    %v1298 = vrsqrt.pop %v1252
    %v1299 = vmul.f32 %v1252, %v1298
    %vm1300 = vcmp.eq.f32.partialorder %v1252, inf
    %v1301 = vsel %vm1300, %v1252, %v1299
    %vm1302 = vcmp.eq.f32.partialorder %v1252, 0.0
    %v1303 = vand.u32 %v1252, 2147483648
    %v1304 = vsel %vm1302, %v1303, %v1301
    %v1305 = vrsqrt.pop %v1253
    %v1306 = vmul.f32 %v1253, %v1305
    %vm1307 = vcmp.eq.f32.partialorder %v1253, inf
    %v1308 = vsel %vm1307, %v1253, %v1306
    %vm1309 = vcmp.eq.f32.partialorder %v1253, 0.0
    %v1310 = vand.u32 %v1253, 2147483648
    %v1311 = vsel %vm1309, %v1310, %v1308
    %v1312 = vrsqrt.pop %v1254
    %v1313 = vmul.f32 %v1254, %v1312
    %vm1314 = vcmp.eq.f32.partialorder %v1254, inf
    %v1315 = vsel %vm1314, %v1254, %v1313
    %vm1316 = vcmp.eq.f32.partialorder %v1254, 0.0
    %v1317 = vand.u32 %v1254, 2147483648
    %v1318 = vsel %vm1316, %v1317, %v1315
    %v1319 = vrsqrt.pop %v1255
    %v1320 = vmul.f32 %v1255, %v1319
    %vm1321 = vcmp.eq.f32.partialorder %v1255, inf
    %v1322 = vsel %vm1321, %v1255, %v1320
    %vm1323 = vcmp.eq.f32.partialorder %v1255, 0.0
    %v1324 = vand.u32 %v1255, 2147483648
    %v1325 = vsel %vm1323, %v1324, %v1322
    %v1326 = vrsqrt.pop %v1256
    %v1327 = vmul.f32 %v1256, %v1326
    %vm1328 = vcmp.eq.f32.partialorder %v1256, inf
    %v1329 = vsel %vm1328, %v1256, %v1327
    %vm1330 = vcmp.eq.f32.partialorder %v1256, 0.0
    %v1331 = vand.u32 %v1256, 2147483648
    %v1332 = vsel %vm1330, %v1331, %v1329
    %v1333 = vrsqrt.pop %v1257
    %v1334 = vmul.f32 %v1257, %v1333
    %vm1335 = vcmp.eq.f32.partialorder %v1257, inf
    %v1336 = vsel %vm1335, %v1257, %v1334
    %vm1337 = vcmp.eq.f32.partialorder %v1257, 0.0
    %v1338 = vand.u32 %v1257, 2147483648
    %v1339 = vsel %vm1337, %v1338, %v1336
    %v1340 = vrsqrt.pop %v1258
    %v1341 = vmul.f32 %v1258, %v1340
    %vm1342 = vcmp.eq.f32.partialorder %v1258, inf
    %v1343 = vsel %vm1342, %v1258, %v1341
    %vm1344 = vcmp.eq.f32.partialorder %v1258, 0.0
    %v1345 = vand.u32 %v1258, 2147483648
    %v1346 = vsel %vm1344, %v1345, %v1343
    %v1347 = vrsqrt.pop %v1259
    %v1348 = vmul.f32 %v1259, %v1347
    %vm1349 = vcmp.eq.f32.partialorder %v1259, inf
    %v1350 = vsel %vm1349, %v1259, %v1348
    %vm1351 = vcmp.eq.f32.partialorder %v1259, 0.0
    %v1352 = vand.u32 %v1259, 2147483648
    %v1353 = vsel %vm1351, %v1352, %v1350
    %v1354 = vrsqrt.pop %v1260
    %v1355 = vmul.f32 %v1260, %v1354
    %vm1356 = vcmp.eq.f32.partialorder %v1260, inf
    %v1357 = vsel %vm1356, %v1260, %v1355
    %vm1358 = vcmp.eq.f32.partialorder %v1260, 0.0
    %v1359 = vand.u32 %v1260, 2147483648
    %v1360 = vsel %vm1358, %v1359, %v1357
    %v1361 = vrsqrt.pop %v1261
    %v1362 = vmul.f32 %v1261, %v1361
    %vm1363 = vcmp.eq.f32.partialorder %v1261, inf
    %v1364 = vsel %vm1363, %v1261, %v1362
    %vm1365 = vcmp.eq.f32.partialorder %v1261, 0.0
    %v1366 = vand.u32 %v1261, 2147483648
    %v1367 = vsel %vm1365, %v1366, %v1364
    %v1368 = vrsqrt.pop %v1262
    %v1369 = vmul.f32 %v1262, %v1368
    %vm1370 = vcmp.eq.f32.partialorder %v1262, inf
    %v1371 = vsel %vm1370, %v1262, %v1369
    %vm1372 = vcmp.eq.f32.partialorder %v1262, 0.0
    %v1373 = vand.u32 %v1262, 2147483648
    %v1374 = vsel %vm1372, %v1373, %v1371
    %v1375 = vxor.u32 %v1269, 2147483648
    %v1376 = vxor.u32 %v1276, 2147483648
    %v1377 = vxor.u32 %v1283, 2147483648
    %v1378 = vxor.u32 %v1290, 2147483648
    %v1379 = vxor.u32 %v1297, 2147483648
    %v1380 = vxor.u32 %v1304, 2147483648
    %v1381 = vxor.u32 %v1311, 2147483648
    %v1382 = vxor.u32 %v1318, 2147483648
    %v1383 = vxor.u32 %v1325, 2147483648
    %v1384 = vxor.u32 %v1332, 2147483648
    %v1385 = vxor.u32 %v1339, 2147483648
    %v1386 = vxor.u32 %v1346, 2147483648
    %v1387 = vxor.u32 %v1353, 2147483648
    %v1388 = vxor.u32 %v1360, 2147483648
    %v1389 = vxor.u32 %v1367, 2147483648
    %v1390 = vxor.u32 %v1374, 2147483648
    %v1391 = vmul.f32 %v1375, 1.442695
    %v1392 = vpow.pop %v1391
    %v1393 = vmul.f32 %v1376, 1.442695
    %v1394 = vpow.pop %v1393
    %v1395 = vmul.f32 %v1377, 1.442695
    %v1396 = vpow.pop %v1395
    %v1397 = vmul.f32 %v1378, 1.442695
    %v1398 = vpow.pop %v1397
    %v1399 = vmul.f32 %v1379, 1.442695
    %v1400 = vpow.pop %v1399
    %v1401 = vmul.f32 %v1380, 1.442695
    %v1402 = vpow.pop %v1401
    %v1403 = vmul.f32 %v1381, 1.442695
    %v1404 = vpow.pop %v1403
    %v1405 = vmul.f32 %v1382, 1.442695
    %v1406 = vpow.pop %v1405
    %v1407 = vmul.f32 %v1383, 1.442695
    %v1408 = vpow.pop %v1407
    %v1409 = vmul.f32 %v1384, 1.442695
    %v1410 = vpow.pop %v1409
    %v1411 = vmul.f32 %v1385, 1.442695
    %v1412 = vpow.pop %v1411
    %v1413 = vmul.f32 %v1386, 1.442695
    %v1414 = vpow.pop %v1413
    %v1415 = vmul.f32 %v1387, 1.442695
    %v1416 = vpow.pop %v1415
    %v1417 = vmul.f32 %v1388, 1.442695
    %v1418 = vpow.pop %v1417
    %v1419 = vmul.f32 %v1389, 1.442695
    %v1420 = vpow.pop %v1419
    %v1421 = vmul.f32 %v1390, 1.442695
    %v1422 = vpow.pop %v1421
    %v1423 = vadd.f32 %v1392, 1.0
    %v1424 = vadd.f32 %v1394, 1.0
    %v1425 = vadd.f32 %v1396, 1.0
    %v1426 = vadd.f32 %v1398, 1.0
    %v1427 = vadd.f32 %v1400, 1.0
    %v1428 = vadd.f32 %v1402, 1.0
    %v1429 = vadd.f32 %v1404, 1.0
    %v1430 = vadd.f32 %v1406, 1.0
    %v1431 = vadd.f32 %v1408, 1.0
    %v1432 = vadd.f32 %v1410, 1.0
    %v1433 = vadd.f32 %v1412, 1.0
    %v1434 = vadd.f32 %v1414, 1.0
    %v1435 = vadd.f32 %v1416, 1.0
    %v1436 = vadd.f32 %v1418, 1.0
    %v1437 = vadd.f32 %v1420, 1.0
    %v1438 = vadd.f32 %v1422, 1.0
    %v1439 = vrcp.pop %v1423
    %v1440 = vmul.f32 1.0, %v1439
    %v1441 = vrcp.pop %v1424
    %v1442 = vmul.f32 1.0, %v1441
    %v1443 = vrcp.pop %v1425
    %v1444 = vmul.f32 1.0, %v1443
    %v1445 = vrcp.pop %v1426
    %v1446 = vmul.f32 1.0, %v1445
    %v1447 = vrcp.pop %v1427
    %v1448 = vmul.f32 1.0, %v1447
    %v1449 = vrcp.pop %v1428
    %v1450 = vmul.f32 1.0, %v1449
    %v1451 = vrcp.pop %v1429
    %v1452 = vmul.f32 1.0, %v1451
    %v1453 = vrcp.pop %v1430
    %v1454 = vmul.f32 1.0, %v1453
    %v1455 = vrcp.pop %v1431
    %v1456 = vmul.f32 1.0, %v1455
    %v1457 = vrcp.pop %v1432
    %v1458 = vmul.f32 1.0, %v1457
    %v1459 = vrcp.pop %v1433
    %v1460 = vmul.f32 1.0, %v1459
    %v1461 = vrcp.pop %v1434
    %v1462 = vmul.f32 1.0, %v1461
    %v1463 = vrcp.pop %v1435
    %v1464 = vmul.f32 1.0, %v1463
    %v1465 = vrcp.pop %v1436
    %v1466 = vmul.f32 1.0, %v1465
    %v1467 = vrcp.pop %v1437
    %v1468 = vmul.f32 1.0, %v1467
    %v1469 = vrcp.pop %v1438
    %v1470 = vmul.f32 1.0, %v1469
    %1487 = vrot.lane.b32.xlu0 %v1440, 4
    %v1488 = vpop.permute.xlu0 %1487
    %1489 = vrot.lane.b32.xlu0 %v1442, 4
    %v1490 = vpop.permute.xlu0 %1489
    %1491 = vrot.lane.b32.xlu0 %v1444, 4
    %v1492 = vpop.permute.xlu0 %1491
    %1493 = vrot.lane.b32.xlu0 %v1446, 4
    %v1494 = vpop.permute.xlu0 %1493
    %1495 = vrot.lane.b32.xlu0 %v1448, 4
    %v1496 = vpop.permute.xlu0 %1495
    %1497 = vrot.lane.b32.xlu0 %v1450, 4
    %v1498 = vpop.permute.xlu0 %1497
    %1499 = vrot.lane.b32.xlu0 %v1452, 4
    %v1500 = vpop.permute.xlu0 %1499
    %1501 = vrot.lane.b32.xlu0 %v1454, 4
    %v1502 = vpop.permute.xlu0 %1501
    %1503 = vrot.lane.b32.xlu0 %v1456, 4
    %v1504 = vpop.permute.xlu0 %1503
    %1505 = vrot.lane.b32.xlu0 %v1458, 4
    %v1506 = vpop.permute.xlu0 %1505
    %1507 = vrot.lane.b32.xlu0 %v1460, 4
    %v1508 = vpop.permute.xlu0 %1507
    %1509 = vrot.lane.b32.xlu0 %v1462, 4
    %v1510 = vpop.permute.xlu0 %1509
    %1511 = vrot.lane.b32.xlu0 %v1464, 4
    %v1512 = vpop.permute.xlu0 %1511
    %1513 = vrot.lane.b32.xlu0 %v1466, 4
    %v1514 = vpop.permute.xlu0 %1513
    %1515 = vrot.lane.b32.xlu0 %v1468, 4
    %v1516 = vpop.permute.xlu0 %1515
    %1517 = vrot.lane.b32.xlu0 %v1470, 4
    %v1518 = vpop.permute.xlu0 %1517
    %1535 = vrot.lane.b32.xlu0 %v1440, 8
    %v1536 = vpop.permute.xlu0 %1535
    %1537 = vrot.lane.b32.xlu0 %v1442, 8
    %v1538 = vpop.permute.xlu0 %1537
    %1539 = vrot.lane.b32.xlu0 %v1444, 8
    %v1540 = vpop.permute.xlu0 %1539
    %1541 = vrot.lane.b32.xlu0 %v1446, 8
    %v1542 = vpop.permute.xlu0 %1541
    %1543 = vrot.lane.b32.xlu0 %v1448, 8
    %v1544 = vpop.permute.xlu0 %1543
    %1545 = vrot.lane.b32.xlu0 %v1450, 8
    %v1546 = vpop.permute.xlu0 %1545
    %1547 = vrot.lane.b32.xlu0 %v1452, 8
    %v1548 = vpop.permute.xlu0 %1547
    %1549 = vrot.lane.b32.xlu0 %v1454, 8
    %v1550 = vpop.permute.xlu0 %1549
    %1551 = vrot.lane.b32.xlu0 %v1456, 8
    %v1552 = vpop.permute.xlu0 %1551
    %1553 = vrot.lane.b32.xlu0 %v1458, 8
    %v1554 = vpop.permute.xlu0 %1553
    %1555 = vrot.lane.b32.xlu0 %v1460, 8
    %v1556 = vpop.permute.xlu0 %1555
    %1557 = vrot.lane.b32.xlu0 %v1462, 8
    %v1558 = vpop.permute.xlu0 %1557
    %1559 = vrot.lane.b32.xlu0 %v1464, 8
    %v1560 = vpop.permute.xlu0 %1559
    %1561 = vrot.lane.b32.xlu0 %v1466, 8
    %v1562 = vpop.permute.xlu0 %1561
    %1563 = vrot.lane.b32.xlu0 %v1468, 8
    %v1564 = vpop.permute.xlu0 %1563
    %1565 = vrot.lane.b32.xlu0 %v1470, 8
    %v1566 = vpop.permute.xlu0 %1565
    %vm1583 = vcmask 31744
    %v1584 = vsel %vm1583, %v1440, %v1488
    %v1585 = vsel %vm1583, %v1442, %v1490
    %v1586 = vsel %vm1583, %v1444, %v1492
    %v1587 = vsel %vm1583, %v1446, %v1494
    %v1588 = vsel %vm1583, %v1448, %v1496
    %v1589 = vsel %vm1583, %v1450, %v1498
    %v1590 = vsel %vm1583, %v1452, %v1500
    %v1591 = vsel %vm1583, %v1454, %v1502
    %v1592 = vsel %vm1583, %v1456, %v1504
    %v1593 = vsel %vm1583, %v1458, %v1506
    %v1594 = vsel %vm1583, %v1460, %v1508
    %v1595 = vsel %vm1583, %v1462, %v1510
    %v1596 = vsel %vm1583, %v1464, %v1512
    %v1597 = vsel %vm1583, %v1466, %v1514
    %v1598 = vsel %vm1583, %v1468, %v1516
    %v1599 = vsel %vm1583, %v1470, %v1518
    %vm1600 = vcmask 64512
    %v1601 = vsel %vm1600, %v1584, %v1536
    %v1602 = vsel %vm1600, %v1585, %v1538
    %v1603 = vsel %vm1600, %v1586, %v1540
    %v1604 = vsel %vm1600, %v1587, %v1542
    %v1605 = vsel %vm1600, %v1588, %v1544
    %v1606 = vsel %vm1600, %v1589, %v1546
    %v1607 = vsel %vm1600, %v1590, %v1548
    %v1608 = vsel %vm1600, %v1591, %v1550
    %v1609 = vsel %vm1600, %v1592, %v1552
    %v1610 = vsel %vm1600, %v1593, %v1554
    %v1611 = vsel %vm1600, %v1594, %v1556
    %v1612 = vsel %vm1600, %v1595, %v1558
    %v1613 = vsel %vm1600, %v1596, %v1560
    %v1614 = vsel %vm1600, %v1597, %v1562
    %v1615 = vsel %vm1600, %v1598, %v1564
    %v1616 = vsel %vm1600, %v1599, %v1566
    %v1617 = vmul.f32 %v1009, %v1601
    %v1618 = vmul.f32 %v1014, %v1602
    %v1619 = vmul.f32 %v1019, %v1603
    %v1620 = vmul.f32 %v1024, %v1604
    %v1621 = vmul.f32 %v1029, %v1605
    %v1622 = vmul.f32 %v1034, %v1606
    %v1623 = vmul.f32 %v1039, %v1607
    %v1624 = vmul.f32 %v1044, %v1608
    %v1625 = vmul.f32 %v1049, %v1609
    %v1626 = vmul.f32 %v1054, %v1610
    %v1627 = vmul.f32 %v1059, %v1611
    %v1628 = vmul.f32 %v1064, %v1612
    %v1629 = vmul.f32 %v1069, %v1613
    %v1630 = vmul.f32 %v1074, %v1614
    %v1631 = vmul.f32 %v1079, %v1615
    %v1632 = vmul.f32 %v1084, %v1616
    %v1633 = vmax.f32 %v813, 0.0
    %v1634 = vmax.f32 %v818, 0.0
    %v1635 = vmax.f32 %v823, 0.0
    %v1636 = vmax.f32 %v828, 0.0
    %v1637 = vmax.f32 %v833, 0.0
    %v1638 = vmax.f32 %v838, 0.0
    %v1639 = vmax.f32 %v843, 0.0
    %v1640 = vmax.f32 %v848, 0.0
    %v1641 = vmax.f32 %v853, 0.0
    %v1642 = vmax.f32 %v858, 0.0
    %v1643 = vmax.f32 %v863, 0.0
    %v1644 = vmax.f32 %v868, 0.0
    %v1645 = vmax.f32 %v873, 0.0
    %v1646 = vmax.f32 %v878, 0.0
    %v1647 = vmax.f32 %v883, 0.0
    %v1648 = vmax.f32 %v888, 0.0
    %v1649 = vld [vmem:[%s2 + $0x68] sm:$0xff]
    %v1650 = vld [vmem:[%s2 + $0x70] sm:$0xf]
    %v1651 = vld [vmem:[%s2 + $0x74] sm:$0xff]
    %v1652 = vld [vmem:[%s2 + $0x7c] sm:$0xff]
    %v1653 = vld [vmem:[%s2 + $0x84] sm:$0xf]
    %v1654 = vld [vmem:[%s2 + $0x88] sm:$0x1]
    %v1655 = vld [vmem:[%s2 + $0x89] sm:$0xff]
    %v1656 = vld [vmem:[%s2 + $0x91] sm:$0xf]
    %vm1657 = vcmask 97280
    %v1659 = vsel %vm1657, %v1617, 0
    %v1662 = vsel %vm1657, %v1618, 0
    %v1665 = vsel %vm1657, %v1619, 0
    %v1668 = vsel %vm1657, %v1620, 0
    %v1671 = vsel %vm1657, %v1621, 0
    %v1674 = vsel %vm1657, %v1622, 0
    %v1677 = vsel %vm1657, %v1623, 0
    %v1680 = vsel %vm1657, %v1624, 0
    %v1683 = vsel %vm1657, %v1625, 0
    %v1686 = vsel %vm1657, %v1626, 0
    %v1689 = vsel %vm1657, %v1627, 0
    %v1692 = vsel %vm1657, %v1628, 0
    %v1695 = vsel %vm1657, %v1629, 0
    %v1698 = vsel %vm1657, %v1630, 0
    %v1701 = vsel %vm1657, %v1631, 0
    %v1704 = vsel %vm1657, %v1632, 0
    %vm1706 = vcmask 1043456
    %v1708 = vsel %vm1706, %v1650, 0
    %1710 = vmatprep.subr.mxu0 0.0
    %1711 = vmatpush1.msra.mxu0 %v1649
    %1712 = vmatprep.subr.mxu0 0.0
    %1713 = vmatpush1.msra.mxu0 %v1708
    %1714 = vmatprep.subr.mxu0 0.0
    %1715 = vmatpush1.msra.mxu0 0.0
    %1716 = vmatprep.subr.mxu0 0.0
    %1717 = vmatpush1.msra.mxu0 0.0
    %1718 = vmatprep.subr.mxu0 0.0
    %1719 = vmatpush1.msra.mxu0 0.0
    %1720 = vmatprep.subr.mxu0 0.0
    %1721 = vmatpush1.msra.mxu0 0.0
    %1722 = vmatprep.subr.mxu0 0.0
    %1723 = vmatpush1.msra.mxu0 0.0
    %1724 = vmatprep.subr.mxu0 0.0
    %1725 = vmatpush1.msra.mxu0 0.0
    %1726 = vmatprep.subr.mxu0 0.0
    %1727 = vmatpush1.msra.mxu0 0.0
    %1728 = vmatprep.subr.mxu0 0.0
    %1729 = vmatpush1.msra.mxu0 0.0
    %1730 = vmatprep.subr.mxu0 0.0
    %1731 = vmatpush1.msra.mxu0 0.0
    %1732 = vmatprep.subr.mxu0 0.0
    %1733 = vmatpush1.msra.mxu0 0.0
    %1734 = vmatprep.subr.mxu0 0.0
    %1735 = vmatpush1.msra.mxu0 0.0
    %1736 = vmatprep.subr.mxu0 0.0
    %1737 = vmatpush1.msra.mxu0 0.0
    %1738 = vmatprep.subr.mxu0 0.0
    %1739 = vmatpush1.msra.mxu0 0.0
    %1740 = vmatprep.subr.mxu0 0.0
    %1741 = vmatpush1.msra.mxu0 0.0
    %1742 = vmatprep.subr.mxu0 0.0
    %1743 = vmatpush1.msra.mxu0 0.0
    %1744 = vmatprep.subr.mxu0 0.0
    %1745 = vmatpush1.msra.mxu0 0.0
    %1746 = vmatprep.subr.mxu0 0.0
    %1747 = vmatpush1.msra.mxu0 0.0
    %1748 = vmatprep.subr.mxu0 0.0
    %1749 = vmatpush1.msra.mxu0 0.0
    %1750 = vmatprep.subr.mxu0 0.0
    %1751 = vmatpush1.msra.mxu0 0.0
    %1752 = vmatprep.subr.mxu0 0.0
    %1753 = vmatpush1.msra.mxu0 0.0
    %1754 = vmatprep.subr.mxu0 0.0
    %1755 = vmatpush1.msra.mxu0 0.0
    %1756 = vmatprep.subr.mxu0 0.0
    %1757 = vmatpush1.msra.mxu0 0.0
    %1758 = vmatprep.subr.mxu0 0.0
    %1759 = vmatpush1.msra.mxu0 0.0
    %1760 = vmatprep.subr.mxu0 0.0
    %1761 = vmatpush1.msra.mxu0 0.0
    %1762 = vmatprep.subr.mxu0 0.0
    %1763 = vmatpush1.msra.mxu0 0.0
    %1764 = vmatprep.subr.mxu0 0.0
    %1765 = vmatpush1.msra.mxu0 0.0
    %1766 = vmatprep.subr.mxu0 0.0
    %1767 = vmatpush1.msra.mxu0 0.0
    %1768 = vmatprep.subr.mxu0 0.0
    %1769 = vmatpush1.msra.mxu0 0.0
    %1770 = vmatprep.subr.mxu0 0.0
    %1771 = vmatpush1.msra.mxu0 0.0
    %1772 = vmatprep.subr.mxu0 0.0
    %1773 = vmatpush1.msra.mxu0 0.0
    %1774 = vmatprep.mubr.f32.mxu0 0.0
    %1775 = vmatmul.mubr.f32.gmra.mrb[0].mxu0 %v1659
    %v1776 = vpop.f32.mrb[0].mxu0
    %v1777 = vadd.f32 0.0, %v1776
    %v1778 = vpop.f32.mrb[0].mxu0
    %1779 = vmatprep.mubr.f32.mxu0 0.0
    %1780 = vmatmul.mubr.f32.gmra.mrb[0].mxu0 %v1662
    %v1781 = vpop.f32.mrb[0].mxu0
    %v1782 = vadd.f32 0.0, %v1781
    %v1783 = vpop.f32.mrb[0].mxu0
    %1784 = vmatprep.mubr.f32.mxu0 0.0
    %1785 = vmatmul.mubr.f32.gmra.mrb[0].mxu0 %v1665
    %v1786 = vpop.f32.mrb[0].mxu0
    %v1787 = vadd.f32 0.0, %v1786
    %v1788 = vpop.f32.mrb[0].mxu0
    %1789 = vmatprep.mubr.f32.mxu0 0.0
    %1790 = vmatmul.mubr.f32.gmra.mrb[0].mxu0 %v1668
    %v1791 = vpop.f32.mrb[0].mxu0
    %v1792 = vadd.f32 0.0, %v1791
    %v1793 = vpop.f32.mrb[0].mxu0
    %1794 = vmatprep.mubr.f32.mxu0 0.0
    %1795 = vmatmul.mubr.f32.gmra.mrb[0].mxu0 %v1671
    %v1796 = vpop.f32.mrb[0].mxu0
    %v1797 = vadd.f32 0.0, %v1796
    %v1798 = vpop.f32.mrb[0].mxu0
    %1799 = vmatprep.mubr.f32.mxu0 0.0
    %1800 = vmatmul.mubr.f32.gmra.mrb[0].mxu0 %v1674
    %v1801 = vpop.f32.mrb[0].mxu0
    %v1802 = vadd.f32 0.0, %v1801
    %v1803 = vpop.f32.mrb[0].mxu0
    %1804 = vmatprep.mubr.f32.mxu0 0.0
    %1805 = vmatmul.mubr.f32.gmra.mrb[0].mxu0 %v1677
    %v1806 = vpop.f32.mrb[0].mxu0
    %v1807 = vadd.f32 0.0, %v1806
    %v1808 = vpop.f32.mrb[0].mxu0
    %1809 = vmatprep.mubr.f32.mxu0 0.0
    %1810 = vmatmul.mubr.f32.gmra.mrb[0].mxu0 %v1680
    %v1811 = vpop.f32.mrb[0].mxu0
    %v1812 = vadd.f32 0.0, %v1811
    %v1813 = vpop.f32.mrb[0].mxu0
    %1814 = vmatprep.mubr.f32.mxu0 0.0
    %1815 = vmatmul.mubr.f32.gmra.mrb[0].mxu0 %v1683
    %v1816 = vpop.f32.mrb[0].mxu0
    %v1817 = vadd.f32 0.0, %v1816
    %v1818 = vpop.f32.mrb[0].mxu0
    %1819 = vmatprep.mubr.f32.mxu0 0.0
    %1820 = vmatmul.mubr.f32.gmra.mrb[0].mxu0 %v1686
    %v1821 = vpop.f32.mrb[0].mxu0
    %v1822 = vadd.f32 0.0, %v1821
    %v1823 = vpop.f32.mrb[0].mxu0
    %1824 = vmatprep.mubr.f32.mxu0 0.0
    %1825 = vmatmul.mubr.f32.gmra.mrb[0].mxu0 %v1689
    %v1826 = vpop.f32.mrb[0].mxu0
    %v1827 = vadd.f32 0.0, %v1826
    %v1828 = vpop.f32.mrb[0].mxu0
    %1829 = vmatprep.mubr.f32.mxu0 0.0
    %1830 = vmatmul.mubr.f32.gmra.mrb[0].mxu0 %v1692
    %v1831 = vpop.f32.mrb[0].mxu0
    %v1832 = vadd.f32 0.0, %v1831
    %v1833 = vpop.f32.mrb[0].mxu0
    %1834 = vmatprep.mubr.f32.mxu0 0.0
    %1835 = vmatmul.mubr.f32.gmra.mrb[0].mxu0 %v1695
    %v1836 = vpop.f32.mrb[0].mxu0
    %v1837 = vadd.f32 0.0, %v1836
    %v1838 = vpop.f32.mrb[0].mxu0
    %1839 = vmatprep.mubr.f32.mxu0 0.0
    %1840 = vmatmul.mubr.f32.gmra.mrb[0].mxu0 %v1698
    %v1841 = vpop.f32.mrb[0].mxu0
    %v1842 = vadd.f32 0.0, %v1841
    %v1843 = vpop.f32.mrb[0].mxu0
    %1844 = vmatprep.mubr.f32.mxu0 0.0
    %1845 = vmatmul.mubr.f32.gmra.mrb[0].mxu0 %v1701
    %v1846 = vpop.f32.mrb[0].mxu0
    %v1847 = vadd.f32 0.0, %v1846
    %v1848 = vpop.f32.mrb[0].mxu0
    %1849 = vmatprep.mubr.f32.mxu0 0.0
    %1850 = vmatmul.mubr.f32.gmra.mrb[0].mxu0 %v1704
    %v1851 = vpop.f32.mrb[0].mxu0
    %v1852 = vadd.f32 0.0, %v1851
    %v1853 = vpop.f32.mrb[0].mxu0
    %1854 = vdwg.mxu0
    %v1855 = vmul.f32 %v1777, %v1777
    %v1856 = vmul.f32 %v1782, %v1782
    %v1857 = vmul.f32 %v1787, %v1787
    %v1858 = vmul.f32 %v1792, %v1792
    %v1859 = vmul.f32 %v1797, %v1797
    %v1860 = vmul.f32 %v1802, %v1802
    %v1861 = vmul.f32 %v1807, %v1807
    %v1862 = vmul.f32 %v1812, %v1812
    %v1863 = vmul.f32 %v1817, %v1817
    %v1864 = vmul.f32 %v1822, %v1822
    %v1865 = vmul.f32 %v1827, %v1827
    %v1866 = vmul.f32 %v1832, %v1832
    %v1867 = vmul.f32 %v1837, %v1837
    %v1868 = vmul.f32 %v1842, %v1842
    %v1869 = vmul.f32 %v1847, %v1847
    %v1870 = vmul.f32 %v1852, %v1852
    %1887 = vrot.lane.b32.xlu0 %v1855, 124
    %v1888 = vpop.permute.xlu0 %1887
    %1889 = vrot.lane.b32.xlu0 %v1856, 124
    %v1890 = vpop.permute.xlu0 %1889
    %1891 = vrot.lane.b32.xlu0 %v1857, 124
    %v1892 = vpop.permute.xlu0 %1891
    %1893 = vrot.lane.b32.xlu0 %v1858, 124
    %v1894 = vpop.permute.xlu0 %1893
    %1895 = vrot.lane.b32.xlu0 %v1859, 124
    %v1896 = vpop.permute.xlu0 %1895
    %1897 = vrot.lane.b32.xlu0 %v1860, 124
    %v1898 = vpop.permute.xlu0 %1897
    %1899 = vrot.lane.b32.xlu0 %v1861, 124
    %v1900 = vpop.permute.xlu0 %1899
    %1901 = vrot.lane.b32.xlu0 %v1862, 124
    %v1902 = vpop.permute.xlu0 %1901
    %1903 = vrot.lane.b32.xlu0 %v1863, 124
    %v1904 = vpop.permute.xlu0 %1903
    %1905 = vrot.lane.b32.xlu0 %v1864, 124
    %v1906 = vpop.permute.xlu0 %1905
    %1907 = vrot.lane.b32.xlu0 %v1865, 124
    %v1908 = vpop.permute.xlu0 %1907
    %1909 = vrot.lane.b32.xlu0 %v1866, 124
    %v1910 = vpop.permute.xlu0 %1909
    %1911 = vrot.lane.b32.xlu0 %v1867, 124
    %v1912 = vpop.permute.xlu0 %1911
    %1913 = vrot.lane.b32.xlu0 %v1868, 124
    %v1914 = vpop.permute.xlu0 %1913
    %1915 = vrot.lane.b32.xlu0 %v1869, 124
    %v1916 = vpop.permute.xlu0 %1915
    %1917 = vrot.lane.b32.xlu0 %v1870, 124
    %v1918 = vpop.permute.xlu0 %1917
    %v1935 = vadd.f32 %v1855, %v1888
    %v1936 = vadd.f32 %v1856, %v1890
    %v1937 = vadd.f32 %v1857, %v1892
    %v1938 = vadd.f32 %v1858, %v1894
    %v1939 = vadd.f32 %v1859, %v1896
    %v1940 = vadd.f32 %v1860, %v1898
    %v1941 = vadd.f32 %v1861, %v1900
    %v1942 = vadd.f32 %v1862, %v1902
    %v1943 = vadd.f32 %v1863, %v1904
    %v1944 = vadd.f32 %v1864, %v1906
    %v1945 = vadd.f32 %v1865, %v1908
    %v1946 = vadd.f32 %v1866, %v1910
    %v1947 = vadd.f32 %v1867, %v1912
    %v1948 = vadd.f32 %v1868, %v1914
    %v1949 = vadd.f32 %v1869, %v1916
    %v1950 = vadd.f32 %v1870, %v1918
    %1951 = vrot.lane.b32.xlu0 %v1855, 120
    %v1952 = vpop.permute.xlu0 %1951
    %1953 = vrot.lane.b32.xlu0 %v1856, 120
    %v1954 = vpop.permute.xlu0 %1953
    %1955 = vrot.lane.b32.xlu0 %v1857, 120
    %v1956 = vpop.permute.xlu0 %1955
    %1957 = vrot.lane.b32.xlu0 %v1858, 120
    %v1958 = vpop.permute.xlu0 %1957
    %1959 = vrot.lane.b32.xlu0 %v1859, 120
    %v1960 = vpop.permute.xlu0 %1959
    %1961 = vrot.lane.b32.xlu0 %v1860, 120
    %v1962 = vpop.permute.xlu0 %1961
    %1963 = vrot.lane.b32.xlu0 %v1861, 120
    %v1964 = vpop.permute.xlu0 %1963
    %1965 = vrot.lane.b32.xlu0 %v1862, 120
    %v1966 = vpop.permute.xlu0 %1965
    %1967 = vrot.lane.b32.xlu0 %v1863, 120
    %v1968 = vpop.permute.xlu0 %1967
    %1969 = vrot.lane.b32.xlu0 %v1864, 120
    %v1970 = vpop.permute.xlu0 %1969
    %1971 = vrot.lane.b32.xlu0 %v1865, 120
    %v1972 = vpop.permute.xlu0 %1971
    %1973 = vrot.lane.b32.xlu0 %v1866, 120
    %v1974 = vpop.permute.xlu0 %1973
    %1975 = vrot.lane.b32.xlu0 %v1867, 120
    %v1976 = vpop.permute.xlu0 %1975
    %1977 = vrot.lane.b32.xlu0 %v1868, 120
    %v1978 = vpop.permute.xlu0 %1977
    %1979 = vrot.lane.b32.xlu0 %v1869, 120
    %v1980 = vpop.permute.xlu0 %1979
    %1981 = vrot.lane.b32.xlu0 %v1870, 120
    %v1982 = vpop.permute.xlu0 %1981
    %v1999 = vadd.f32 %v1935, %v1952
    %v2000 = vadd.f32 %v1936, %v1954
    %v2001 = vadd.f32 %v1937, %v1956
    %v2002 = vadd.f32 %v1938, %v1958
    %v2003 = vadd.f32 %v1939, %v1960
    %v2004 = vadd.f32 %v1940, %v1962
    %v2005 = vadd.f32 %v1941, %v1964
    %v2006 = vadd.f32 %v1942, %v1966
    %v2007 = vadd.f32 %v1943, %v1968
    %v2008 = vadd.f32 %v1944, %v1970
    %v2009 = vadd.f32 %v1945, %v1972
    %v2010 = vadd.f32 %v1946, %v1974
    %v2011 = vadd.f32 %v1947, %v1976
    %v2012 = vadd.f32 %v1948, %v1978
    %v2013 = vadd.f32 %v1949, %v1980
    %v2014 = vadd.f32 %v1950, %v1982
    %v2015 = vmax.f32 %v1999, 1e-08
    %v2016 = vmax.f32 %v2000, 1e-08
    %v2017 = vmax.f32 %v2001, 1e-08
    %v2018 = vmax.f32 %v2002, 1e-08
    %v2019 = vmax.f32 %v2003, 1e-08
    %v2020 = vmax.f32 %v2004, 1e-08
    %v2021 = vmax.f32 %v2005, 1e-08
    %v2022 = vmax.f32 %v2006, 1e-08
    %v2023 = vmax.f32 %v2007, 1e-08
    %v2024 = vmax.f32 %v2008, 1e-08
    %v2025 = vmax.f32 %v2009, 1e-08
    %v2026 = vmax.f32 %v2010, 1e-08
    %v2027 = vmax.f32 %v2011, 1e-08
    %v2028 = vmax.f32 %v2012, 1e-08
    %v2029 = vmax.f32 %v2013, 1e-08
    %v2030 = vmax.f32 %v2014, 1e-08
    %v2031 = vrsqrt.pop %v2015
    %v2032 = vmul.f32 %v2015, %v2031
    %vm2033 = vcmp.eq.f32.partialorder %v2015, inf
    %v2034 = vsel %vm2033, %v2015, %v2032
    %vm2035 = vcmp.eq.f32.partialorder %v2015, 0.0
    %v2036 = vand.u32 %v2015, 2147483648
    %v2037 = vsel %vm2035, %v2036, %v2034
    %v2038 = vrsqrt.pop %v2016
    %v2039 = vmul.f32 %v2016, %v2038
    %vm2040 = vcmp.eq.f32.partialorder %v2016, inf
    %v2041 = vsel %vm2040, %v2016, %v2039
    %vm2042 = vcmp.eq.f32.partialorder %v2016, 0.0
    %v2043 = vand.u32 %v2016, 2147483648
    %v2044 = vsel %vm2042, %v2043, %v2041
    %v2045 = vrsqrt.pop %v2017
    %v2046 = vmul.f32 %v2017, %v2045
    %vm2047 = vcmp.eq.f32.partialorder %v2017, inf
    %v2048 = vsel %vm2047, %v2017, %v2046
    %vm2049 = vcmp.eq.f32.partialorder %v2017, 0.0
    %v2050 = vand.u32 %v2017, 2147483648
    %v2051 = vsel %vm2049, %v2050, %v2048
    %v2052 = vrsqrt.pop %v2018
    %v2053 = vmul.f32 %v2018, %v2052
    %vm2054 = vcmp.eq.f32.partialorder %v2018, inf
    %v2055 = vsel %vm2054, %v2018, %v2053
    %vm2056 = vcmp.eq.f32.partialorder %v2018, 0.0
    %v2057 = vand.u32 %v2018, 2147483648
    %v2058 = vsel %vm2056, %v2057, %v2055
    %v2059 = vrsqrt.pop %v2019
    %v2060 = vmul.f32 %v2019, %v2059
    %vm2061 = vcmp.eq.f32.partialorder %v2019, inf
    %v2062 = vsel %vm2061, %v2019, %v2060
    %vm2063 = vcmp.eq.f32.partialorder %v2019, 0.0
    %v2064 = vand.u32 %v2019, 2147483648
    %v2065 = vsel %vm2063, %v2064, %v2062
    %v2066 = vrsqrt.pop %v2020
    %v2067 = vmul.f32 %v2020, %v2066
    %vm2068 = vcmp.eq.f32.partialorder %v2020, inf
    %v2069 = vsel %vm2068, %v2020, %v2067
    %vm2070 = vcmp.eq.f32.partialorder %v2020, 0.0
    %v2071 = vand.u32 %v2020, 2147483648
    %v2072 = vsel %vm2070, %v2071, %v2069
    %v2073 = vrsqrt.pop %v2021
    %v2074 = vmul.f32 %v2021, %v2073
    %vm2075 = vcmp.eq.f32.partialorder %v2021, inf
    %v2076 = vsel %vm2075, %v2021, %v2074
    %vm2077 = vcmp.eq.f32.partialorder %v2021, 0.0
    %v2078 = vand.u32 %v2021, 2147483648
    %v2079 = vsel %vm2077, %v2078, %v2076
    %v2080 = vrsqrt.pop %v2022
    %v2081 = vmul.f32 %v2022, %v2080
    %vm2082 = vcmp.eq.f32.partialorder %v2022, inf
    %v2083 = vsel %vm2082, %v2022, %v2081
    %vm2084 = vcmp.eq.f32.partialorder %v2022, 0.0
    %v2085 = vand.u32 %v2022, 2147483648
    %v2086 = vsel %vm2084, %v2085, %v2083
    %v2087 = vrsqrt.pop %v2023
    %v2088 = vmul.f32 %v2023, %v2087
    %vm2089 = vcmp.eq.f32.partialorder %v2023, inf
    %v2090 = vsel %vm2089, %v2023, %v2088
    %vm2091 = vcmp.eq.f32.partialorder %v2023, 0.0
    %v2092 = vand.u32 %v2023, 2147483648
    %v2093 = vsel %vm2091, %v2092, %v2090
    %v2094 = vrsqrt.pop %v2024
    %v2095 = vmul.f32 %v2024, %v2094
    %vm2096 = vcmp.eq.f32.partialorder %v2024, inf
    %v2097 = vsel %vm2096, %v2024, %v2095
    %vm2098 = vcmp.eq.f32.partialorder %v2024, 0.0
    %v2099 = vand.u32 %v2024, 2147483648
    %v2100 = vsel %vm2098, %v2099, %v2097
    %v2101 = vrsqrt.pop %v2025
    %v2102 = vmul.f32 %v2025, %v2101
    %vm2103 = vcmp.eq.f32.partialorder %v2025, inf
    %v2104 = vsel %vm2103, %v2025, %v2102
    %vm2105 = vcmp.eq.f32.partialorder %v2025, 0.0
    %v2106 = vand.u32 %v2025, 2147483648
    %v2107 = vsel %vm2105, %v2106, %v2104
    %v2108 = vrsqrt.pop %v2026
    %v2109 = vmul.f32 %v2026, %v2108
    %vm2110 = vcmp.eq.f32.partialorder %v2026, inf
    %v2111 = vsel %vm2110, %v2026, %v2109
    %vm2112 = vcmp.eq.f32.partialorder %v2026, 0.0
    %v2113 = vand.u32 %v2026, 2147483648
    %v2114 = vsel %vm2112, %v2113, %v2111
    %v2115 = vrsqrt.pop %v2027
    %v2116 = vmul.f32 %v2027, %v2115
    %vm2117 = vcmp.eq.f32.partialorder %v2027, inf
    %v2118 = vsel %vm2117, %v2027, %v2116
    %vm2119 = vcmp.eq.f32.partialorder %v2027, 0.0
    %v2120 = vand.u32 %v2027, 2147483648
    %v2121 = vsel %vm2119, %v2120, %v2118
    %v2122 = vrsqrt.pop %v2028
    %v2123 = vmul.f32 %v2028, %v2122
    %vm2124 = vcmp.eq.f32.partialorder %v2028, inf
    %v2125 = vsel %vm2124, %v2028, %v2123
    %vm2126 = vcmp.eq.f32.partialorder %v2028, 0.0
    %v2127 = vand.u32 %v2028, 2147483648
    %v2128 = vsel %vm2126, %v2127, %v2125
    %v2129 = vrsqrt.pop %v2029
    %v2130 = vmul.f32 %v2029, %v2129
    %vm2131 = vcmp.eq.f32.partialorder %v2029, inf
    %v2132 = vsel %vm2131, %v2029, %v2130
    %vm2133 = vcmp.eq.f32.partialorder %v2029, 0.0
    %v2134 = vand.u32 %v2029, 2147483648
    %v2135 = vsel %vm2133, %v2134, %v2132
    %v2136 = vrsqrt.pop %v2030
    %v2137 = vmul.f32 %v2030, %v2136
    %vm2138 = vcmp.eq.f32.partialorder %v2030, inf
    %v2139 = vsel %vm2138, %v2030, %v2137
    %vm2140 = vcmp.eq.f32.partialorder %v2030, 0.0
    %v2141 = vand.u32 %v2030, 2147483648
    %v2142 = vsel %vm2140, %v2141, %v2139
    %2159 = vrot.lane.b32.xlu0 %v2037, 16
    %v2160 = vpop.permute.xlu0 %2159
    %2161 = vrot.lane.b32.xlu0 %v2044, 16
    %v2162 = vpop.permute.xlu0 %2161
    %2163 = vrot.lane.b32.xlu0 %v2051, 16
    %v2164 = vpop.permute.xlu0 %2163
    %2165 = vrot.lane.b32.xlu0 %v2058, 16
    %v2166 = vpop.permute.xlu0 %2165
    %2167 = vrot.lane.b32.xlu0 %v2065, 16
    %v2168 = vpop.permute.xlu0 %2167
    %2169 = vrot.lane.b32.xlu0 %v2072, 16
    %v2170 = vpop.permute.xlu0 %2169
    %2171 = vrot.lane.b32.xlu0 %v2079, 16
    %v2172 = vpop.permute.xlu0 %2171
    %2173 = vrot.lane.b32.xlu0 %v2086, 16
    %v2174 = vpop.permute.xlu0 %2173
    %2175 = vrot.lane.b32.xlu0 %v2093, 16
    %v2176 = vpop.permute.xlu0 %2175
    %2177 = vrot.lane.b32.xlu0 %v2100, 16
    %v2178 = vpop.permute.xlu0 %2177
    %2179 = vrot.lane.b32.xlu0 %v2107, 16
    %v2180 = vpop.permute.xlu0 %2179
    %2181 = vrot.lane.b32.xlu0 %v2114, 16
    %v2182 = vpop.permute.xlu0 %2181
    %2183 = vrot.lane.b32.xlu0 %v2121, 16
    %v2184 = vpop.permute.xlu0 %2183
    %2185 = vrot.lane.b32.xlu0 %v2128, 16
    %v2186 = vpop.permute.xlu0 %2185
    %2187 = vrot.lane.b32.xlu0 %v2135, 16
    %v2188 = vpop.permute.xlu0 %2187
    %2189 = vrot.lane.b32.xlu0 %v2142, 16
    %v2190 = vpop.permute.xlu0 %2189
    %vm2207 = vcmask 130048
    %v2208 = vsel %vm2207, %v1633, %v2160
    %v2209 = vsel %vm2207, %v1634, %v2162
    %v2210 = vsel %vm2207, %v1635, %v2164
    %v2211 = vsel %vm2207, %v1636, %v2166
    %v2212 = vsel %vm2207, %v1637, %v2168
    %v2213 = vsel %vm2207, %v1638, %v2170
    %v2214 = vsel %vm2207, %v1639, %v2172
    %v2215 = vsel %vm2207, %v1640, %v2174
    %v2216 = vsel %vm2207, %v1641, %v2176
    %v2217 = vsel %vm2207, %v1642, %v2178
    %v2218 = vsel %vm2207, %v1643, %v2180
    %v2219 = vsel %vm2207, %v1644, %v2182
    %v2220 = vsel %vm2207, %v1645, %v2184
    %v2221 = vsel %vm2207, %v1646, %v2186
    %v2222 = vsel %vm2207, %v1647, %v2188
    %v2223 = vsel %vm2207, %v1648, %v2190
    %v2224 = vlaneseq
    %v2225 = vshrl.u32 %v2224, 7
    %v2226 = vsub.s32 0, %v2225
    %v2227 = vrot.slane %v1654, %v2226
    %vm2228 = vcmask 162816
    %v2230 = vsel %vm2228, %v2208, 0
    %v2233 = vsel %vm2228, %v2209, 0
    %v2236 = vsel %vm2228, %v2210, 0
    %v2239 = vsel %vm2228, %v2211, 0
    %v2242 = vsel %vm2228, %v2212, 0
    %v2245 = vsel %vm2228, %v2213, 0
    %v2248 = vsel %vm2228, %v2214, 0
    %v2251 = vsel %vm2228, %v2215, 0
    %v2254 = vsel %vm2228, %v2216, 0
    %v2257 = vsel %vm2228, %v2217, 0
    %v2260 = vsel %vm2228, %v2218, 0
    %v2263 = vsel %vm2228, %v2219, 0
    %v2266 = vsel %vm2228, %v2220, 0
    %v2269 = vsel %vm2228, %v2221, 0
    %v2272 = vsel %vm2228, %v2222, 0
    %v2275 = vsel %vm2228, %v2223, 0
    %v2278 = vsel %vm1706, %v1653, 0
    %2280 = vmatprep.subr.mxu0 0.0
    %2281 = vmatpush1.msra.mxu0 %v1651
    %2282 = vmatprep.subr.mxu0 0.0
    %2283 = vmatpush1.msra.mxu0 %v1652
    %2284 = vmatprep.subr.mxu0 0.0
    %2285 = vmatpush1.msra.mxu0 %v2278
    %2286 = vmatprep.subr.mxu0 0.0
    %2287 = vmatpush1.msra.mxu0 0.0
    %2288 = vmatprep.subr.mxu0 0.0
    %2289 = vmatpush1.msra.mxu0 0.0
    %2290 = vmatprep.subr.mxu0 0.0
    %2291 = vmatpush1.msra.mxu0 0.0
    %2292 = vmatprep.subr.mxu0 0.0
    %2293 = vmatpush1.msra.mxu0 0.0
    %2294 = vmatprep.subr.mxu0 0.0
    %2295 = vmatpush1.msra.mxu0 0.0
    %2296 = vmatprep.subr.mxu0 0.0
    %2297 = vmatpush1.msra.mxu0 0.0
    %2298 = vmatprep.subr.mxu0 0.0
    %2299 = vmatpush1.msra.mxu0 0.0
    %2300 = vmatprep.subr.mxu0 0.0
    %2301 = vmatpush1.msra.mxu0 0.0
    %2302 = vmatprep.subr.mxu0 0.0
    %2303 = vmatpush1.msra.mxu0 0.0
    %2304 = vmatprep.subr.mxu0 0.0
    %2305 = vmatpush1.msra.mxu0 0.0
    %2306 = vmatprep.subr.mxu0 0.0
    %2307 = vmatpush1.msra.mxu0 0.0
    %2308 = vmatprep.subr.mxu0 0.0
    %2309 = vmatpush1.msra.mxu0 0.0
    %2310 = vmatprep.subr.mxu0 0.0
    %2311 = vmatpush1.msra.mxu0 0.0
    %2312 = vmatprep.subr.mxu0 0.0
    %2313 = vmatpush1.msra.mxu0 0.0
    %2314 = vmatprep.subr.mxu0 0.0
    %2315 = vmatpush1.msra.mxu0 0.0
    %2316 = vmatprep.subr.mxu0 0.0
    %2317 = vmatpush1.msra.mxu0 0.0
    %2318 = vmatprep.subr.mxu0 0.0
    %2319 = vmatpush1.msra.mxu0 0.0
    %2320 = vmatprep.subr.mxu0 0.0
    %2321 = vmatpush1.msra.mxu0 0.0
    %2322 = vmatprep.subr.mxu0 0.0
    %2323 = vmatpush1.msra.mxu0 0.0
    %2324 = vmatprep.subr.mxu0 0.0
    %2325 = vmatpush1.msra.mxu0 0.0
    %2326 = vmatprep.subr.mxu0 0.0
    %2327 = vmatpush1.msra.mxu0 0.0
    %2328 = vmatprep.subr.mxu0 0.0
    %2329 = vmatpush1.msra.mxu0 0.0
    %2330 = vmatprep.subr.mxu0 0.0
    %2331 = vmatpush1.msra.mxu0 0.0
    %2332 = vmatprep.subr.mxu0 0.0
    %2333 = vmatpush1.msra.mxu0 0.0
    %2334 = vmatprep.subr.mxu0 0.0
    %2335 = vmatpush1.msra.mxu0 0.0
    %2336 = vmatprep.subr.mxu0 0.0
    %2337 = vmatpush1.msra.mxu0 0.0
    %2338 = vmatprep.subr.mxu0 0.0
    %2339 = vmatpush1.msra.mxu0 0.0
    %2340 = vmatprep.subr.mxu0 0.0
    %2341 = vmatpush1.msra.mxu0 0.0
    %2342 = vmatprep.subr.mxu0 0.0
    %2343 = vmatpush1.msra.mxu0 0.0
    %2344 = vmatprep.mubr.f32.mxu0 0.0
    %2345 = vmatmul.mubr.f32.gmra.mrb[0].mxu0 %v2230
    %v2346 = vpop.f32.mrb[0].mxu0
    %v2347 = vadd.f32 %v2227, %v2346
    %v2348 = vpop.f32.mrb[0].mxu0
    %2349 = vmatprep.mubr.f32.mxu0 0.0
    %2350 = vmatmul.mubr.f32.gmra.mrb[0].mxu0 %v2233
    %v2351 = vpop.f32.mrb[0].mxu0
    %v2352 = vadd.f32 %v2227, %v2351
    %v2353 = vpop.f32.mrb[0].mxu0
    %2354 = vmatprep.mubr.f32.mxu0 0.0
    %2355 = vmatmul.mubr.f32.gmra.mrb[0].mxu0 %v2236
    %v2356 = vpop.f32.mrb[0].mxu0
    %v2357 = vadd.f32 %v2227, %v2356
    %v2358 = vpop.f32.mrb[0].mxu0
    %2359 = vmatprep.mubr.f32.mxu0 0.0
    %2360 = vmatmul.mubr.f32.gmra.mrb[0].mxu0 %v2239
    %v2361 = vpop.f32.mrb[0].mxu0
    %v2362 = vadd.f32 %v2227, %v2361
    %v2363 = vpop.f32.mrb[0].mxu0
    %2364 = vmatprep.mubr.f32.mxu0 0.0
    %2365 = vmatmul.mubr.f32.gmra.mrb[0].mxu0 %v2242
    %v2366 = vpop.f32.mrb[0].mxu0
    %v2367 = vadd.f32 %v2227, %v2366
    %v2368 = vpop.f32.mrb[0].mxu0
    %2369 = vmatprep.mubr.f32.mxu0 0.0
    %2370 = vmatmul.mubr.f32.gmra.mrb[0].mxu0 %v2245
    %v2371 = vpop.f32.mrb[0].mxu0
    %v2372 = vadd.f32 %v2227, %v2371
    %v2373 = vpop.f32.mrb[0].mxu0
    %2374 = vmatprep.mubr.f32.mxu0 0.0
    %2375 = vmatmul.mubr.f32.gmra.mrb[0].mxu0 %v2248
    %v2376 = vpop.f32.mrb[0].mxu0
    %v2377 = vadd.f32 %v2227, %v2376
    %v2378 = vpop.f32.mrb[0].mxu0
    %2379 = vmatprep.mubr.f32.mxu0 0.0
    %2380 = vmatmul.mubr.f32.gmra.mrb[0].mxu0 %v2251
    %v2381 = vpop.f32.mrb[0].mxu0
    %v2382 = vadd.f32 %v2227, %v2381
    %v2383 = vpop.f32.mrb[0].mxu0
    %2384 = vmatprep.mubr.f32.mxu0 0.0
    %2385 = vmatmul.mubr.f32.gmra.mrb[0].mxu0 %v2254
    %v2386 = vpop.f32.mrb[0].mxu0
    %v2387 = vadd.f32 %v2227, %v2386
    %v2388 = vpop.f32.mrb[0].mxu0
    %2389 = vmatprep.mubr.f32.mxu0 0.0
    %2390 = vmatmul.mubr.f32.gmra.mrb[0].mxu0 %v2257
    %v2391 = vpop.f32.mrb[0].mxu0
    %v2392 = vadd.f32 %v2227, %v2391
    %v2393 = vpop.f32.mrb[0].mxu0
    %2394 = vmatprep.mubr.f32.mxu0 0.0
    %2395 = vmatmul.mubr.f32.gmra.mrb[0].mxu0 %v2260
    %v2396 = vpop.f32.mrb[0].mxu0
    %v2397 = vadd.f32 %v2227, %v2396
    %v2398 = vpop.f32.mrb[0].mxu0
    %2399 = vmatprep.mubr.f32.mxu0 0.0
    %2400 = vmatmul.mubr.f32.gmra.mrb[0].mxu0 %v2263
    %v2401 = vpop.f32.mrb[0].mxu0
    %v2402 = vadd.f32 %v2227, %v2401
    %v2403 = vpop.f32.mrb[0].mxu0
    %2404 = vmatprep.mubr.f32.mxu0 0.0
    %2405 = vmatmul.mubr.f32.gmra.mrb[0].mxu0 %v2266
    %v2406 = vpop.f32.mrb[0].mxu0
    %v2407 = vadd.f32 %v2227, %v2406
    %v2408 = vpop.f32.mrb[0].mxu0
    %2409 = vmatprep.mubr.f32.mxu0 0.0
    %2410 = vmatmul.mubr.f32.gmra.mrb[0].mxu0 %v2269
    %v2411 = vpop.f32.mrb[0].mxu0
    %v2412 = vadd.f32 %v2227, %v2411
    %v2413 = vpop.f32.mrb[0].mxu0
    %2414 = vmatprep.mubr.f32.mxu0 0.0
    %2415 = vmatmul.mubr.f32.gmra.mrb[0].mxu0 %v2272
    %v2416 = vpop.f32.mrb[0].mxu0
    %v2417 = vadd.f32 %v2227, %v2416
    %v2418 = vpop.f32.mrb[0].mxu0
    %2419 = vmatprep.mubr.f32.mxu0 0.0
    %2420 = vmatmul.mubr.f32.gmra.mrb[0].mxu0 %v2275
    %v2421 = vpop.f32.mrb[0].mxu0
    %v2422 = vadd.f32 %v2227, %v2421
    %v2423 = vpop.f32.mrb[0].mxu0
    %2424 = vdwg.mxu0
    %v2426 = vsel %vm1657, %v1777, 0
    %v2429 = vsel %vm1657, %v1782, 0
    %v2432 = vsel %vm1657, %v1787, 0
    %v2435 = vsel %vm1657, %v1792, 0
    %v2438 = vsel %vm1657, %v1797, 0
    %v2441 = vsel %vm1657, %v1802, 0
    %v2444 = vsel %vm1657, %v1807, 0
    %v2447 = vsel %vm1657, %v1812, 0
    %v2450 = vsel %vm1657, %v1817, 0
    %v2453 = vsel %vm1657, %v1822, 0
    %v2456 = vsel %vm1657, %v1827, 0
    %v2459 = vsel %vm1657, %v1832, 0
    %v2462 = vsel %vm1657, %v1837, 0
    %v2465 = vsel %vm1657, %v1842, 0
    %v2468 = vsel %vm1657, %v1847, 0
    %v2471 = vsel %vm1657, %v1852, 0
    %v2474 = vsel %vm1706, %v1656, 0
    %2476 = vmatprep.subr.mxu0 0.0
    %2477 = vmatpush1.msra.mxu0 %v1655
    %2478 = vmatprep.subr.mxu0 0.0
    %2479 = vmatpush1.msra.mxu0 %v2474
    %2480 = vmatprep.subr.mxu0 0.0
    %2481 = vmatpush1.msra.mxu0 0.0
    %2482 = vmatprep.subr.mxu0 0.0
    %2483 = vmatpush1.msra.mxu0 0.0
    %2484 = vmatprep.subr.mxu0 0.0
    %2485 = vmatpush1.msra.mxu0 0.0
    %2486 = vmatprep.subr.mxu0 0.0
    %2487 = vmatpush1.msra.mxu0 0.0
    %2488 = vmatprep.subr.mxu0 0.0
    %2489 = vmatpush1.msra.mxu0 0.0
    %2490 = vmatprep.subr.mxu0 0.0
    %2491 = vmatpush1.msra.mxu0 0.0
    %2492 = vmatprep.subr.mxu0 0.0
    %2493 = vmatpush1.msra.mxu0 0.0
    %2494 = vmatprep.subr.mxu0 0.0
    %2495 = vmatpush1.msra.mxu0 0.0
    %2496 = vmatprep.subr.mxu0 0.0
    %2497 = vmatpush1.msra.mxu0 0.0
    %2498 = vmatprep.subr.mxu0 0.0
    %2499 = vmatpush1.msra.mxu0 0.0
    %2500 = vmatprep.subr.mxu0 0.0
    %2501 = vmatpush1.msra.mxu0 0.0
    %2502 = vmatprep.subr.mxu0 0.0
    %2503 = vmatpush1.msra.mxu0 0.0
    %2504 = vmatprep.subr.mxu0 0.0
    %2505 = vmatpush1.msra.mxu0 0.0
    %2506 = vmatprep.subr.mxu0 0.0
    %2507 = vmatpush1.msra.mxu0 0.0
    %2508 = vmatprep.subr.mxu0 0.0
    %2509 = vmatpush1.msra.mxu0 0.0
    %2510 = vmatprep.subr.mxu0 0.0
    %2511 = vmatpush1.msra.mxu0 0.0
    %2512 = vmatprep.subr.mxu0 0.0
    %2513 = vmatpush1.msra.mxu0 0.0
    %2514 = vmatprep.subr.mxu0 0.0
    %2515 = vmatpush1.msra.mxu0 0.0
    %2516 = vmatprep.subr.mxu0 0.0
    %2517 = vmatpush1.msra.mxu0 0.0
    %2518 = vmatprep.subr.mxu0 0.0
    %2519 = vmatpush1.msra.mxu0 0.0
    %2520 = vmatprep.subr.mxu0 0.0
    %2521 = vmatpush1.msra.mxu0 0.0
    %2522 = vmatprep.subr.mxu0 0.0
    %2523 = vmatpush1.msra.mxu0 0.0
    %2524 = vmatprep.subr.mxu0 0.0
    %2525 = vmatpush1.msra.mxu0 0.0
    %2526 = vmatprep.subr.mxu0 0.0
    %2527 = vmatpush1.msra.mxu0 0.0
    %2528 = vmatprep.subr.mxu0 0.0
    %2529 = vmatpush1.msra.mxu0 0.0
    %2530 = vmatprep.subr.mxu0 0.0
    %2531 = vmatpush1.msra.mxu0 0.0
    %2532 = vmatprep.subr.mxu0 0.0
    %2533 = vmatpush1.msra.mxu0 0.0
    %2534 = vmatprep.subr.mxu0 0.0
    %2535 = vmatpush1.msra.mxu0 0.0
    %2536 = vmatprep.subr.mxu0 0.0
    %2537 = vmatpush1.msra.mxu0 0.0
    %2538 = vmatprep.subr.mxu0 0.0
    %2539 = vmatpush1.msra.mxu0 0.0
    %2540 = vmatprep.mubr.f32.mxu0 0.0
    %2541 = vmatmul.mubr.f32.gmra.mrb[0].mxu0 %v2426
    %v2542 = vpop.f32.mrb[0].mxu0
    %v2543 = vadd.f32 0.0, %v2542
    %v2544 = vpop.f32.mrb[0].mxu0
    %2545 = vmatprep.mubr.f32.mxu0 0.0
    %2546 = vmatmul.mubr.f32.gmra.mrb[0].mxu0 %v2429
    %v2547 = vpop.f32.mrb[0].mxu0
    %v2548 = vadd.f32 0.0, %v2547
    %v2549 = vpop.f32.mrb[0].mxu0
    %2550 = vmatprep.mubr.f32.mxu0 0.0
    %2551 = vmatmul.mubr.f32.gmra.mrb[0].mxu0 %v2432
    %v2552 = vpop.f32.mrb[0].mxu0
    %v2553 = vadd.f32 0.0, %v2552
    %v2554 = vpop.f32.mrb[0].mxu0
    %2555 = vmatprep.mubr.f32.mxu0 0.0
    %2556 = vmatmul.mubr.f32.gmra.mrb[0].mxu0 %v2435
    %v2557 = vpop.f32.mrb[0].mxu0
    %v2558 = vadd.f32 0.0, %v2557
    %v2559 = vpop.f32.mrb[0].mxu0
    %2560 = vmatprep.mubr.f32.mxu0 0.0
    %2561 = vmatmul.mubr.f32.gmra.mrb[0].mxu0 %v2438
    %v2562 = vpop.f32.mrb[0].mxu0
    %v2563 = vadd.f32 0.0, %v2562
    %v2564 = vpop.f32.mrb[0].mxu0
    %2565 = vmatprep.mubr.f32.mxu0 0.0
    %2566 = vmatmul.mubr.f32.gmra.mrb[0].mxu0 %v2441
    %v2567 = vpop.f32.mrb[0].mxu0
    %v2568 = vadd.f32 0.0, %v2567
    %v2569 = vpop.f32.mrb[0].mxu0
    %2570 = vmatprep.mubr.f32.mxu0 0.0
    %2571 = vmatmul.mubr.f32.gmra.mrb[0].mxu0 %v2444
    %v2572 = vpop.f32.mrb[0].mxu0
    %v2573 = vadd.f32 0.0, %v2572
    %v2574 = vpop.f32.mrb[0].mxu0
    %2575 = vmatprep.mubr.f32.mxu0 0.0
    %2576 = vmatmul.mubr.f32.gmra.mrb[0].mxu0 %v2447
    %v2577 = vpop.f32.mrb[0].mxu0
    %v2578 = vadd.f32 0.0, %v2577
    %v2579 = vpop.f32.mrb[0].mxu0
    %2580 = vmatprep.mubr.f32.mxu0 0.0
    %2581 = vmatmul.mubr.f32.gmra.mrb[0].mxu0 %v2450
    %v2582 = vpop.f32.mrb[0].mxu0
    %v2583 = vadd.f32 0.0, %v2582
    %v2584 = vpop.f32.mrb[0].mxu0
    %2585 = vmatprep.mubr.f32.mxu0 0.0
    %2586 = vmatmul.mubr.f32.gmra.mrb[0].mxu0 %v2453
    %v2587 = vpop.f32.mrb[0].mxu0
    %v2588 = vadd.f32 0.0, %v2587
    %v2589 = vpop.f32.mrb[0].mxu0
    %2590 = vmatprep.mubr.f32.mxu0 0.0
    %2591 = vmatmul.mubr.f32.gmra.mrb[0].mxu0 %v2456
    %v2592 = vpop.f32.mrb[0].mxu0
    %v2593 = vadd.f32 0.0, %v2592
    %v2594 = vpop.f32.mrb[0].mxu0
    %2595 = vmatprep.mubr.f32.mxu0 0.0
    %2596 = vmatmul.mubr.f32.gmra.mrb[0].mxu0 %v2459
    %v2597 = vpop.f32.mrb[0].mxu0
    %v2598 = vadd.f32 0.0, %v2597
    %v2599 = vpop.f32.mrb[0].mxu0
    %2600 = vmatprep.mubr.f32.mxu0 0.0
    %2601 = vmatmul.mubr.f32.gmra.mrb[0].mxu0 %v2462
    %v2602 = vpop.f32.mrb[0].mxu0
    %v2603 = vadd.f32 0.0, %v2602
    %v2604 = vpop.f32.mrb[0].mxu0
    %2605 = vmatprep.mubr.f32.mxu0 0.0
    %2606 = vmatmul.mubr.f32.gmra.mrb[0].mxu0 %v2465
    %v2607 = vpop.f32.mrb[0].mxu0
    %v2608 = vadd.f32 0.0, %v2607
    %v2609 = vpop.f32.mrb[0].mxu0
    %2610 = vmatprep.mubr.f32.mxu0 0.0
    %2611 = vmatmul.mubr.f32.gmra.mrb[0].mxu0 %v2468
    %v2612 = vpop.f32.mrb[0].mxu0
    %v2613 = vadd.f32 0.0, %v2612
    %v2614 = vpop.f32.mrb[0].mxu0
    %2615 = vmatprep.mubr.f32.mxu0 0.0
    %2616 = vmatmul.mubr.f32.gmra.mrb[0].mxu0 %v2471
    %v2617 = vpop.f32.mrb[0].mxu0
    %v2618 = vadd.f32 0.0, %v2617
    %v2619 = vpop.f32.mrb[0].mxu0
    %2620 = vdwg.mxu0
    %v2621 = vmul.f32 %v2543, %v2543
    %v2622 = vmul.f32 %v2548, %v2548
    %v2623 = vmul.f32 %v2553, %v2553
    %v2624 = vmul.f32 %v2558, %v2558
    %v2625 = vmul.f32 %v2563, %v2563
    %v2626 = vmul.f32 %v2568, %v2568
    %v2627 = vmul.f32 %v2573, %v2573
    %v2628 = vmul.f32 %v2578, %v2578
    %v2629 = vmul.f32 %v2583, %v2583
    %v2630 = vmul.f32 %v2588, %v2588
    %v2631 = vmul.f32 %v2593, %v2593
    %v2632 = vmul.f32 %v2598, %v2598
    %v2633 = vmul.f32 %v2603, %v2603
    %v2634 = vmul.f32 %v2608, %v2608
    %v2635 = vmul.f32 %v2613, %v2613
    %v2636 = vmul.f32 %v2618, %v2618
    %2653 = vrot.lane.b32.xlu0 %v2621, 124
    %v2654 = vpop.permute.xlu0 %2653
    %2655 = vrot.lane.b32.xlu0 %v2622, 124
    %v2656 = vpop.permute.xlu0 %2655
    %2657 = vrot.lane.b32.xlu0 %v2623, 124
    %v2658 = vpop.permute.xlu0 %2657
    %2659 = vrot.lane.b32.xlu0 %v2624, 124
    %v2660 = vpop.permute.xlu0 %2659
    %2661 = vrot.lane.b32.xlu0 %v2625, 124
    %v2662 = vpop.permute.xlu0 %2661
    %2663 = vrot.lane.b32.xlu0 %v2626, 124
    %v2664 = vpop.permute.xlu0 %2663
    %2665 = vrot.lane.b32.xlu0 %v2627, 124
    %v2666 = vpop.permute.xlu0 %2665
    %2667 = vrot.lane.b32.xlu0 %v2628, 124
    %v2668 = vpop.permute.xlu0 %2667
    %2669 = vrot.lane.b32.xlu0 %v2629, 124
    %v2670 = vpop.permute.xlu0 %2669
    %2671 = vrot.lane.b32.xlu0 %v2630, 124
    %v2672 = vpop.permute.xlu0 %2671
    %2673 = vrot.lane.b32.xlu0 %v2631, 124
    %v2674 = vpop.permute.xlu0 %2673
    %2675 = vrot.lane.b32.xlu0 %v2632, 124
    %v2676 = vpop.permute.xlu0 %2675
    %2677 = vrot.lane.b32.xlu0 %v2633, 124
    %v2678 = vpop.permute.xlu0 %2677
    %2679 = vrot.lane.b32.xlu0 %v2634, 124
    %v2680 = vpop.permute.xlu0 %2679
    %2681 = vrot.lane.b32.xlu0 %v2635, 124
    %v2682 = vpop.permute.xlu0 %2681
    %2683 = vrot.lane.b32.xlu0 %v2636, 124
    %v2684 = vpop.permute.xlu0 %2683
    %v2701 = vadd.f32 %v2621, %v2654
    %v2702 = vadd.f32 %v2622, %v2656
    %v2703 = vadd.f32 %v2623, %v2658
    %v2704 = vadd.f32 %v2624, %v2660
    %v2705 = vadd.f32 %v2625, %v2662
    %v2706 = vadd.f32 %v2626, %v2664
    %v2707 = vadd.f32 %v2627, %v2666
    %v2708 = vadd.f32 %v2628, %v2668
    %v2709 = vadd.f32 %v2629, %v2670
    %v2710 = vadd.f32 %v2630, %v2672
    %v2711 = vadd.f32 %v2631, %v2674
    %v2712 = vadd.f32 %v2632, %v2676
    %v2713 = vadd.f32 %v2633, %v2678
    %v2714 = vadd.f32 %v2634, %v2680
    %v2715 = vadd.f32 %v2635, %v2682
    %v2716 = vadd.f32 %v2636, %v2684
    %2717 = vrot.lane.b32.xlu0 %v2621, 120
    %v2718 = vpop.permute.xlu0 %2717
    %2719 = vrot.lane.b32.xlu0 %v2622, 120
    %v2720 = vpop.permute.xlu0 %2719
    %2721 = vrot.lane.b32.xlu0 %v2623, 120
    %v2722 = vpop.permute.xlu0 %2721
    %2723 = vrot.lane.b32.xlu0 %v2624, 120
    %v2724 = vpop.permute.xlu0 %2723
    %2725 = vrot.lane.b32.xlu0 %v2625, 120
    %v2726 = vpop.permute.xlu0 %2725
    %2727 = vrot.lane.b32.xlu0 %v2626, 120
    %v2728 = vpop.permute.xlu0 %2727
    %2729 = vrot.lane.b32.xlu0 %v2627, 120
    %v2730 = vpop.permute.xlu0 %2729
    %2731 = vrot.lane.b32.xlu0 %v2628, 120
    %v2732 = vpop.permute.xlu0 %2731
    %2733 = vrot.lane.b32.xlu0 %v2629, 120
    %v2734 = vpop.permute.xlu0 %2733
    %2735 = vrot.lane.b32.xlu0 %v2630, 120
    %v2736 = vpop.permute.xlu0 %2735
    %2737 = vrot.lane.b32.xlu0 %v2631, 120
    %v2738 = vpop.permute.xlu0 %2737
    %2739 = vrot.lane.b32.xlu0 %v2632, 120
    %v2740 = vpop.permute.xlu0 %2739
    %2741 = vrot.lane.b32.xlu0 %v2633, 120
    %v2742 = vpop.permute.xlu0 %2741
    %2743 = vrot.lane.b32.xlu0 %v2634, 120
    %v2744 = vpop.permute.xlu0 %2743
    %2745 = vrot.lane.b32.xlu0 %v2635, 120
    %v2746 = vpop.permute.xlu0 %2745
    %2747 = vrot.lane.b32.xlu0 %v2636, 120
    %v2748 = vpop.permute.xlu0 %2747
    %v2765 = vadd.f32 %v2701, %v2718
    %v2766 = vadd.f32 %v2702, %v2720
    %v2767 = vadd.f32 %v2703, %v2722
    %v2768 = vadd.f32 %v2704, %v2724
    %v2769 = vadd.f32 %v2705, %v2726
    %v2770 = vadd.f32 %v2706, %v2728
    %v2771 = vadd.f32 %v2707, %v2730
    %v2772 = vadd.f32 %v2708, %v2732
    %v2773 = vadd.f32 %v2709, %v2734
    %v2774 = vadd.f32 %v2710, %v2736
    %v2775 = vadd.f32 %v2711, %v2738
    %v2776 = vadd.f32 %v2712, %v2740
    %v2777 = vadd.f32 %v2713, %v2742
    %v2778 = vadd.f32 %v2714, %v2744
    %v2779 = vadd.f32 %v2715, %v2746
    %v2780 = vadd.f32 %v2716, %v2748
    %v2781 = vmax.f32 %v2765, 1e-08
    %v2782 = vmax.f32 %v2766, 1e-08
    %v2783 = vmax.f32 %v2767, 1e-08
    %v2784 = vmax.f32 %v2768, 1e-08
    %v2785 = vmax.f32 %v2769, 1e-08
    %v2786 = vmax.f32 %v2770, 1e-08
    %v2787 = vmax.f32 %v2771, 1e-08
    %v2788 = vmax.f32 %v2772, 1e-08
    %v2789 = vmax.f32 %v2773, 1e-08
    %v2790 = vmax.f32 %v2774, 1e-08
    %v2791 = vmax.f32 %v2775, 1e-08
    %v2792 = vmax.f32 %v2776, 1e-08
    %v2793 = vmax.f32 %v2777, 1e-08
    %v2794 = vmax.f32 %v2778, 1e-08
    %v2795 = vmax.f32 %v2779, 1e-08
    %v2796 = vmax.f32 %v2780, 1e-08
    %v2797 = vrsqrt.pop %v2781
    %v2798 = vmul.f32 %v2781, %v2797
    %vm2799 = vcmp.eq.f32.partialorder %v2781, inf
    %v2800 = vsel %vm2799, %v2781, %v2798
    %vm2801 = vcmp.eq.f32.partialorder %v2781, 0.0
    %v2802 = vand.u32 %v2781, 2147483648
    %v2803 = vsel %vm2801, %v2802, %v2800
    %v2804 = vrsqrt.pop %v2782
    %v2805 = vmul.f32 %v2782, %v2804
    %vm2806 = vcmp.eq.f32.partialorder %v2782, inf
    %v2807 = vsel %vm2806, %v2782, %v2805
    %vm2808 = vcmp.eq.f32.partialorder %v2782, 0.0
    %v2809 = vand.u32 %v2782, 2147483648
    %v2810 = vsel %vm2808, %v2809, %v2807
    %v2811 = vrsqrt.pop %v2783
    %v2812 = vmul.f32 %v2783, %v2811
    %vm2813 = vcmp.eq.f32.partialorder %v2783, inf
    %v2814 = vsel %vm2813, %v2783, %v2812
    %vm2815 = vcmp.eq.f32.partialorder %v2783, 0.0
    %v2816 = vand.u32 %v2783, 2147483648
    %v2817 = vsel %vm2815, %v2816, %v2814
    %v2818 = vrsqrt.pop %v2784
    %v2819 = vmul.f32 %v2784, %v2818
    %vm2820 = vcmp.eq.f32.partialorder %v2784, inf
    %v2821 = vsel %vm2820, %v2784, %v2819
    %vm2822 = vcmp.eq.f32.partialorder %v2784, 0.0
    %v2823 = vand.u32 %v2784, 2147483648
    %v2824 = vsel %vm2822, %v2823, %v2821
    %v2825 = vrsqrt.pop %v2785
    %v2826 = vmul.f32 %v2785, %v2825
    %vm2827 = vcmp.eq.f32.partialorder %v2785, inf
    %v2828 = vsel %vm2827, %v2785, %v2826
    %vm2829 = vcmp.eq.f32.partialorder %v2785, 0.0
    %v2830 = vand.u32 %v2785, 2147483648
    %v2831 = vsel %vm2829, %v2830, %v2828
    %v2832 = vrsqrt.pop %v2786
    %v2833 = vmul.f32 %v2786, %v2832
    %vm2834 = vcmp.eq.f32.partialorder %v2786, inf
    %v2835 = vsel %vm2834, %v2786, %v2833
    %vm2836 = vcmp.eq.f32.partialorder %v2786, 0.0
    %v2837 = vand.u32 %v2786, 2147483648
    %v2838 = vsel %vm2836, %v2837, %v2835
    %v2839 = vrsqrt.pop %v2787
    %v2840 = vmul.f32 %v2787, %v2839
    %vm2841 = vcmp.eq.f32.partialorder %v2787, inf
    %v2842 = vsel %vm2841, %v2787, %v2840
    %vm2843 = vcmp.eq.f32.partialorder %v2787, 0.0
    %v2844 = vand.u32 %v2787, 2147483648
    %v2845 = vsel %vm2843, %v2844, %v2842
    %v2846 = vrsqrt.pop %v2788
    %v2847 = vmul.f32 %v2788, %v2846
    %vm2848 = vcmp.eq.f32.partialorder %v2788, inf
    %v2849 = vsel %vm2848, %v2788, %v2847
    %vm2850 = vcmp.eq.f32.partialorder %v2788, 0.0
    %v2851 = vand.u32 %v2788, 2147483648
    %v2852 = vsel %vm2850, %v2851, %v2849
    %v2853 = vrsqrt.pop %v2789
    %v2854 = vmul.f32 %v2789, %v2853
    %vm2855 = vcmp.eq.f32.partialorder %v2789, inf
    %v2856 = vsel %vm2855, %v2789, %v2854
    %vm2857 = vcmp.eq.f32.partialorder %v2789, 0.0
    %v2858 = vand.u32 %v2789, 2147483648
    %v2859 = vsel %vm2857, %v2858, %v2856
    %v2860 = vrsqrt.pop %v2790
    %v2861 = vmul.f32 %v2790, %v2860
    %vm2862 = vcmp.eq.f32.partialorder %v2790, inf
    %v2863 = vsel %vm2862, %v2790, %v2861
    %vm2864 = vcmp.eq.f32.partialorder %v2790, 0.0
    %v2865 = vand.u32 %v2790, 2147483648
    %v2866 = vsel %vm2864, %v2865, %v2863
    %v2867 = vrsqrt.pop %v2791
    %v2868 = vmul.f32 %v2791, %v2867
    %vm2869 = vcmp.eq.f32.partialorder %v2791, inf
    %v2870 = vsel %vm2869, %v2791, %v2868
    %vm2871 = vcmp.eq.f32.partialorder %v2791, 0.0
    %v2872 = vand.u32 %v2791, 2147483648
    %v2873 = vsel %vm2871, %v2872, %v2870
    %v2874 = vrsqrt.pop %v2792
    %v2875 = vmul.f32 %v2792, %v2874
    %vm2876 = vcmp.eq.f32.partialorder %v2792, inf
    %v2877 = vsel %vm2876, %v2792, %v2875
    %vm2878 = vcmp.eq.f32.partialorder %v2792, 0.0
    %v2879 = vand.u32 %v2792, 2147483648
    %v2880 = vsel %vm2878, %v2879, %v2877
    %v2881 = vrsqrt.pop %v2793
    %v2882 = vmul.f32 %v2793, %v2881
    %vm2883 = vcmp.eq.f32.partialorder %v2793, inf
    %v2884 = vsel %vm2883, %v2793, %v2882
    %vm2885 = vcmp.eq.f32.partialorder %v2793, 0.0
    %v2886 = vand.u32 %v2793, 2147483648
    %v2887 = vsel %vm2885, %v2886, %v2884
    %v2888 = vrsqrt.pop %v2794
    %v2889 = vmul.f32 %v2794, %v2888
    %vm2890 = vcmp.eq.f32.partialorder %v2794, inf
    %v2891 = vsel %vm2890, %v2794, %v2889
    %vm2892 = vcmp.eq.f32.partialorder %v2794, 0.0
    %v2893 = vand.u32 %v2794, 2147483648
    %v2894 = vsel %vm2892, %v2893, %v2891
    %v2895 = vrsqrt.pop %v2795
    %v2896 = vmul.f32 %v2795, %v2895
    %vm2897 = vcmp.eq.f32.partialorder %v2795, inf
    %v2898 = vsel %vm2897, %v2795, %v2896
    %vm2899 = vcmp.eq.f32.partialorder %v2795, 0.0
    %v2900 = vand.u32 %v2795, 2147483648
    %v2901 = vsel %vm2899, %v2900, %v2898
    %v2902 = vrsqrt.pop %v2796
    %v2903 = vmul.f32 %v2796, %v2902
    %vm2904 = vcmp.eq.f32.partialorder %v2796, inf
    %v2905 = vsel %vm2904, %v2796, %v2903
    %vm2906 = vcmp.eq.f32.partialorder %v2796, 0.0
    %v2907 = vand.u32 %v2796, 2147483648
    %v2908 = vsel %vm2906, %v2907, %v2905
    %v2909 = vxor.u32 %v2803, 2147483648
    %v2910 = vxor.u32 %v2810, 2147483648
    %v2911 = vxor.u32 %v2817, 2147483648
    %v2912 = vxor.u32 %v2824, 2147483648
    %v2913 = vxor.u32 %v2831, 2147483648
    %v2914 = vxor.u32 %v2838, 2147483648
    %v2915 = vxor.u32 %v2845, 2147483648
    %v2916 = vxor.u32 %v2852, 2147483648
    %v2917 = vxor.u32 %v2859, 2147483648
    %v2918 = vxor.u32 %v2866, 2147483648
    %v2919 = vxor.u32 %v2873, 2147483648
    %v2920 = vxor.u32 %v2880, 2147483648
    %v2921 = vxor.u32 %v2887, 2147483648
    %v2922 = vxor.u32 %v2894, 2147483648
    %v2923 = vxor.u32 %v2901, 2147483648
    %v2924 = vxor.u32 %v2908, 2147483648
    %v2925 = vmul.f32 %v2909, 1.442695
    %v2926 = vpow.pop %v2925
    %v2927 = vmul.f32 %v2910, 1.442695
    %v2928 = vpow.pop %v2927
    %v2929 = vmul.f32 %v2911, 1.442695
    %v2930 = vpow.pop %v2929
    %v2931 = vmul.f32 %v2912, 1.442695
    %v2932 = vpow.pop %v2931
    %v2933 = vmul.f32 %v2913, 1.442695
    %v2934 = vpow.pop %v2933
    %v2935 = vmul.f32 %v2914, 1.442695
    %v2936 = vpow.pop %v2935
    %v2937 = vmul.f32 %v2915, 1.442695
    %v2938 = vpow.pop %v2937
    %v2939 = vmul.f32 %v2916, 1.442695
    %v2940 = vpow.pop %v2939
    %v2941 = vmul.f32 %v2917, 1.442695
    %v2942 = vpow.pop %v2941
    %v2943 = vmul.f32 %v2918, 1.442695
    %v2944 = vpow.pop %v2943
    %v2945 = vmul.f32 %v2919, 1.442695
    %v2946 = vpow.pop %v2945
    %v2947 = vmul.f32 %v2920, 1.442695
    %v2948 = vpow.pop %v2947
    %v2949 = vmul.f32 %v2921, 1.442695
    %v2950 = vpow.pop %v2949
    %v2951 = vmul.f32 %v2922, 1.442695
    %v2952 = vpow.pop %v2951
    %v2953 = vmul.f32 %v2923, 1.442695
    %v2954 = vpow.pop %v2953
    %v2955 = vmul.f32 %v2924, 1.442695
    %v2956 = vpow.pop %v2955
    %v2957 = vadd.f32 %v2926, 1.0
    %v2958 = vadd.f32 %v2928, 1.0
    %v2959 = vadd.f32 %v2930, 1.0
    %v2960 = vadd.f32 %v2932, 1.0
    %v2961 = vadd.f32 %v2934, 1.0
    %v2962 = vadd.f32 %v2936, 1.0
    %v2963 = vadd.f32 %v2938, 1.0
    %v2964 = vadd.f32 %v2940, 1.0
    %v2965 = vadd.f32 %v2942, 1.0
    %v2966 = vadd.f32 %v2944, 1.0
    %v2967 = vadd.f32 %v2946, 1.0
    %v2968 = vadd.f32 %v2948, 1.0
    %v2969 = vadd.f32 %v2950, 1.0
    %v2970 = vadd.f32 %v2952, 1.0
    %v2971 = vadd.f32 %v2954, 1.0
    %v2972 = vadd.f32 %v2956, 1.0
    %v2973 = vrcp.pop %v2957
    %v2974 = vmul.f32 1.0, %v2973
    %v2975 = vrcp.pop %v2958
    %v2976 = vmul.f32 1.0, %v2975
    %v2977 = vrcp.pop %v2959
    %v2978 = vmul.f32 1.0, %v2977
    %v2979 = vrcp.pop %v2960
    %v2980 = vmul.f32 1.0, %v2979
    %v2981 = vrcp.pop %v2961
    %v2982 = vmul.f32 1.0, %v2981
    %v2983 = vrcp.pop %v2962
    %v2984 = vmul.f32 1.0, %v2983
    %v2985 = vrcp.pop %v2963
    %v2986 = vmul.f32 1.0, %v2985
    %v2987 = vrcp.pop %v2964
    %v2988 = vmul.f32 1.0, %v2987
    %v2989 = vrcp.pop %v2965
    %v2990 = vmul.f32 1.0, %v2989
    %v2991 = vrcp.pop %v2966
    %v2992 = vmul.f32 1.0, %v2991
    %v2993 = vrcp.pop %v2967
    %v2994 = vmul.f32 1.0, %v2993
    %v2995 = vrcp.pop %v2968
    %v2996 = vmul.f32 1.0, %v2995
    %v2997 = vrcp.pop %v2969
    %v2998 = vmul.f32 1.0, %v2997
    %v2999 = vrcp.pop %v2970
    %v3000 = vmul.f32 1.0, %v2999
    %v3001 = vrcp.pop %v2971
    %v3002 = vmul.f32 1.0, %v3001
    %v3003 = vrcp.pop %v2972
    %v3004 = vmul.f32 1.0, %v3003
    %3021 = vrot.lane.b32.xlu0 %v2974, 4
    %v3022 = vpop.permute.xlu0 %3021
    %3023 = vrot.lane.b32.xlu0 %v2976, 4
    %v3024 = vpop.permute.xlu0 %3023
    %3025 = vrot.lane.b32.xlu0 %v2978, 4
    %v3026 = vpop.permute.xlu0 %3025
    %3027 = vrot.lane.b32.xlu0 %v2980, 4
    %v3028 = vpop.permute.xlu0 %3027
    %3029 = vrot.lane.b32.xlu0 %v2982, 4
    %v3030 = vpop.permute.xlu0 %3029
    %3031 = vrot.lane.b32.xlu0 %v2984, 4
    %v3032 = vpop.permute.xlu0 %3031
    %3033 = vrot.lane.b32.xlu0 %v2986, 4
    %v3034 = vpop.permute.xlu0 %3033
    %3035 = vrot.lane.b32.xlu0 %v2988, 4
    %v3036 = vpop.permute.xlu0 %3035
    %3037 = vrot.lane.b32.xlu0 %v2990, 4
    %v3038 = vpop.permute.xlu0 %3037
    %3039 = vrot.lane.b32.xlu0 %v2992, 4
    %v3040 = vpop.permute.xlu0 %3039
    %3041 = vrot.lane.b32.xlu0 %v2994, 4
    %v3042 = vpop.permute.xlu0 %3041
    %3043 = vrot.lane.b32.xlu0 %v2996, 4
    %v3044 = vpop.permute.xlu0 %3043
    %3045 = vrot.lane.b32.xlu0 %v2998, 4
    %v3046 = vpop.permute.xlu0 %3045
    %3047 = vrot.lane.b32.xlu0 %v3000, 4
    %v3048 = vpop.permute.xlu0 %3047
    %3049 = vrot.lane.b32.xlu0 %v3002, 4
    %v3050 = vpop.permute.xlu0 %3049
    %3051 = vrot.lane.b32.xlu0 %v3004, 4
    %v3052 = vpop.permute.xlu0 %3051
    %3069 = vrot.lane.b32.xlu0 %v2974, 8
    %v3070 = vpop.permute.xlu0 %3069
    %3071 = vrot.lane.b32.xlu0 %v2976, 8
    %v3072 = vpop.permute.xlu0 %3071
    %3073 = vrot.lane.b32.xlu0 %v2978, 8
    %v3074 = vpop.permute.xlu0 %3073
    %3075 = vrot.lane.b32.xlu0 %v2980, 8
    %v3076 = vpop.permute.xlu0 %3075
    %3077 = vrot.lane.b32.xlu0 %v2982, 8
    %v3078 = vpop.permute.xlu0 %3077
    %3079 = vrot.lane.b32.xlu0 %v2984, 8
    %v3080 = vpop.permute.xlu0 %3079
    %3081 = vrot.lane.b32.xlu0 %v2986, 8
    %v3082 = vpop.permute.xlu0 %3081
    %3083 = vrot.lane.b32.xlu0 %v2988, 8
    %v3084 = vpop.permute.xlu0 %3083
    %3085 = vrot.lane.b32.xlu0 %v2990, 8
    %v3086 = vpop.permute.xlu0 %3085
    %3087 = vrot.lane.b32.xlu0 %v2992, 8
    %v3088 = vpop.permute.xlu0 %3087
    %3089 = vrot.lane.b32.xlu0 %v2994, 8
    %v3090 = vpop.permute.xlu0 %3089
    %3091 = vrot.lane.b32.xlu0 %v2996, 8
    %v3092 = vpop.permute.xlu0 %3091
    %3093 = vrot.lane.b32.xlu0 %v2998, 8
    %v3094 = vpop.permute.xlu0 %3093
    %3095 = vrot.lane.b32.xlu0 %v3000, 8
    %v3096 = vpop.permute.xlu0 %3095
    %3097 = vrot.lane.b32.xlu0 %v3002, 8
    %v3098 = vpop.permute.xlu0 %3097
    %3099 = vrot.lane.b32.xlu0 %v3004, 8
    %v3100 = vpop.permute.xlu0 %3099
    %v3117 = vsel %vm1583, %v2974, %v3022
    %v3118 = vsel %vm1583, %v2976, %v3024
    %v3119 = vsel %vm1583, %v2978, %v3026
    %v3120 = vsel %vm1583, %v2980, %v3028
    %v3121 = vsel %vm1583, %v2982, %v3030
    %v3122 = vsel %vm1583, %v2984, %v3032
    %v3123 = vsel %vm1583, %v2986, %v3034
    %v3124 = vsel %vm1583, %v2988, %v3036
    %v3125 = vsel %vm1583, %v2990, %v3038
    %v3126 = vsel %vm1583, %v2992, %v3040
    %v3127 = vsel %vm1583, %v2994, %v3042
    %v3128 = vsel %vm1583, %v2996, %v3044
    %v3129 = vsel %vm1583, %v2998, %v3046
    %v3130 = vsel %vm1583, %v3000, %v3048
    %v3131 = vsel %vm1583, %v3002, %v3050
    %v3132 = vsel %vm1583, %v3004, %v3052
    %v3133 = vsel %vm1600, %v3117, %v3070
    %v3134 = vsel %vm1600, %v3118, %v3072
    %v3135 = vsel %vm1600, %v3119, %v3074
    %v3136 = vsel %vm1600, %v3120, %v3076
    %v3137 = vsel %vm1600, %v3121, %v3078
    %v3138 = vsel %vm1600, %v3122, %v3080
    %v3139 = vsel %vm1600, %v3123, %v3082
    %v3140 = vsel %vm1600, %v3124, %v3084
    %v3141 = vsel %vm1600, %v3125, %v3086
    %v3142 = vsel %vm1600, %v3126, %v3088
    %v3143 = vsel %vm1600, %v3127, %v3090
    %v3144 = vsel %vm1600, %v3128, %v3092
    %v3145 = vsel %vm1600, %v3129, %v3094
    %v3146 = vsel %vm1600, %v3130, %v3096
    %v3147 = vsel %vm1600, %v3131, %v3098
    %v3148 = vsel %vm1600, %v3132, %v3100
    %v3149 = vmul.f32 %v2543, %v3133
    %v3150 = vmul.f32 %v2548, %v3134
    %v3151 = vmul.f32 %v2553, %v3135
    %v3152 = vmul.f32 %v2558, %v3136
    %v3153 = vmul.f32 %v2563, %v3137
    %v3154 = vmul.f32 %v2568, %v3138
    %v3155 = vmul.f32 %v2573, %v3139
    %v3156 = vmul.f32 %v2578, %v3140
    %v3157 = vmul.f32 %v2583, %v3141
    %v3158 = vmul.f32 %v2588, %v3142
    %v3159 = vmul.f32 %v2593, %v3143
    %v3160 = vmul.f32 %v2598, %v3144
    %v3161 = vmul.f32 %v2603, %v3145
    %v3162 = vmul.f32 %v2608, %v3146
    %v3163 = vmul.f32 %v2613, %v3147
    %v3164 = vmul.f32 %v2618, %v3148
    %v3165 = vmax.f32 %v2347, 0.0
    %v3166 = vmax.f32 %v2352, 0.0
    %v3167 = vmax.f32 %v2357, 0.0
    %v3168 = vmax.f32 %v2362, 0.0
    %v3169 = vmax.f32 %v2367, 0.0
    %v3170 = vmax.f32 %v2372, 0.0
    %v3171 = vmax.f32 %v2377, 0.0
    %v3172 = vmax.f32 %v2382, 0.0
    %v3173 = vmax.f32 %v2387, 0.0
    %v3174 = vmax.f32 %v2392, 0.0
    %v3175 = vmax.f32 %v2397, 0.0
    %v3176 = vmax.f32 %v2402, 0.0
    %v3177 = vmax.f32 %v2407, 0.0
    %v3178 = vmax.f32 %v2412, 0.0
    %v3179 = vmax.f32 %v2417, 0.0
    %v3180 = vmax.f32 %v2422, 0.0
    %v3181 = vld [vmem:[%s2 + $0x95] sm:$0xff]
    %v3182 = vld [vmem:[%s2 + $0x9d] sm:$0xf]
    %v3183 = vld [vmem:[%s2 + $0xa1] sm:$0xff]
    %v3184 = vld [vmem:[%s2 + $0xa9] sm:$0xff]
    %v3185 = vld [vmem:[%s2 + $0xb1] sm:$0xf]
    %v3186 = vld [vmem:[%s2 + $0xb5] sm:$0x1]
    %v3187 = vld [vmem:[%s2 + $0xb6] sm:$0xff]
    %v3188 = vld [vmem:[%s2 + $0xbe] sm:$0xf]
    %v3190 = vsel %vm1657, %v3149, 0
    %v3193 = vsel %vm1657, %v3150, 0
    %v3196 = vsel %vm1657, %v3151, 0
    %v3199 = vsel %vm1657, %v3152, 0
    %v3202 = vsel %vm1657, %v3153, 0
    %v3205 = vsel %vm1657, %v3154, 0
    %v3208 = vsel %vm1657, %v3155, 0
    %v3211 = vsel %vm1657, %v3156, 0
    %v3214 = vsel %vm1657, %v3157, 0
    %v3217 = vsel %vm1657, %v3158, 0
    %v3220 = vsel %vm1657, %v3159, 0
    %v3223 = vsel %vm1657, %v3160, 0
    %v3226 = vsel %vm1657, %v3161, 0
    %v3229 = vsel %vm1657, %v3162, 0
    %v3232 = vsel %vm1657, %v3163, 0
    %v3235 = vsel %vm1657, %v3164, 0
    %v3238 = vsel %vm1706, %v3182, 0
    %3240 = vmatprep.subr.mxu0 0.0
    %3241 = vmatpush1.msra.mxu0 %v3181
    %3242 = vmatprep.subr.mxu0 0.0
    %3243 = vmatpush1.msra.mxu0 %v3238
    %3244 = vmatprep.subr.mxu0 0.0
    %3245 = vmatpush1.msra.mxu0 0.0
    %3246 = vmatprep.subr.mxu0 0.0
    %3247 = vmatpush1.msra.mxu0 0.0
    %3248 = vmatprep.subr.mxu0 0.0
    %3249 = vmatpush1.msra.mxu0 0.0
    %3250 = vmatprep.subr.mxu0 0.0
    %3251 = vmatpush1.msra.mxu0 0.0
    %3252 = vmatprep.subr.mxu0 0.0
    %3253 = vmatpush1.msra.mxu0 0.0
    %3254 = vmatprep.subr.mxu0 0.0
    %3255 = vmatpush1.msra.mxu0 0.0
    %3256 = vmatprep.subr.mxu0 0.0
    %3257 = vmatpush1.msra.mxu0 0.0
    %3258 = vmatprep.subr.mxu0 0.0
    %3259 = vmatpush1.msra.mxu0 0.0
    %3260 = vmatprep.subr.mxu0 0.0
    %3261 = vmatpush1.msra.mxu0 0.0
    %3262 = vmatprep.subr.mxu0 0.0
    %3263 = vmatpush1.msra.mxu0 0.0
    %3264 = vmatprep.subr.mxu0 0.0
    %3265 = vmatpush1.msra.mxu0 0.0
    %3266 = vmatprep.subr.mxu0 0.0
    %3267 = vmatpush1.msra.mxu0 0.0
    %3268 = vmatprep.subr.mxu0 0.0
    %3269 = vmatpush1.msra.mxu0 0.0
    %3270 = vmatprep.subr.mxu0 0.0
    %3271 = vmatpush1.msra.mxu0 0.0
    %3272 = vmatprep.subr.mxu0 0.0
    %3273 = vmatpush1.msra.mxu0 0.0
    %3274 = vmatprep.subr.mxu0 0.0
    %3275 = vmatpush1.msra.mxu0 0.0
    %3276 = vmatprep.subr.mxu0 0.0
    %3277 = vmatpush1.msra.mxu0 0.0
    %3278 = vmatprep.subr.mxu0 0.0
    %3279 = vmatpush1.msra.mxu0 0.0
    %3280 = vmatprep.subr.mxu0 0.0
    %3281 = vmatpush1.msra.mxu0 0.0
    %3282 = vmatprep.subr.mxu0 0.0
    %3283 = vmatpush1.msra.mxu0 0.0
    %3284 = vmatprep.subr.mxu0 0.0
    %3285 = vmatpush1.msra.mxu0 0.0
    %3286 = vmatprep.subr.mxu0 0.0
    %3287 = vmatpush1.msra.mxu0 0.0
    %3288 = vmatprep.subr.mxu0 0.0
    %3289 = vmatpush1.msra.mxu0 0.0
    %3290 = vmatprep.subr.mxu0 0.0
    %3291 = vmatpush1.msra.mxu0 0.0
    %3292 = vmatprep.subr.mxu0 0.0
    %3293 = vmatpush1.msra.mxu0 0.0
    %3294 = vmatprep.subr.mxu0 0.0
    %3295 = vmatpush1.msra.mxu0 0.0
    %3296 = vmatprep.subr.mxu0 0.0
    %3297 = vmatpush1.msra.mxu0 0.0
    %3298 = vmatprep.subr.mxu0 0.0
    %3299 = vmatpush1.msra.mxu0 0.0
    %3300 = vmatprep.subr.mxu0 0.0
    %3301 = vmatpush1.msra.mxu0 0.0
    %3302 = vmatprep.subr.mxu0 0.0
    %3303 = vmatpush1.msra.mxu0 0.0
    %3304 = vmatprep.mubr.f32.mxu0 0.0
    %3305 = vmatmul.mubr.f32.gmra.mrb[0].mxu0 %v3190
    %v3306 = vpop.f32.mrb[0].mxu0
    %v3307 = vadd.f32 0.0, %v3306
    %v3308 = vpop.f32.mrb[0].mxu0
    %3309 = vmatprep.mubr.f32.mxu0 0.0
    %3310 = vmatmul.mubr.f32.gmra.mrb[0].mxu0 %v3193
    %v3311 = vpop.f32.mrb[0].mxu0
    %v3312 = vadd.f32 0.0, %v3311
    %v3313 = vpop.f32.mrb[0].mxu0
    %3314 = vmatprep.mubr.f32.mxu0 0.0
    %3315 = vmatmul.mubr.f32.gmra.mrb[0].mxu0 %v3196
    %v3316 = vpop.f32.mrb[0].mxu0
    %v3317 = vadd.f32 0.0, %v3316
    %v3318 = vpop.f32.mrb[0].mxu0
    %3319 = vmatprep.mubr.f32.mxu0 0.0
    %3320 = vmatmul.mubr.f32.gmra.mrb[0].mxu0 %v3199
    %v3321 = vpop.f32.mrb[0].mxu0
    %v3322 = vadd.f32 0.0, %v3321
    %v3323 = vpop.f32.mrb[0].mxu0
    %3324 = vmatprep.mubr.f32.mxu0 0.0
    %3325 = vmatmul.mubr.f32.gmra.mrb[0].mxu0 %v3202
    %v3326 = vpop.f32.mrb[0].mxu0
    %v3327 = vadd.f32 0.0, %v3326
    %v3328 = vpop.f32.mrb[0].mxu0
    %3329 = vmatprep.mubr.f32.mxu0 0.0
    %3330 = vmatmul.mubr.f32.gmra.mrb[0].mxu0 %v3205
    %v3331 = vpop.f32.mrb[0].mxu0
    %v3332 = vadd.f32 0.0, %v3331
    %v3333 = vpop.f32.mrb[0].mxu0
    %3334 = vmatprep.mubr.f32.mxu0 0.0
    %3335 = vmatmul.mubr.f32.gmra.mrb[0].mxu0 %v3208
    %v3336 = vpop.f32.mrb[0].mxu0
    %v3337 = vadd.f32 0.0, %v3336
    %v3338 = vpop.f32.mrb[0].mxu0
    %3339 = vmatprep.mubr.f32.mxu0 0.0
    %3340 = vmatmul.mubr.f32.gmra.mrb[0].mxu0 %v3211
    %v3341 = vpop.f32.mrb[0].mxu0
    %v3342 = vadd.f32 0.0, %v3341
    %v3343 = vpop.f32.mrb[0].mxu0
    %3344 = vmatprep.mubr.f32.mxu0 0.0
    %3345 = vmatmul.mubr.f32.gmra.mrb[0].mxu0 %v3214
    %v3346 = vpop.f32.mrb[0].mxu0
    %v3347 = vadd.f32 0.0, %v3346
    %v3348 = vpop.f32.mrb[0].mxu0
    %3349 = vmatprep.mubr.f32.mxu0 0.0
    %3350 = vmatmul.mubr.f32.gmra.mrb[0].mxu0 %v3217
    %v3351 = vpop.f32.mrb[0].mxu0
    %v3352 = vadd.f32 0.0, %v3351
    %v3353 = vpop.f32.mrb[0].mxu0
    %3354 = vmatprep.mubr.f32.mxu0 0.0
    %3355 = vmatmul.mubr.f32.gmra.mrb[0].mxu0 %v3220
    %v3356 = vpop.f32.mrb[0].mxu0
    %v3357 = vadd.f32 0.0, %v3356
    %v3358 = vpop.f32.mrb[0].mxu0
    %3359 = vmatprep.mubr.f32.mxu0 0.0
    %3360 = vmatmul.mubr.f32.gmra.mrb[0].mxu0 %v3223
    %v3361 = vpop.f32.mrb[0].mxu0
    %v3362 = vadd.f32 0.0, %v3361
    %v3363 = vpop.f32.mrb[0].mxu0
    %3364 = vmatprep.mubr.f32.mxu0 0.0
    %3365 = vmatmul.mubr.f32.gmra.mrb[0].mxu0 %v3226
    %v3366 = vpop.f32.mrb[0].mxu0
    %v3367 = vadd.f32 0.0, %v3366
    %v3368 = vpop.f32.mrb[0].mxu0
    %3369 = vmatprep.mubr.f32.mxu0 0.0
    %3370 = vmatmul.mubr.f32.gmra.mrb[0].mxu0 %v3229
    %v3371 = vpop.f32.mrb[0].mxu0
    %v3372 = vadd.f32 0.0, %v3371
    %v3373 = vpop.f32.mrb[0].mxu0
    %3374 = vmatprep.mubr.f32.mxu0 0.0
    %3375 = vmatmul.mubr.f32.gmra.mrb[0].mxu0 %v3232
    %v3376 = vpop.f32.mrb[0].mxu0
    %v3377 = vadd.f32 0.0, %v3376
    %v3378 = vpop.f32.mrb[0].mxu0
    %3379 = vmatprep.mubr.f32.mxu0 0.0
    %3380 = vmatmul.mubr.f32.gmra.mrb[0].mxu0 %v3235
    %v3381 = vpop.f32.mrb[0].mxu0
    %v3382 = vadd.f32 0.0, %v3381
    %v3383 = vpop.f32.mrb[0].mxu0
    %3384 = vdwg.mxu0
    %v3385 = vmul.f32 %v3307, %v3307
    %v3386 = vmul.f32 %v3312, %v3312
    %v3387 = vmul.f32 %v3317, %v3317
    %v3388 = vmul.f32 %v3322, %v3322
    %v3389 = vmul.f32 %v3327, %v3327
    %v3390 = vmul.f32 %v3332, %v3332
    %v3391 = vmul.f32 %v3337, %v3337
    %v3392 = vmul.f32 %v3342, %v3342
    %v3393 = vmul.f32 %v3347, %v3347
    %v3394 = vmul.f32 %v3352, %v3352
    %v3395 = vmul.f32 %v3357, %v3357
    %v3396 = vmul.f32 %v3362, %v3362
    %v3397 = vmul.f32 %v3367, %v3367
    %v3398 = vmul.f32 %v3372, %v3372
    %v3399 = vmul.f32 %v3377, %v3377
    %v3400 = vmul.f32 %v3382, %v3382
    %3417 = vrot.lane.b32.xlu0 %v3385, 124
    %v3418 = vpop.permute.xlu0 %3417
    %3419 = vrot.lane.b32.xlu0 %v3386, 124
    %v3420 = vpop.permute.xlu0 %3419
    %3421 = vrot.lane.b32.xlu0 %v3387, 124
    %v3422 = vpop.permute.xlu0 %3421
    %3423 = vrot.lane.b32.xlu0 %v3388, 124
    %v3424 = vpop.permute.xlu0 %3423
    %3425 = vrot.lane.b32.xlu0 %v3389, 124
    %v3426 = vpop.permute.xlu0 %3425
    %3427 = vrot.lane.b32.xlu0 %v3390, 124
    %v3428 = vpop.permute.xlu0 %3427
    %3429 = vrot.lane.b32.xlu0 %v3391, 124
    %v3430 = vpop.permute.xlu0 %3429
    %3431 = vrot.lane.b32.xlu0 %v3392, 124
    %v3432 = vpop.permute.xlu0 %3431
    %3433 = vrot.lane.b32.xlu0 %v3393, 124
    %v3434 = vpop.permute.xlu0 %3433
    %3435 = vrot.lane.b32.xlu0 %v3394, 124
    %v3436 = vpop.permute.xlu0 %3435
    %3437 = vrot.lane.b32.xlu0 %v3395, 124
    %v3438 = vpop.permute.xlu0 %3437
    %3439 = vrot.lane.b32.xlu0 %v3396, 124
    %v3440 = vpop.permute.xlu0 %3439
    %3441 = vrot.lane.b32.xlu0 %v3397, 124
    %v3442 = vpop.permute.xlu0 %3441
    %3443 = vrot.lane.b32.xlu0 %v3398, 124
    %v3444 = vpop.permute.xlu0 %3443
    %3445 = vrot.lane.b32.xlu0 %v3399, 124
    %v3446 = vpop.permute.xlu0 %3445
    %3447 = vrot.lane.b32.xlu0 %v3400, 124
    %v3448 = vpop.permute.xlu0 %3447
    %v3465 = vadd.f32 %v3385, %v3418
    %v3466 = vadd.f32 %v3386, %v3420
    %v3467 = vadd.f32 %v3387, %v3422
    %v3468 = vadd.f32 %v3388, %v3424
    %v3469 = vadd.f32 %v3389, %v3426
    %v3470 = vadd.f32 %v3390, %v3428
    %v3471 = vadd.f32 %v3391, %v3430
    %v3472 = vadd.f32 %v3392, %v3432
    %v3473 = vadd.f32 %v3393, %v3434
    %v3474 = vadd.f32 %v3394, %v3436
    %v3475 = vadd.f32 %v3395, %v3438
    %v3476 = vadd.f32 %v3396, %v3440
    %v3477 = vadd.f32 %v3397, %v3442
    %v3478 = vadd.f32 %v3398, %v3444
    %v3479 = vadd.f32 %v3399, %v3446
    %v3480 = vadd.f32 %v3400, %v3448
    %3481 = vrot.lane.b32.xlu0 %v3385, 120
    %v3482 = vpop.permute.xlu0 %3481
    %3483 = vrot.lane.b32.xlu0 %v3386, 120
    %v3484 = vpop.permute.xlu0 %3483
    %3485 = vrot.lane.b32.xlu0 %v3387, 120
    %v3486 = vpop.permute.xlu0 %3485
    %3487 = vrot.lane.b32.xlu0 %v3388, 120
    %v3488 = vpop.permute.xlu0 %3487
    %3489 = vrot.lane.b32.xlu0 %v3389, 120
    %v3490 = vpop.permute.xlu0 %3489
    %3491 = vrot.lane.b32.xlu0 %v3390, 120
    %v3492 = vpop.permute.xlu0 %3491
    %3493 = vrot.lane.b32.xlu0 %v3391, 120
    %v3494 = vpop.permute.xlu0 %3493
    %3495 = vrot.lane.b32.xlu0 %v3392, 120
    %v3496 = vpop.permute.xlu0 %3495
    %3497 = vrot.lane.b32.xlu0 %v3393, 120
    %v3498 = vpop.permute.xlu0 %3497
    %3499 = vrot.lane.b32.xlu0 %v3394, 120
    %v3500 = vpop.permute.xlu0 %3499
    %3501 = vrot.lane.b32.xlu0 %v3395, 120
    %v3502 = vpop.permute.xlu0 %3501
    %3503 = vrot.lane.b32.xlu0 %v3396, 120
    %v3504 = vpop.permute.xlu0 %3503
    %3505 = vrot.lane.b32.xlu0 %v3397, 120
    %v3506 = vpop.permute.xlu0 %3505
    %3507 = vrot.lane.b32.xlu0 %v3398, 120
    %v3508 = vpop.permute.xlu0 %3507
    %3509 = vrot.lane.b32.xlu0 %v3399, 120
    %v3510 = vpop.permute.xlu0 %3509
    %3511 = vrot.lane.b32.xlu0 %v3400, 120
    %v3512 = vpop.permute.xlu0 %3511
    %v3529 = vadd.f32 %v3465, %v3482
    %v3530 = vadd.f32 %v3466, %v3484
    %v3531 = vadd.f32 %v3467, %v3486
    %v3532 = vadd.f32 %v3468, %v3488
    %v3533 = vadd.f32 %v3469, %v3490
    %v3534 = vadd.f32 %v3470, %v3492
    %v3535 = vadd.f32 %v3471, %v3494
    %v3536 = vadd.f32 %v3472, %v3496
    %v3537 = vadd.f32 %v3473, %v3498
    %v3538 = vadd.f32 %v3474, %v3500
    %v3539 = vadd.f32 %v3475, %v3502
    %v3540 = vadd.f32 %v3476, %v3504
    %v3541 = vadd.f32 %v3477, %v3506
    %v3542 = vadd.f32 %v3478, %v3508
    %v3543 = vadd.f32 %v3479, %v3510
    %v3544 = vadd.f32 %v3480, %v3512
    %v3545 = vmax.f32 %v3529, 1e-08
    %v3546 = vmax.f32 %v3530, 1e-08
    %v3547 = vmax.f32 %v3531, 1e-08
    %v3548 = vmax.f32 %v3532, 1e-08
    %v3549 = vmax.f32 %v3533, 1e-08
    %v3550 = vmax.f32 %v3534, 1e-08
    %v3551 = vmax.f32 %v3535, 1e-08
    %v3552 = vmax.f32 %v3536, 1e-08
    %v3553 = vmax.f32 %v3537, 1e-08
    %v3554 = vmax.f32 %v3538, 1e-08
    %v3555 = vmax.f32 %v3539, 1e-08
    %v3556 = vmax.f32 %v3540, 1e-08
    %v3557 = vmax.f32 %v3541, 1e-08
    %v3558 = vmax.f32 %v3542, 1e-08
    %v3559 = vmax.f32 %v3543, 1e-08
    %v3560 = vmax.f32 %v3544, 1e-08
    %v3561 = vrsqrt.pop %v3545
    %v3562 = vmul.f32 %v3545, %v3561
    %vm3563 = vcmp.eq.f32.partialorder %v3545, inf
    %v3564 = vsel %vm3563, %v3545, %v3562
    %vm3565 = vcmp.eq.f32.partialorder %v3545, 0.0
    %v3566 = vand.u32 %v3545, 2147483648
    %v3567 = vsel %vm3565, %v3566, %v3564
    %v3568 = vrsqrt.pop %v3546
    %v3569 = vmul.f32 %v3546, %v3568
    %vm3570 = vcmp.eq.f32.partialorder %v3546, inf
    %v3571 = vsel %vm3570, %v3546, %v3569
    %vm3572 = vcmp.eq.f32.partialorder %v3546, 0.0
    %v3573 = vand.u32 %v3546, 2147483648
    %v3574 = vsel %vm3572, %v3573, %v3571
    %v3575 = vrsqrt.pop %v3547
    %v3576 = vmul.f32 %v3547, %v3575
    %vm3577 = vcmp.eq.f32.partialorder %v3547, inf
    %v3578 = vsel %vm3577, %v3547, %v3576
    %vm3579 = vcmp.eq.f32.partialorder %v3547, 0.0
    %v3580 = vand.u32 %v3547, 2147483648
    %v3581 = vsel %vm3579, %v3580, %v3578
    %v3582 = vrsqrt.pop %v3548
    %v3583 = vmul.f32 %v3548, %v3582
    %vm3584 = vcmp.eq.f32.partialorder %v3548, inf
    %v3585 = vsel %vm3584, %v3548, %v3583
    %vm3586 = vcmp.eq.f32.partialorder %v3548, 0.0
    %v3587 = vand.u32 %v3548, 2147483648
    %v3588 = vsel %vm3586, %v3587, %v3585
    %v3589 = vrsqrt.pop %v3549
    %v3590 = vmul.f32 %v3549, %v3589
    %vm3591 = vcmp.eq.f32.partialorder %v3549, inf
    %v3592 = vsel %vm3591, %v3549, %v3590
    %vm3593 = vcmp.eq.f32.partialorder %v3549, 0.0
    %v3594 = vand.u32 %v3549, 2147483648
    %v3595 = vsel %vm3593, %v3594, %v3592
    %v3596 = vrsqrt.pop %v3550
    %v3597 = vmul.f32 %v3550, %v3596
    %vm3598 = vcmp.eq.f32.partialorder %v3550, inf
    %v3599 = vsel %vm3598, %v3550, %v3597
    %vm3600 = vcmp.eq.f32.partialorder %v3550, 0.0
    %v3601 = vand.u32 %v3550, 2147483648
    %v3602 = vsel %vm3600, %v3601, %v3599
    %v3603 = vrsqrt.pop %v3551
    %v3604 = vmul.f32 %v3551, %v3603
    %vm3605 = vcmp.eq.f32.partialorder %v3551, inf
    %v3606 = vsel %vm3605, %v3551, %v3604
    %vm3607 = vcmp.eq.f32.partialorder %v3551, 0.0
    %v3608 = vand.u32 %v3551, 2147483648
    %v3609 = vsel %vm3607, %v3608, %v3606
    %v3610 = vrsqrt.pop %v3552
    %v3611 = vmul.f32 %v3552, %v3610
    %vm3612 = vcmp.eq.f32.partialorder %v3552, inf
    %v3613 = vsel %vm3612, %v3552, %v3611
    %vm3614 = vcmp.eq.f32.partialorder %v3552, 0.0
    %v3615 = vand.u32 %v3552, 2147483648
    %v3616 = vsel %vm3614, %v3615, %v3613
    %v3617 = vrsqrt.pop %v3553
    %v3618 = vmul.f32 %v3553, %v3617
    %vm3619 = vcmp.eq.f32.partialorder %v3553, inf
    %v3620 = vsel %vm3619, %v3553, %v3618
    %vm3621 = vcmp.eq.f32.partialorder %v3553, 0.0
    %v3622 = vand.u32 %v3553, 2147483648
    %v3623 = vsel %vm3621, %v3622, %v3620
    %v3624 = vrsqrt.pop %v3554
    %v3625 = vmul.f32 %v3554, %v3624
    %vm3626 = vcmp.eq.f32.partialorder %v3554, inf
    %v3627 = vsel %vm3626, %v3554, %v3625
    %vm3628 = vcmp.eq.f32.partialorder %v3554, 0.0
    %v3629 = vand.u32 %v3554, 2147483648
    %v3630 = vsel %vm3628, %v3629, %v3627
    %v3631 = vrsqrt.pop %v3555
    %v3632 = vmul.f32 %v3555, %v3631
    %vm3633 = vcmp.eq.f32.partialorder %v3555, inf
    %v3634 = vsel %vm3633, %v3555, %v3632
    %vm3635 = vcmp.eq.f32.partialorder %v3555, 0.0
    %v3636 = vand.u32 %v3555, 2147483648
    %v3637 = vsel %vm3635, %v3636, %v3634
    %v3638 = vrsqrt.pop %v3556
    %v3639 = vmul.f32 %v3556, %v3638
    %vm3640 = vcmp.eq.f32.partialorder %v3556, inf
    %v3641 = vsel %vm3640, %v3556, %v3639
    %vm3642 = vcmp.eq.f32.partialorder %v3556, 0.0
    %v3643 = vand.u32 %v3556, 2147483648
    %v3644 = vsel %vm3642, %v3643, %v3641
    %v3645 = vrsqrt.pop %v3557
    %v3646 = vmul.f32 %v3557, %v3645
    %vm3647 = vcmp.eq.f32.partialorder %v3557, inf
    %v3648 = vsel %vm3647, %v3557, %v3646
    %vm3649 = vcmp.eq.f32.partialorder %v3557, 0.0
    %v3650 = vand.u32 %v3557, 2147483648
    %v3651 = vsel %vm3649, %v3650, %v3648
    %v3652 = vrsqrt.pop %v3558
    %v3653 = vmul.f32 %v3558, %v3652
    %vm3654 = vcmp.eq.f32.partialorder %v3558, inf
    %v3655 = vsel %vm3654, %v3558, %v3653
    %vm3656 = vcmp.eq.f32.partialorder %v3558, 0.0
    %v3657 = vand.u32 %v3558, 2147483648
    %v3658 = vsel %vm3656, %v3657, %v3655
    %v3659 = vrsqrt.pop %v3559
    %v3660 = vmul.f32 %v3559, %v3659
    %vm3661 = vcmp.eq.f32.partialorder %v3559, inf
    %v3662 = vsel %vm3661, %v3559, %v3660
    %vm3663 = vcmp.eq.f32.partialorder %v3559, 0.0
    %v3664 = vand.u32 %v3559, 2147483648
    %v3665 = vsel %vm3663, %v3664, %v3662
    %v3666 = vrsqrt.pop %v3560
    %v3667 = vmul.f32 %v3560, %v3666
    %vm3668 = vcmp.eq.f32.partialorder %v3560, inf
    %v3669 = vsel %vm3668, %v3560, %v3667
    %vm3670 = vcmp.eq.f32.partialorder %v3560, 0.0
    %v3671 = vand.u32 %v3560, 2147483648
    %v3672 = vsel %vm3670, %v3671, %v3669
    %3689 = vrot.lane.b32.xlu0 %v3567, 16
    %v3690 = vpop.permute.xlu0 %3689
    %3691 = vrot.lane.b32.xlu0 %v3574, 16
    %v3692 = vpop.permute.xlu0 %3691
    %3693 = vrot.lane.b32.xlu0 %v3581, 16
    %v3694 = vpop.permute.xlu0 %3693
    %3695 = vrot.lane.b32.xlu0 %v3588, 16
    %v3696 = vpop.permute.xlu0 %3695
    %3697 = vrot.lane.b32.xlu0 %v3595, 16
    %v3698 = vpop.permute.xlu0 %3697
    %3699 = vrot.lane.b32.xlu0 %v3602, 16
    %v3700 = vpop.permute.xlu0 %3699
    %3701 = vrot.lane.b32.xlu0 %v3609, 16
    %v3702 = vpop.permute.xlu0 %3701
    %3703 = vrot.lane.b32.xlu0 %v3616, 16
    %v3704 = vpop.permute.xlu0 %3703
    %3705 = vrot.lane.b32.xlu0 %v3623, 16
    %v3706 = vpop.permute.xlu0 %3705
    %3707 = vrot.lane.b32.xlu0 %v3630, 16
    %v3708 = vpop.permute.xlu0 %3707
    %3709 = vrot.lane.b32.xlu0 %v3637, 16
    %v3710 = vpop.permute.xlu0 %3709
    %3711 = vrot.lane.b32.xlu0 %v3644, 16
    %v3712 = vpop.permute.xlu0 %3711
    %3713 = vrot.lane.b32.xlu0 %v3651, 16
    %v3714 = vpop.permute.xlu0 %3713
    %3715 = vrot.lane.b32.xlu0 %v3658, 16
    %v3716 = vpop.permute.xlu0 %3715
    %3717 = vrot.lane.b32.xlu0 %v3665, 16
    %v3718 = vpop.permute.xlu0 %3717
    %3719 = vrot.lane.b32.xlu0 %v3672, 16
    %v3720 = vpop.permute.xlu0 %3719
    %v3737 = vsel %vm2207, %v3165, %v3690
    %v3738 = vsel %vm2207, %v3166, %v3692
    %v3739 = vsel %vm2207, %v3167, %v3694
    %v3740 = vsel %vm2207, %v3168, %v3696
    %v3741 = vsel %vm2207, %v3169, %v3698
    %v3742 = vsel %vm2207, %v3170, %v3700
    %v3743 = vsel %vm2207, %v3171, %v3702
    %v3744 = vsel %vm2207, %v3172, %v3704
    %v3745 = vsel %vm2207, %v3173, %v3706
    %v3746 = vsel %vm2207, %v3174, %v3708
    %v3747 = vsel %vm2207, %v3175, %v3710
    %v3748 = vsel %vm2207, %v3176, %v3712
    %v3749 = vsel %vm2207, %v3177, %v3714
    %v3750 = vsel %vm2207, %v3178, %v3716
    %v3751 = vsel %vm2207, %v3179, %v3718
    %v3752 = vsel %vm2207, %v3180, %v3720
    %v3753 = vlaneseq
    %v3754 = vshrl.u32 %v3753, 7
    %v3755 = vsub.s32 0, %v3754
    %v3756 = vrot.slane %v3186, %v3755
    %v3758 = vsel %vm2228, %v3737, 0
    %v3761 = vsel %vm2228, %v3738, 0
    %v3764 = vsel %vm2228, %v3739, 0
    %v3767 = vsel %vm2228, %v3740, 0
    %v3770 = vsel %vm2228, %v3741, 0
    %v3773 = vsel %vm2228, %v3742, 0
    %v3776 = vsel %vm2228, %v3743, 0
    %v3779 = vsel %vm2228, %v3744, 0
    %v3782 = vsel %vm2228, %v3745, 0
    %v3785 = vsel %vm2228, %v3746, 0
    %v3788 = vsel %vm2228, %v3747, 0
    %v3791 = vsel %vm2228, %v3748, 0
    %v3794 = vsel %vm2228, %v3749, 0
    %v3797 = vsel %vm2228, %v3750, 0
    %v3800 = vsel %vm2228, %v3751, 0
    %v3803 = vsel %vm2228, %v3752, 0
    %v3806 = vsel %vm1706, %v3185, 0
    %3808 = vmatprep.subr.mxu0 0.0
    %3809 = vmatpush1.msra.mxu0 %v3183
    %3810 = vmatprep.subr.mxu0 0.0
    %3811 = vmatpush1.msra.mxu0 %v3184
    %3812 = vmatprep.subr.mxu0 0.0
    %3813 = vmatpush1.msra.mxu0 %v3806
    %3814 = vmatprep.subr.mxu0 0.0
    %3815 = vmatpush1.msra.mxu0 0.0
    %3816 = vmatprep.subr.mxu0 0.0
    %3817 = vmatpush1.msra.mxu0 0.0
    %3818 = vmatprep.subr.mxu0 0.0
    %3819 = vmatpush1.msra.mxu0 0.0
    %3820 = vmatprep.subr.mxu0 0.0
    %3821 = vmatpush1.msra.mxu0 0.0
    %3822 = vmatprep.subr.mxu0 0.0
    %3823 = vmatpush1.msra.mxu0 0.0
    %3824 = vmatprep.subr.mxu0 0.0
    %3825 = vmatpush1.msra.mxu0 0.0
    %3826 = vmatprep.subr.mxu0 0.0
    %3827 = vmatpush1.msra.mxu0 0.0
    %3828 = vmatprep.subr.mxu0 0.0
    %3829 = vmatpush1.msra.mxu0 0.0
    %3830 = vmatprep.subr.mxu0 0.0
    %3831 = vmatpush1.msra.mxu0 0.0
    %3832 = vmatprep.subr.mxu0 0.0
    %3833 = vmatpush1.msra.mxu0 0.0
    %3834 = vmatprep.subr.mxu0 0.0
    %3835 = vmatpush1.msra.mxu0 0.0
    %3836 = vmatprep.subr.mxu0 0.0
    %3837 = vmatpush1.msra.mxu0 0.0
    %3838 = vmatprep.subr.mxu0 0.0
    %3839 = vmatpush1.msra.mxu0 0.0
    %3840 = vmatprep.subr.mxu0 0.0
    %3841 = vmatpush1.msra.mxu0 0.0
    %3842 = vmatprep.subr.mxu0 0.0
    %3843 = vmatpush1.msra.mxu0 0.0
    %3844 = vmatprep.subr.mxu0 0.0
    %3845 = vmatpush1.msra.mxu0 0.0
    %3846 = vmatprep.subr.mxu0 0.0
    %3847 = vmatpush1.msra.mxu0 0.0
    %3848 = vmatprep.subr.mxu0 0.0
    %3849 = vmatpush1.msra.mxu0 0.0
    %3850 = vmatprep.subr.mxu0 0.0
    %3851 = vmatpush1.msra.mxu0 0.0
    %3852 = vmatprep.subr.mxu0 0.0
    %3853 = vmatpush1.msra.mxu0 0.0
    %3854 = vmatprep.subr.mxu0 0.0
    %3855 = vmatpush1.msra.mxu0 0.0
    %3856 = vmatprep.subr.mxu0 0.0
    %3857 = vmatpush1.msra.mxu0 0.0
    %3858 = vmatprep.subr.mxu0 0.0
    %3859 = vmatpush1.msra.mxu0 0.0
    %3860 = vmatprep.subr.mxu0 0.0
    %3861 = vmatpush1.msra.mxu0 0.0
    %3862 = vmatprep.subr.mxu0 0.0
    %3863 = vmatpush1.msra.mxu0 0.0
    %3864 = vmatprep.subr.mxu0 0.0
    %3865 = vmatpush1.msra.mxu0 0.0
    %3866 = vmatprep.subr.mxu0 0.0
    %3867 = vmatpush1.msra.mxu0 0.0
    %3868 = vmatprep.subr.mxu0 0.0
    %3869 = vmatpush1.msra.mxu0 0.0
    %3870 = vmatprep.subr.mxu0 0.0
    %3871 = vmatpush1.msra.mxu0 0.0
    %3872 = vmatprep.mubr.f32.mxu0 0.0
    %3873 = vmatmul.mubr.f32.gmra.mrb[0].mxu0 %v3758
    %v3874 = vpop.f32.mrb[0].mxu0
    %v3875 = vadd.f32 %v3756, %v3874
    %v3876 = vpop.f32.mrb[0].mxu0
    %3877 = vmatprep.mubr.f32.mxu0 0.0
    %3878 = vmatmul.mubr.f32.gmra.mrb[0].mxu0 %v3761
    %v3879 = vpop.f32.mrb[0].mxu0
    %v3880 = vadd.f32 %v3756, %v3879
    %v3881 = vpop.f32.mrb[0].mxu0
    %3882 = vmatprep.mubr.f32.mxu0 0.0
    %3883 = vmatmul.mubr.f32.gmra.mrb[0].mxu0 %v3764
    %v3884 = vpop.f32.mrb[0].mxu0
    %v3885 = vadd.f32 %v3756, %v3884
    %v3886 = vpop.f32.mrb[0].mxu0
    %3887 = vmatprep.mubr.f32.mxu0 0.0
    %3888 = vmatmul.mubr.f32.gmra.mrb[0].mxu0 %v3767
    %v3889 = vpop.f32.mrb[0].mxu0
    %v3890 = vadd.f32 %v3756, %v3889
    %v3891 = vpop.f32.mrb[0].mxu0
    %3892 = vmatprep.mubr.f32.mxu0 0.0
    %3893 = vmatmul.mubr.f32.gmra.mrb[0].mxu0 %v3770
    %v3894 = vpop.f32.mrb[0].mxu0
    %v3895 = vadd.f32 %v3756, %v3894
    %v3896 = vpop.f32.mrb[0].mxu0
    %3897 = vmatprep.mubr.f32.mxu0 0.0
    %3898 = vmatmul.mubr.f32.gmra.mrb[0].mxu0 %v3773
    %v3899 = vpop.f32.mrb[0].mxu0
    %v3900 = vadd.f32 %v3756, %v3899
    %v3901 = vpop.f32.mrb[0].mxu0
    %3902 = vmatprep.mubr.f32.mxu0 0.0
    %3903 = vmatmul.mubr.f32.gmra.mrb[0].mxu0 %v3776
    %v3904 = vpop.f32.mrb[0].mxu0
    %v3905 = vadd.f32 %v3756, %v3904
    %v3906 = vpop.f32.mrb[0].mxu0
    %3907 = vmatprep.mubr.f32.mxu0 0.0
    %3908 = vmatmul.mubr.f32.gmra.mrb[0].mxu0 %v3779
    %v3909 = vpop.f32.mrb[0].mxu0
    %v3910 = vadd.f32 %v3756, %v3909
    %v3911 = vpop.f32.mrb[0].mxu0
    %3912 = vmatprep.mubr.f32.mxu0 0.0
    %3913 = vmatmul.mubr.f32.gmra.mrb[0].mxu0 %v3782
    %v3914 = vpop.f32.mrb[0].mxu0
    %v3915 = vadd.f32 %v3756, %v3914
    %v3916 = vpop.f32.mrb[0].mxu0
    %3917 = vmatprep.mubr.f32.mxu0 0.0
    %3918 = vmatmul.mubr.f32.gmra.mrb[0].mxu0 %v3785
    %v3919 = vpop.f32.mrb[0].mxu0
    %v3920 = vadd.f32 %v3756, %v3919
    %v3921 = vpop.f32.mrb[0].mxu0
    %3922 = vmatprep.mubr.f32.mxu0 0.0
    %3923 = vmatmul.mubr.f32.gmra.mrb[0].mxu0 %v3788
    %v3924 = vpop.f32.mrb[0].mxu0
    %v3925 = vadd.f32 %v3756, %v3924
    %v3926 = vpop.f32.mrb[0].mxu0
    %3927 = vmatprep.mubr.f32.mxu0 0.0
    %3928 = vmatmul.mubr.f32.gmra.mrb[0].mxu0 %v3791
    %v3929 = vpop.f32.mrb[0].mxu0
    %v3930 = vadd.f32 %v3756, %v3929
    %v3931 = vpop.f32.mrb[0].mxu0
    %3932 = vmatprep.mubr.f32.mxu0 0.0
    %3933 = vmatmul.mubr.f32.gmra.mrb[0].mxu0 %v3794
    %v3934 = vpop.f32.mrb[0].mxu0
    %v3935 = vadd.f32 %v3756, %v3934
    %v3936 = vpop.f32.mrb[0].mxu0
    %3937 = vmatprep.mubr.f32.mxu0 0.0
    %3938 = vmatmul.mubr.f32.gmra.mrb[0].mxu0 %v3797
    %v3939 = vpop.f32.mrb[0].mxu0
    %v3940 = vadd.f32 %v3756, %v3939
    %v3941 = vpop.f32.mrb[0].mxu0
    %3942 = vmatprep.mubr.f32.mxu0 0.0
    %3943 = vmatmul.mubr.f32.gmra.mrb[0].mxu0 %v3800
    %v3944 = vpop.f32.mrb[0].mxu0
    %v3945 = vadd.f32 %v3756, %v3944
    %v3946 = vpop.f32.mrb[0].mxu0
    %3947 = vmatprep.mubr.f32.mxu0 0.0
    %3948 = vmatmul.mubr.f32.gmra.mrb[0].mxu0 %v3803
    %v3949 = vpop.f32.mrb[0].mxu0
    %v3950 = vadd.f32 %v3756, %v3949
    %v3951 = vpop.f32.mrb[0].mxu0
    %3952 = vdwg.mxu0
    %v3954 = vsel %vm1657, %v3307, 0
    %v3957 = vsel %vm1657, %v3312, 0
    %v3960 = vsel %vm1657, %v3317, 0
    %v3963 = vsel %vm1657, %v3322, 0
    %v3966 = vsel %vm1657, %v3327, 0
    %v3969 = vsel %vm1657, %v3332, 0
    %v3972 = vsel %vm1657, %v3337, 0
    %v3975 = vsel %vm1657, %v3342, 0
    %v3978 = vsel %vm1657, %v3347, 0
    %v3981 = vsel %vm1657, %v3352, 0
    %v3984 = vsel %vm1657, %v3357, 0
    %v3987 = vsel %vm1657, %v3362, 0
    %v3990 = vsel %vm1657, %v3367, 0
    %v3993 = vsel %vm1657, %v3372, 0
    %v3996 = vsel %vm1657, %v3377, 0
    %v3999 = vsel %vm1657, %v3382, 0
    %v4002 = vsel %vm1706, %v3188, 0
    %4004 = vmatprep.subr.mxu0 0.0
    %4005 = vmatpush1.msra.mxu0 %v3187
    %4006 = vmatprep.subr.mxu0 0.0
    %4007 = vmatpush1.msra.mxu0 %v4002
    %4008 = vmatprep.subr.mxu0 0.0
    %4009 = vmatpush1.msra.mxu0 0.0
    %4010 = vmatprep.subr.mxu0 0.0
    %4011 = vmatpush1.msra.mxu0 0.0
    %4012 = vmatprep.subr.mxu0 0.0
    %4013 = vmatpush1.msra.mxu0 0.0
    %4014 = vmatprep.subr.mxu0 0.0
    %4015 = vmatpush1.msra.mxu0 0.0
    %4016 = vmatprep.subr.mxu0 0.0
    %4017 = vmatpush1.msra.mxu0 0.0
    %4018 = vmatprep.subr.mxu0 0.0
    %4019 = vmatpush1.msra.mxu0 0.0
    %4020 = vmatprep.subr.mxu0 0.0
    %4021 = vmatpush1.msra.mxu0 0.0
    %4022 = vmatprep.subr.mxu0 0.0
    %4023 = vmatpush1.msra.mxu0 0.0
    %4024 = vmatprep.subr.mxu0 0.0
    %4025 = vmatpush1.msra.mxu0 0.0
    %4026 = vmatprep.subr.mxu0 0.0
    %4027 = vmatpush1.msra.mxu0 0.0
    %4028 = vmatprep.subr.mxu0 0.0
    %4029 = vmatpush1.msra.mxu0 0.0
    %4030 = vmatprep.subr.mxu0 0.0
    %4031 = vmatpush1.msra.mxu0 0.0
    %4032 = vmatprep.subr.mxu0 0.0
    %4033 = vmatpush1.msra.mxu0 0.0
    %4034 = vmatprep.subr.mxu0 0.0
    %4035 = vmatpush1.msra.mxu0 0.0
    %4036 = vmatprep.subr.mxu0 0.0
    %4037 = vmatpush1.msra.mxu0 0.0
    %4038 = vmatprep.subr.mxu0 0.0
    %4039 = vmatpush1.msra.mxu0 0.0
    %4040 = vmatprep.subr.mxu0 0.0
    %4041 = vmatpush1.msra.mxu0 0.0
    %4042 = vmatprep.subr.mxu0 0.0
    %4043 = vmatpush1.msra.mxu0 0.0
    %4044 = vmatprep.subr.mxu0 0.0
    %4045 = vmatpush1.msra.mxu0 0.0
    %4046 = vmatprep.subr.mxu0 0.0
    %4047 = vmatpush1.msra.mxu0 0.0
    %4048 = vmatprep.subr.mxu0 0.0
    %4049 = vmatpush1.msra.mxu0 0.0
    %4050 = vmatprep.subr.mxu0 0.0
    %4051 = vmatpush1.msra.mxu0 0.0
    %4052 = vmatprep.subr.mxu0 0.0
    %4053 = vmatpush1.msra.mxu0 0.0
    %4054 = vmatprep.subr.mxu0 0.0
    %4055 = vmatpush1.msra.mxu0 0.0
    %4056 = vmatprep.subr.mxu0 0.0
    %4057 = vmatpush1.msra.mxu0 0.0
    %4058 = vmatprep.subr.mxu0 0.0
    %4059 = vmatpush1.msra.mxu0 0.0
    %4060 = vmatprep.subr.mxu0 0.0
    %4061 = vmatpush1.msra.mxu0 0.0
    %4062 = vmatprep.subr.mxu0 0.0
    %4063 = vmatpush1.msra.mxu0 0.0
    %4064 = vmatprep.subr.mxu0 0.0
    %4065 = vmatpush1.msra.mxu0 0.0
    %4066 = vmatprep.subr.mxu0 0.0
    %4067 = vmatpush1.msra.mxu0 0.0
    %4068 = vmatprep.mubr.f32.mxu0 0.0
    %4069 = vmatmul.mubr.f32.gmra.mrb[0].mxu0 %v3954
    %v4070 = vpop.f32.mrb[0].mxu0
    %v4071 = vadd.f32 0.0, %v4070
    %v4072 = vpop.f32.mrb[0].mxu0
    %4073 = vmatprep.mubr.f32.mxu0 0.0
    %4074 = vmatmul.mubr.f32.gmra.mrb[0].mxu0 %v3957
    %v4075 = vpop.f32.mrb[0].mxu0
    %v4076 = vadd.f32 0.0, %v4075
    %v4077 = vpop.f32.mrb[0].mxu0
    %4078 = vmatprep.mubr.f32.mxu0 0.0
    %4079 = vmatmul.mubr.f32.gmra.mrb[0].mxu0 %v3960
    %v4080 = vpop.f32.mrb[0].mxu0
    %v4081 = vadd.f32 0.0, %v4080
    %v4082 = vpop.f32.mrb[0].mxu0
    %4083 = vmatprep.mubr.f32.mxu0 0.0
    %4084 = vmatmul.mubr.f32.gmra.mrb[0].mxu0 %v3963
    %v4085 = vpop.f32.mrb[0].mxu0
    %v4086 = vadd.f32 0.0, %v4085
    %v4087 = vpop.f32.mrb[0].mxu0
    %4088 = vmatprep.mubr.f32.mxu0 0.0
    %4089 = vmatmul.mubr.f32.gmra.mrb[0].mxu0 %v3966
    %v4090 = vpop.f32.mrb[0].mxu0
    %v4091 = vadd.f32 0.0, %v4090
    %v4092 = vpop.f32.mrb[0].mxu0
    %4093 = vmatprep.mubr.f32.mxu0 0.0
    %4094 = vmatmul.mubr.f32.gmra.mrb[0].mxu0 %v3969
    %v4095 = vpop.f32.mrb[0].mxu0
    %v4096 = vadd.f32 0.0, %v4095
    %v4097 = vpop.f32.mrb[0].mxu0
    %4098 = vmatprep.mubr.f32.mxu0 0.0
    %4099 = vmatmul.mubr.f32.gmra.mrb[0].mxu0 %v3972
    %v4100 = vpop.f32.mrb[0].mxu0
    %v4101 = vadd.f32 0.0, %v4100
    %v4102 = vpop.f32.mrb[0].mxu0
    %4103 = vmatprep.mubr.f32.mxu0 0.0
    %4104 = vmatmul.mubr.f32.gmra.mrb[0].mxu0 %v3975
    %v4105 = vpop.f32.mrb[0].mxu0
    %v4106 = vadd.f32 0.0, %v4105
    %v4107 = vpop.f32.mrb[0].mxu0
    %4108 = vmatprep.mubr.f32.mxu0 0.0
    %4109 = vmatmul.mubr.f32.gmra.mrb[0].mxu0 %v3978
    %v4110 = vpop.f32.mrb[0].mxu0
    %v4111 = vadd.f32 0.0, %v4110
    %v4112 = vpop.f32.mrb[0].mxu0
    %4113 = vmatprep.mubr.f32.mxu0 0.0
    %4114 = vmatmul.mubr.f32.gmra.mrb[0].mxu0 %v3981
    %v4115 = vpop.f32.mrb[0].mxu0
    %v4116 = vadd.f32 0.0, %v4115
    %v4117 = vpop.f32.mrb[0].mxu0
    %4118 = vmatprep.mubr.f32.mxu0 0.0
    %4119 = vmatmul.mubr.f32.gmra.mrb[0].mxu0 %v3984
    %v4120 = vpop.f32.mrb[0].mxu0
    %v4121 = vadd.f32 0.0, %v4120
    %v4122 = vpop.f32.mrb[0].mxu0
    %4123 = vmatprep.mubr.f32.mxu0 0.0
    %4124 = vmatmul.mubr.f32.gmra.mrb[0].mxu0 %v3987
    %v4125 = vpop.f32.mrb[0].mxu0
    %v4126 = vadd.f32 0.0, %v4125
    %v4127 = vpop.f32.mrb[0].mxu0
    %4128 = vmatprep.mubr.f32.mxu0 0.0
    %4129 = vmatmul.mubr.f32.gmra.mrb[0].mxu0 %v3990
    %v4130 = vpop.f32.mrb[0].mxu0
    %v4131 = vadd.f32 0.0, %v4130
    %v4132 = vpop.f32.mrb[0].mxu0
    %4133 = vmatprep.mubr.f32.mxu0 0.0
    %4134 = vmatmul.mubr.f32.gmra.mrb[0].mxu0 %v3993
    %v4135 = vpop.f32.mrb[0].mxu0
    %v4136 = vadd.f32 0.0, %v4135
    %v4137 = vpop.f32.mrb[0].mxu0
    %4138 = vmatprep.mubr.f32.mxu0 0.0
    %4139 = vmatmul.mubr.f32.gmra.mrb[0].mxu0 %v3996
    %v4140 = vpop.f32.mrb[0].mxu0
    %v4141 = vadd.f32 0.0, %v4140
    %v4142 = vpop.f32.mrb[0].mxu0
    %4143 = vmatprep.mubr.f32.mxu0 0.0
    %4144 = vmatmul.mubr.f32.gmra.mrb[0].mxu0 %v3999
    %v4145 = vpop.f32.mrb[0].mxu0
    %v4146 = vadd.f32 0.0, %v4145
    %v4147 = vpop.f32.mrb[0].mxu0
    %4148 = vdwg.mxu0
    %4165 = vrot.lane.b32.xlu0 %v4071, 16
    %v4166 = vpop.permute.xlu0 %4165
    %4167 = vrot.lane.b32.xlu0 %v4076, 16
    %v4168 = vpop.permute.xlu0 %4167
    %4169 = vrot.lane.b32.xlu0 %v4081, 16
    %v4170 = vpop.permute.xlu0 %4169
    %4171 = vrot.lane.b32.xlu0 %v4086, 16
    %v4172 = vpop.permute.xlu0 %4171
    %4173 = vrot.lane.b32.xlu0 %v4091, 16
    %v4174 = vpop.permute.xlu0 %4173
    %4175 = vrot.lane.b32.xlu0 %v4096, 16
    %v4176 = vpop.permute.xlu0 %4175
    %4177 = vrot.lane.b32.xlu0 %v4101, 16
    %v4178 = vpop.permute.xlu0 %4177
    %4179 = vrot.lane.b32.xlu0 %v4106, 16
    %v4180 = vpop.permute.xlu0 %4179
    %4181 = vrot.lane.b32.xlu0 %v4111, 16
    %v4182 = vpop.permute.xlu0 %4181
    %4183 = vrot.lane.b32.xlu0 %v4116, 16
    %v4184 = vpop.permute.xlu0 %4183
    %4185 = vrot.lane.b32.xlu0 %v4121, 16
    %v4186 = vpop.permute.xlu0 %4185
    %4187 = vrot.lane.b32.xlu0 %v4126, 16
    %v4188 = vpop.permute.xlu0 %4187
    %4189 = vrot.lane.b32.xlu0 %v4131, 16
    %v4190 = vpop.permute.xlu0 %4189
    %4191 = vrot.lane.b32.xlu0 %v4136, 16
    %v4192 = vpop.permute.xlu0 %4191
    %4193 = vrot.lane.b32.xlu0 %v4141, 16
    %v4194 = vpop.permute.xlu0 %4193
    %4195 = vrot.lane.b32.xlu0 %v4146, 16
    %v4196 = vpop.permute.xlu0 %4195
    %v4213 = vsel %vm2207, %v3875, %v4166
    %v4214 = vsel %vm2207, %v3880, %v4168
    %v4215 = vsel %vm2207, %v3885, %v4170
    %v4216 = vsel %vm2207, %v3890, %v4172
    %v4217 = vsel %vm2207, %v3895, %v4174
    %v4218 = vsel %vm2207, %v3900, %v4176
    %v4219 = vsel %vm2207, %v3905, %v4178
    %v4220 = vsel %vm2207, %v3910, %v4180
    %v4221 = vsel %vm2207, %v3915, %v4182
    %v4222 = vsel %vm2207, %v3920, %v4184
    %v4223 = vsel %vm2207, %v3925, %v4186
    %v4224 = vsel %vm2207, %v3930, %v4188
    %v4225 = vsel %vm2207, %v3935, %v4190
    %v4226 = vsel %vm2207, %v3940, %v4192
    %v4227 = vsel %vm2207, %v3945, %v4194
    %v4228 = vsel %vm2207, %v3950, %v4196
    %v4229 = vlaneseq
    %v4230 = vshrl.u32 %v4229, 7
    %v4231 = vadd.s32 %v4230, 8
    %v4232 = vld [vmem:[%s41] sm:$0x1]
    %v4233 = vlaneseq
    %v4234 = vshrl.u32 %v4233, 7
    %v4235 = vsub.s32 0, %v4234
    %v4236 = vrot.slane %v4232, %v4235
    %vm4237 = vcmp.eq.s32.totalorder %v4236, %v4230
    %vm4238 = vcmp.eq.s32.totalorder %v4236, %v4231
    %v4239 = vsel %vm4237, 1, 0
    %v4240 = vsel %vm4238, 1, 0
    %v4241 = vcvt.s32.f32 %v4239
    %v4242 = vcvt.s32.f32 %v4240
    %v4243 = vld [vmem:[#allocation2] sm:$0xff]
    %v4244 = vld [vmem:[#allocation2 + $0x8] sm:$0xff]
    %4245 = vmatprep.subr.mxu0 0.0
    %4246 = vmatpush1.msra.mxu0 %v4213
    %4247 = vmatprep.subr.mxu0 0.0
    %4248 = vmatpush1.msra.mxu0 %v4214
    %4249 = vmatprep.subr.mxu0 0.0
    %4250 = vmatpush1.msra.mxu0 %v4215
    %4251 = vmatprep.subr.mxu0 0.0
    %4252 = vmatpush1.msra.mxu0 %v4216
    %4253 = vmatprep.subr.mxu0 0.0
    %4254 = vmatpush1.msra.mxu0 %v4217
    %4255 = vmatprep.subr.mxu0 0.0
    %4256 = vmatpush1.msra.mxu0 %v4218
    %4257 = vmatprep.subr.mxu0 0.0
    %4258 = vmatpush1.msra.mxu0 %v4219
    %4259 = vmatprep.subr.mxu0 0.0
    %4260 = vmatpush1.msra.mxu0 %v4220
    %4261 = vmatprep.subr.mxu0 0.0
    %4262 = vmatpush1.msra.mxu0 %v4221
    %4263 = vmatprep.subr.mxu0 0.0
    %4264 = vmatpush1.msra.mxu0 %v4222
    %4265 = vmatprep.subr.mxu0 0.0
    %4266 = vmatpush1.msra.mxu0 %v4223
    %4267 = vmatprep.subr.mxu0 0.0
    %4268 = vmatpush1.msra.mxu0 %v4224
    %4269 = vmatprep.subr.mxu0 0.0
    %4270 = vmatpush1.msra.mxu0 %v4225
    %4271 = vmatprep.subr.mxu0 0.0
    %4272 = vmatpush1.msra.mxu0 %v4226
    %4273 = vmatprep.subr.mxu0 0.0
    %4274 = vmatpush1.msra.mxu0 %v4227
    %4275 = vmatprep.subr.mxu0 0.0
    %4276 = vmatpush1.msra.mxu0 %v4228
    %4277 = vmatprep.subr.mxu0 0.0
    %4278 = vmatpush1.msra.mxu0 0.0
    %4279 = vmatprep.subr.mxu0 0.0
    %4280 = vmatpush1.msra.mxu0 0.0
    %4281 = vmatprep.subr.mxu0 0.0
    %4282 = vmatpush1.msra.mxu0 0.0
    %4283 = vmatprep.subr.mxu0 0.0
    %4284 = vmatpush1.msra.mxu0 0.0
    %4285 = vmatprep.subr.mxu0 0.0
    %4286 = vmatpush1.msra.mxu0 0.0
    %4287 = vmatprep.subr.mxu0 0.0
    %4288 = vmatpush1.msra.mxu0 0.0
    %4289 = vmatprep.subr.mxu0 0.0
    %4290 = vmatpush1.msra.mxu0 0.0
    %4291 = vmatprep.subr.mxu0 0.0
    %4292 = vmatpush1.msra.mxu0 0.0
    %4293 = vmatprep.subr.mxu0 0.0
    %4294 = vmatpush1.msra.mxu0 0.0
    %4295 = vmatprep.subr.mxu0 0.0
    %4296 = vmatpush1.msra.mxu0 0.0
    %4297 = vmatprep.subr.mxu0 0.0
    %4298 = vmatpush1.msra.mxu0 0.0
    %4299 = vmatprep.subr.mxu0 0.0
    %4300 = vmatpush1.msra.mxu0 0.0
    %4301 = vmatprep.subr.mxu0 0.0
    %4302 = vmatpush1.msra.mxu0 0.0
    %4303 = vmatprep.subr.mxu0 0.0
    %4304 = vmatpush1.msra.mxu0 0.0
    %4305 = vmatprep.subr.mxu0 0.0
    %4306 = vmatpush1.msra.mxu0 0.0
    %4307 = vmatprep.subr.mxu0 0.0
    %4308 = vmatpush1.msra.mxu0 0.0
    %4309 = vmatprep.mubr.f32.mxu0 0.0
    %4310 = vmatmul.mubr.f32.gmra.mrb[0].mxu0 %v4241
    %v4311 = vpop.f32.mrb[0].mxu0
    %v4312 = vadd.f32 0.0, %v4311
    %v4313 = vpop.f32.mrb[0].mxu0
    %4314 = vmatprep.mubr.f32.mxu0 0.0
    %4315 = vmatmul.mubr.f32.gmra.mrb[0].mxu0 %v4242
    %v4316 = vpop.f32.mrb[0].mxu0
    %v4317 = vadd.f32 0.0, %v4316
    %v4318 = vpop.f32.mrb[0].mxu0
    %4319 = vdwg.mxu0
    %v4320 = vadd.f32 %v4243, %v4312
    %v4321 = vadd.f32 %v4244, %v4317
    %vm4322 = vcmask 228352
    %4323 = vst.msk [vmem:[#allocation2] sm:$0xff] %vm4322, %v4320
    %4324 = vst.msk [vmem:[#allocation2 + $0x8] sm:$0xff] %vm4322, %v4321
    // Predicated region
    $region18: #{tpu_custom_call.1} parent=1 // pred_check
      _
    $region19: #{tpu_custom_call.1} parent=1 // pred_check_branch
      %4326 = sbr.rel (0) target = $region21
    $region20: #{tpu_custom_call.1} parent=1 // pred_region
      %s4328 = ssub.s32 256, 256
      %4329 = vsyncadd [#allocation3], %s4328
      %s4330 = sshll.u32 [#allocation2], 4
      %s4331 = int_to_ptr.vmem [resolvable:$true] %s4330
      %4336 = dma.vmem_to_hbm [thread:$0]  %s4331, 256, %s3, [#allocation3], 128, 128, 8
    $region21: #{tpu_custom_call.1} parent=1 // pred_fallthru
      _
    // Predicated region
    $region22: #{tpu_custom_call.1} parent=1 // pred_check
      _
    $region23: #{tpu_custom_call.1} parent=1 // pred_check_branch
      %4338 = sbr.rel (0) target = $region25
    $region24: #{tpu_custom_call.1} parent=1 // pred_region
      %4339 = dma.done [#allocation3], 256
    $region25: #{tpu_custom_call.1} parent=1 // pred_fallthru
      _
    %4340 = vsyncpa [#allocation3], 1

</llo_original>
